<compile_context>
chip_gen: v6e
topology: v6e:2x2x1
jax: 0.10.0
libtpu: 0.0.40
codegen_flags: <defaults>
</compile_context>

<pallas_src>
import math
import functools

import jax
import jax.numpy as jnp
from jax.experimental import pallas as pl
from jax.experimental.pallas import tpu as pltpu

# ---- model hyper-parameters (from the PyTorch module) ----------------------
PAD_TOKEN = '<PAD>'
EOS_TOKEN = '<EOS>'
daughter_tokens = ['ph', 'ne', 'ne~', 'nm', 'nm~', 'e-', 'e+', 'mu-', 'mu+',
                   'pi0', 'pi-', 'pi+', 'K-', 'K+', 'p', 'p~', 'n', 'n~',
                   'La', 'La~', 'Si+', 'Si+~', 'Si0', 'Si0~', 'Si-', 'Si-~',
                   'Xi0', 'Xi0~', 'Xi-', 'Xi+~', 'Om-', 'Om+~']
mother_tokens = ['M' + t for t in daughter_tokens]
all_tokens = [PAD_TOKEN, EOS_TOKEN] + daughter_tokens + mother_tokens
VOCAB = len(all_tokens)            # 66
VPAD = 128                         # vocab padded to a full lane width

D_MODEL = 64
N_HEAD = 4
HEAD_DIM = D_MODEL // N_HEAD       # 16
FF = 256
N_LAYERS = 2
LN_EPS = 1e-5
MAX_LEN = 512                      # PositionalEncoding max_len
NEG_INF = -1e30


# ---- in-kernel helpers ------------------------------------------------------
def _layernorm(x, w, b):
    mu = jnp.mean(x, axis=-1, keepdims=True)
    xc = x - mu
    var = jnp.mean(xc * xc, axis=-1, keepdims=True)
    return xc * jax.lax.rsqrt(var + LN_EPS) * w + b


def transformer_kernel(x_ref, inw_ref, inb_ref, ow_ref, ob_ref,
                       w1_ref, b1_ref, w2_ref, b2_ref,
                       ln1w_ref, ln1b_ref, ln2w_ref, ln2b_ref,
                       fcw_ref, fcb_ref, o_ref, *, TB, S_pad):
    # x_ref: (M, D) f32 with M = TB * S_pad (TB batch elements of this block).
    # Matmul weights are pre-transposed to (in, out) and pre-cast to the
    # compute dtype (bf16 by default); biases / LN params stay f32.
    M = TB * S_pad
    cdt = inw_ref.dtype                               # matmul-operand dtype

    h = x_ref[...]                                    # (M, D) f32 residual

    # causal mask built in-kernel (shared across the TB batch rows)
    row = jax.lax.broadcasted_iota(jnp.int32, (S_pad, S_pad), 0)
    col = jax.lax.broadcasted_iota(jnp.int32, (S_pad, S_pad), 1)
    causal = (col <= row)[None, :, :]                 # (1, S, S) bool

    for l in range(N_LAYERS):
        # ---- fused QKV projection: one (M,64)@(64,192) matmul ---------------
        qkv = jnp.dot(h.astype(cdt), inw_ref[l],
                      preferred_element_type=jnp.float32) + inb_ref[l]  # (M,3D) f32
        qkv3 = qkv.reshape(TB, S_pad, 3 * D_MODEL)

        ow_l = ow_ref[l]                              # (D, D), compute dtype
        attn = jnp.zeros((M, D_MODEL), jnp.float32)
        for hh in range(N_HEAD):
            q = qkv3[:, :, hh * HEAD_DIM:(hh + 1) * HEAD_DIM].astype(cdt)
            k = qkv3[:, :, D_MODEL + hh * HEAD_DIM:
                           D_MODEL + (hh + 1) * HEAD_DIM].astype(cdt)
            v = qkv3[:, :, 2 * D_MODEL + hh * HEAD_DIM:
                           2 * D_MODEL + (hh + 1) * HEAD_DIM].astype(cdt)
            # softmax scale already folded into the q weights at trace time
            s = jnp.einsum('bqd,bkd->bqk', q, k,
                           preferred_element_type=jnp.float32)        # (TB,S,S)
            s = jnp.where(causal, s, NEG_INF)
            m = jnp.max(s, axis=-1, keepdims=True)
            p = jnp.exp(s - m)
            denom = jnp.sum(p, axis=-1, keepdims=True)
            p = p * pl.reciprocal(denom, approx=True)
            head = jnp.einsum('bqk,bkd->bqd', p.astype(cdt), v,
                              preferred_element_type=jnp.float32)     # (TB,S,hd)
            # per-head partial of the output projection (no lane-axis concat)
            attn = attn + jnp.dot(
                head.reshape(M, HEAD_DIM).astype(cdt),
                ow_l[hh * HEAD_DIM:(hh + 1) * HEAD_DIM, :],
                preferred_element_type=jnp.float32)
        attn = attn + ob_ref[l]

        # ---- residual + post-LayerNorm (f32) ---------------------------------
        h = _layernorm(h + attn, ln1w_ref[l], ln1b_ref[l])

        # ---- feed-forward (ReLU) ---------------------------------------------
        ff = jnp.dot(h.astype(cdt), w1_ref[l],
                     preferred_element_type=jnp.float32) + b1_ref[l]
        ff = jnp.maximum(ff, 0.0)
        ff = jnp.dot(ff.astype(cdt), w2_ref[l],
                     preferred_element_type=jnp.float32) + b2_ref[l]
        h = _layernorm(h + ff, ln2w_ref[l], ln2b_ref[l])

    # ---- final vocab projection (lane-dense 128-wide output stores) ----------
    o_ref[...] = jnp.dot(h.astype(cdt), fcw_ref[...],
                         preferred_element_type=jnp.float32) + fcb_ref[...]


# ---- wrapper ----------------------------------------------------------------
def _chip_vmem_bytes():
    try:
        info = pltpu.get_tpu_info()
        return int(getattr(info, "vmem_capacity_bytes", 64 << 20))
    except Exception:
        return 64 << 20                               # conservative (v7x)


def forward(tokens, params, *, block_batch=None, compute_dtype=jnp.bfloat16):
    """tokens: (B, S) int32 -> logits (B, S, VOCAB) float32."""
    B, S = tokens.shape
    assert S <= MAX_LEN, "sequence longer than PositionalEncoding buffer"

    # embedding + positional encoding (glue, plain JAX)
    x_emb = (params['embed'][tokens] + params['pe'][:S][None, :, :]).astype(jnp.float32)

    S_pad = -(-S // 8) * 8                            # sublane multiple
    vmem_cap = _chip_vmem_bytes()

    # ---- chip/S-aware choice of batch rows per grid step ----------------------
    if block_batch is None:
        budget = int(vmem_cap * 0.45)
        # per batch element, f32: ~3 (S,S) score buffers + layer activations
        # + double-buffered input/output blocks
        per_b = (3 * S_pad * S_pad
                 + S_pad * (3 * D_MODEL + FF + 4 * D_MODEL
                            + 2 * (D_MODEL + VPAD))) * 4
        TB = max(1, min(8, B, budget // max(per_b, 1)))
        if B >= 2:
            TB = min(TB, max(1, B // 2))              # >=2 grid steps (2 TCs on v7x)
    else:
        TB = block_batch

    B_pad = -(-B // TB) * TB
    x_p = jnp.zeros((B_pad, S_pad, D_MODEL), jnp.float32).at[:B, :S].set(x_emb)
    x_flat = x_p.reshape(B_pad * S_pad, D_MODEL)
    M = TB * S_pad

    cdt = compute_dtype
    scale = 1.0 / math.sqrt(HEAD_DIM)

    # ---- pre-transpose / pre-pad / pre-cast weights at trace time -------------
    inw = params['in_w'].transpose(0, 2, 1)           # (L, D, 3D)
    inw = inw.at[:, :, :D_MODEL].multiply(scale)      # fold softmax scale into q
    inb = params['in_b'].at[:, :D_MODEL].multiply(scale)[:, None, :]   # (L,1,3D)
    ow = params['out_w'].transpose(0, 2, 1).astype(cdt)                # (L, D, D)
    ob = params['out_b'][:, None, :]
    w1 = params['w1'].transpose(0, 2, 1).astype(cdt)                   # (L, D, FF)
    b1 = params['b1'][:, None, :]
    w2 = params['w2'].transpose(0, 2, 1).astype(cdt)                   # (L, FF, D)
    b2 = params['b2'][:, None, :]
    ln1w = params['ln1_w'][:, None, :]
    ln1b = params['ln1_b'][:, None, :]
    ln2w = params['ln2_w'][:, None, :]
    ln2b = params['ln2_b'][:, None, :]
    fcw = jnp.zeros((D_MODEL, VPAD), jnp.float32).at[:, :VOCAB].set(
        params['fc_w'].T).astype(cdt)
    fcb = jnp.zeros((1, VPAD), jnp.float32).at[:, :VOCAB].set(params['fc_b'][None, :])
    inw = inw.astype(cdt)

    plist = [inw, inb, ow, ob, w1, b1, w2, b2, ln1w, ln1b, ln2w, ln2b, fcw, fcb]

    def full_spec(shape):
        zeros = (0,) * len(shape)
        return pl.BlockSpec(tuple(shape), lambda g, _z=zeros: _z)   # resident weights

    kernel = functools.partial(transformer_kernel, TB=TB, S_pad=S_pad)
    vmem_limit = int(min(vmem_cap * 0.75, 96 * (1 << 20)))   # ~96 MiB v5e/v6e, ~48 MiB v7x

    out = pl.pallas_call(
        kernel,
        out_shape=jax.ShapeDtypeStruct((B_pad * S_pad, VPAD), jnp.float32),
        grid_spec=pltpu.PrefetchScalarGridSpec(
            num_scalar_prefetch=0,
            grid=(B_pad // TB,),
            in_specs=[pl.BlockSpec((M, D_MODEL), lambda g: (g, 0))]
                     + [full_spec(p.shape) for p in plist],
            out_specs=pl.BlockSpec((M, VPAD), lambda g: (g, 0)),
        ),
        compiler_params=pltpu.CompilerParams(
            dimension_semantics=("parallel",),
            vmem_limit_bytes=vmem_limit),
    )(x_flat, *plist)

    return out.reshape(B_pad, S_pad, VPAD)[:B, :S, :VOCAB]


# ---- pure-JAX reference (for verification) -----------------------------------
def _ln_ref(x, w, b):
    mu = x.mean(-1, keepdims=True)
    xc = x - mu
    var = (xc * xc).mean(-1, keepdims=True)
    return xc * jax.lax.rsqrt(var + LN_EPS) * w + b


def forward_ref(tokens, params):
    B, S = tokens.shape
    h = params['embed'][tokens] + params['pe'][:S][None]
    mask = jnp.tril(jnp.ones((S, S), dtype=bool))
    scale = 1.0 / math.sqrt(HEAD_DIM)
    for l in range(N_LAYERS):
        qkv = h @ params['in_w'][l].T + params['in_b'][l]
        q, k, v = jnp.split(qkv, 3, axis=-1)

        def split_heads(t):
            return t.reshape(B, S, N_HEAD, HEAD_DIM).transpose(0, 2, 1, 3)

        qh, kh, vh = map(split_heads, (q, k, v))
        s = jnp.einsum('bhqd,bhkd->bhqk', qh, kh) * scale
        s = jnp.where(mask, s, NEG_INF)
        m = jnp.max(s, axis=-1, keepdims=True)
        p = jnp.exp(s - m)
        p = p / p.sum(-1, keepdims=True)
        a = jnp.einsum('bhqk,bhkd->bhqd', p, vh)
        a = a.transpose(0, 2, 1, 3).reshape(B, S, D_MODEL)
        a = a @ params['out_w'][l].T + params['out_b'][l]
        h = _ln_ref(h + a, params['ln1_w'][l], params['ln1_b'][l])
        ff = jnp.maximum(h @ params['w1'][l].T + params['b1'][l], 0.0)
        ff = ff @ params['w2'][l].T + params['b2'][l]
        h = _ln_ref(h + ff, params['ln2_w'][l], params['ln2_b'][l])
    return h @ params['fc_w'].T + params['fc_b']


# ---- deterministic parameter init --------------------------------------------
def make_pe(max_len, d_model):
    position = jnp.arange(max_len, dtype=jnp.float32)[:, None]
    div_term = jnp.exp(jnp.arange(0, d_model, 2, dtype=jnp.float32)
                       * (-math.log(10000.0) / d_model))
    pe = jnp.zeros((max_len, d_model), jnp.float32)
    pe = pe.at[:, 0::2].set(jnp.sin(position * div_term))
    pe = pe.at[:, 1::2].set(jnp.cos(position * div_term))
    return pe


def init_params(key):
    ks = jax.random.split(key, 12)
    n = lambda k, shape, std=0.05: (std * jax.random.normal(k, shape)).astype(jnp.float32)
    L = N_LAYERS
    return {
        'embed': n(ks[0], (VOCAB, D_MODEL), 1.0),
        'pe': make_pe(MAX_LEN, D_MODEL),
        'in_w': n(ks[1], (L, 3 * D_MODEL, D_MODEL)),
        'in_b': n(ks[2], (L, 3 * D_MODEL)),
        'out_w': n(ks[3], (L, D_MODEL, D_MODEL)),
        'out_b': n(ks[4], (L, D_MODEL)),
        'w1': n(ks[5], (L, FF, D_MODEL)),
        'b1': n(ks[6], (L, FF)),
        'w2': n(ks[7], (L, D_MODEL, FF)),
        'b2': n(ks[8], (L, D_MODEL)),
        'ln1_w': jnp.ones((L, D_MODEL), jnp.float32),
        'ln1_b': jnp.zeros((L, D_MODEL), jnp.float32),
        'ln2_w': jnp.ones((L, D_MODEL), jnp.float32),
        'ln2_b': jnp.zeros((L, D_MODEL), jnp.float32),
        'fc_w': n(ks[9], (VOCAB, D_MODEL)),
        'fc_b': n(ks[10], (VOCAB,)),
    }


def _check(tokens, params, compute_dtype, atol):
    logits = jax.block_until_ready(forward(tokens, params, compute_dtype=compute_dtype))
    ref = forward_ref(tokens, params)
    assert logits.shape == ref.shape
    err = float(jnp.max(jnp.abs(logits - ref)))
    assert err < atol, f"max abs err {err} for shape {tokens.shape} dtype {compute_dtype}"


if __name__ == "__main__":
    key = jax.random.PRNGKey(0)
    kp, kx1, kx2, kx3 = jax.random.split(key, 4)
    params = init_params(kp)

    # primary small case (bf16 MXU operands, f32 accumulation)
    tokens = jax.random.randint(kx1, (2, 8), 0, VOCAB, dtype=jnp.int32)
    _check(tokens, params, jnp.bfloat16, 5e-2)

    # exercises TB > 1 (per-batch attention inside one grid step)
    _check(jax.random.randint(kx2, (4, 16), 0, VOCAB, dtype=jnp.int32),
           params, jnp.bfloat16, 5e-2)

    # exercises batch padding (B=5 -> TB=2 -> B_pad=6) and seq padding (10 -> 16),
    # f32 matmul path for a tight-accuracy check
    _check(jax.random.randint(kx3, (5, 10), 0, VOCAB, dtype=jnp.int32),
           params, jnp.float32, 5e-3)

    print("KERNEL_OK")
</pallas_src>

<mosaic_0001>
module attributes {stable_mosaic.version = 11 : i64} {
  func.func @transformer_kernel(%arg0: i32, %arg1: memref<8x64xf32, #tpu.memory_space<vmem>>, %arg2: memref<2x64x192xbf16, #tpu.memory_space<vmem>>, %arg3: memref<2x1x192xf32, #tpu.memory_space<vmem>>, %arg4: memref<2x64x64xbf16, #tpu.memory_space<vmem>>, %arg5: memref<2x1x64xf32, #tpu.memory_space<vmem>>, %arg6: memref<2x64x256xbf16, #tpu.memory_space<vmem>>, %arg7: memref<2x1x256xf32, #tpu.memory_space<vmem>>, %arg8: memref<2x256x64xbf16, #tpu.memory_space<vmem>>, %arg9: memref<2x1x64xf32, #tpu.memory_space<vmem>>, %arg10: memref<2x1x64xf32, #tpu.memory_space<vmem>>, %arg11: memref<2x1x64xf32, #tpu.memory_space<vmem>>, %arg12: memref<2x1x64xf32, #tpu.memory_space<vmem>>, %arg13: memref<2x1x64xf32, #tpu.memory_space<vmem>>, %arg14: memref<64x128xbf16, #tpu.memory_space<vmem>>, %arg15: memref<1x128xf32, #tpu.memory_space<vmem>>, %arg16: memref<8x128xf32, #tpu.memory_space<vmem>>) attributes {dimension_semantics = [#tpu.dimension_semantics<parallel>], iteration_bounds = array<i64: 2>, scalar_prefetch = 0 : i64, scratch_operands = 0 : i64, tpu.core_type = #tpu.core_type<tc>, window_params = [{transform_indices = @transform_0, window_bounds = array<i64: 8, 64>}, {pipeline_mode = #tpu.pipeline_mode<synchronous>, transform_indices = @transform_1, window_bounds = array<i64: 2, 64, 192>}, {pipeline_mode = #tpu.pipeline_mode<synchronous>, transform_indices = @transform_2, window_bounds = array<i64: 2, 1, 192>}, {pipeline_mode = #tpu.pipeline_mode<synchronous>, transform_indices = @transform_3, window_bounds = array<i64: 2, 64, 64>}, {pipeline_mode = #tpu.pipeline_mode<synchronous>, transform_indices = @transform_4, window_bounds = array<i64: 2, 1, 64>}, {pipeline_mode = #tpu.pipeline_mode<synchronous>, transform_indices = @transform_5, window_bounds = array<i64: 2, 64, 256>}, {pipeline_mode = #tpu.pipeline_mode<synchronous>, transform_indices = @transform_6, window_bounds = array<i64: 2, 1, 256>}, {pipeline_mode = #tpu.pipeline_mode<synchronous>, transform_indices = @transform_7, window_bounds = array<i64: 2, 256, 64>}, {pipeline_mode = #tpu.pipeline_mode<synchronous>, transform_indices = @transform_8, window_bounds = array<i64: 2, 1, 64>}, {pipeline_mode = #tpu.pipeline_mode<synchronous>, transform_indices = @transform_9, window_bounds = array<i64: 2, 1, 64>}, {pipeline_mode = #tpu.pipeline_mode<synchronous>, transform_indices = @transform_10, window_bounds = array<i64: 2, 1, 64>}, {pipeline_mode = #tpu.pipeline_mode<synchronous>, transform_indices = @transform_11, window_bounds = array<i64: 2, 1, 64>}, {pipeline_mode = #tpu.pipeline_mode<synchronous>, transform_indices = @transform_12, window_bounds = array<i64: 2, 1, 64>}, {pipeline_mode = #tpu.pipeline_mode<synchronous>, transform_indices = @transform_13, window_bounds = array<i64: 64, 128>}, {pipeline_mode = #tpu.pipeline_mode<synchronous>, transform_indices = @transform_14, window_bounds = array<i64: 1, 128>}, {transform_indices = @transform_15, window_bounds = array<i64: 8, 128>}]} {
    %c0 = arith.constant 0 : index
    %c0_0 = arith.constant 0 : index
    %0 = vector.load %arg1[%c0, %c0_0] : memref<8x64xf32, #tpu.memory_space<vmem>>, vector<8x64xf32>
    %1 = tpu.iota {dimensions = array<i32: 0>} : vector<8x8xi32>
    %2 = tpu.iota {dimensions = array<i32: 1>} : vector<8x8xi32>
    %3 = arith.cmpi sle, %2, %1 : vector<8x8xi32>
    %4 = vector.shape_cast %3 : vector<8x8xi1> to vector<1x8x8xi1>
    %5 = arith.truncf %0 : vector<8x64xf32> to vector<8x64xbf16>
    %c0_1 = arith.constant 0 : index
    %c0_2 = arith.constant 0 : index
    %c0_3 = arith.constant 0 : index
    %6 = vector.load %arg2[%c0_1, %c0_2, %c0_3] : memref<2x64x192xbf16, #tpu.memory_space<vmem>>, vector<1x64x192xbf16>
    %7 = vector.shape_cast %6 : vector<1x64x192xbf16> to vector<64x192xbf16>
    %cst = arith.constant dense<0.000000e+00> : vector<8x192xf32>
    %8 = tpu.matmul %5, %7, %cst {dimension_numbers = #tpu.dot_dimension_numbers<[1], [0], [0], [1], [0, 0, 1, 1], [], []>} : vector<8x64xbf16>, vector<64x192xbf16>, vector<8x192xf32> -> vector<8x192xf32>
    %c0_4 = arith.constant 0 : index
    %c0_5 = arith.constant 0 : index
    %c0_6 = arith.constant 0 : index
    %9 = vector.load %arg3[%c0_4, %c0_5, %c0_6] : memref<2x1x192xf32, #tpu.memory_space<vmem>>, vector<1x1x192xf32>
    %10 = vector.shape_cast %9 : vector<1x1x192xf32> to vector<1x192xf32>
    %11 = vector.broadcast %10 : vector<1x192xf32> to vector<8x192xf32>
    %12 = arith.addf %8, %11 : vector<8x192xf32>
    %13 = vector.shape_cast %12 : vector<8x192xf32> to vector<1x8x192xf32>
    %c0_7 = arith.constant 0 : index
    %c0_8 = arith.constant 0 : index
    %c0_9 = arith.constant 0 : index
    %14 = vector.load %arg4[%c0_7, %c0_8, %c0_9] : memref<2x64x64xbf16, #tpu.memory_space<vmem>>, vector<1x64x64xbf16>
    %15 = vector.shape_cast %14 : vector<1x64x64xbf16> to vector<64x64xbf16>
    %cst_10 = arith.constant 0.000000e+00 : f32
    %16 = vector.broadcast %cst_10 : f32 to vector<8x64xf32>
    %17 = vector.extract_strided_slice %13 {offsets = [0, 0, 0], sizes = [1, 8, 16], strides = [1, 1, 1]} : vector<1x8x192xf32> to vector<1x8x16xf32>
    %18 = arith.truncf %17 : vector<1x8x16xf32> to vector<1x8x16xbf16>
    %19 = vector.extract_strided_slice %13 {offsets = [0, 0, 64], sizes = [1, 8, 16], strides = [1, 1, 1]} : vector<1x8x192xf32> to vector<1x8x16xf32>
    %20 = arith.truncf %19 : vector<1x8x16xf32> to vector<1x8x16xbf16>
    %21 = vector.extract_strided_slice %13 {offsets = [0, 0, 128], sizes = [1, 8, 16], strides = [1, 1, 1]} : vector<1x8x192xf32> to vector<1x8x16xf32>
    %22 = arith.truncf %21 : vector<1x8x16xf32> to vector<1x8x16xbf16>
    "tpu.trace_start"() <{level = 10 : i32, message = "bqd,bkd->bqk"}> : () -> ()
    %cst_11 = arith.constant dense<0.000000e+00> : vector<1x8x8xf32>
    %23 = tpu.matmul %18, %20, %cst_11 {dimension_numbers = #tpu.dot_dimension_numbers<[2], [2], [1], [1], [0, 0, 0, 1, 1, 1], [0], [0]>} : vector<1x8x16xbf16>, vector<1x8x16xbf16>, vector<1x8x8xf32> -> vector<1x8x8xf32>
    %cst_12 = arith.constant -1.000000e+30 : f32
    "tpu.trace_stop"() : () -> ()
    %24 = vector.broadcast %cst_12 : f32 to vector<1x8x8xf32>
    %25 = arith.select %4, %23, %24 : vector<1x8x8xi1>, vector<1x8x8xf32>
    %cst_13 = arith.constant dense<0xFF800000> : vector<1x8xf32>
    %26 = vector.multi_reduction <maximumf>, %25, %cst_13 [2] : vector<1x8x8xf32> to vector<1x8xf32>
    %27 = vector.shape_cast %26 : vector<1x8xf32> to vector<1x8x1xf32>
    %28 = vector.broadcast %27 : vector<1x8x1xf32> to vector<1x8x8xf32>
    %29 = arith.subf %25, %28 : vector<1x8x8xf32>
    %30 = math.exp %29 : vector<1x8x8xf32>
    %cst_14 = arith.constant dense<0.000000e+00> : vector<1x8xf32>
    %31 = vector.multi_reduction <add>, %30, %cst_14 [2] : vector<1x8x8xf32> to vector<1x8xf32>
    %32 = vector.shape_cast %31 : vector<1x8xf32> to vector<1x8x1xf32>
    %33 = tpu.reciprocal %32 {approx = true} : vector<1x8x1xf32> -> vector<1x8x1xf32>
    %34 = vector.broadcast %33 : vector<1x8x1xf32> to vector<1x8x8xf32>
    %35 = arith.mulf %30, %34 : vector<1x8x8xf32>
    %36 = arith.truncf %35 : vector<1x8x8xf32> to vector<1x8x8xbf16>
    "tpu.trace_start"() <{level = 10 : i32, message = "bqk,bkd->bqd"}> : () -> ()
    %cst_15 = arith.constant dense<0.000000e+00> : vector<1x8x16xf32>
    %37 = tpu.matmul %36, %22, %cst_15 {dimension_numbers = #tpu.dot_dimension_numbers<[2], [1], [1], [2], [0, 0, 0, 1, 1, 2], [0], [0]>} : vector<1x8x8xbf16>, vector<1x8x16xbf16>, vector<1x8x16xf32> -> vector<1x8x16xf32>
    "tpu.trace_stop"() : () -> ()
    %38 = vector.shape_cast %37 : vector<1x8x16xf32> to vector<8x16xf32>
    %39 = arith.truncf %38 : vector<8x16xf32> to vector<8x16xbf16>
    %40 = vector.extract_strided_slice %15 {offsets = [0, 0], sizes = [16, 64], strides = [1, 1]} : vector<64x64xbf16> to vector<16x64xbf16>
    %cst_16 = arith.constant dense<0.000000e+00> : vector<8x64xf32>
    %41 = tpu.matmul %39, %40, %cst_16 {dimension_numbers = #tpu.dot_dimension_numbers<[1], [0], [0], [1], [0, 0, 1, 1], [], []>} : vector<8x16xbf16>, vector<16x64xbf16>, vector<8x64xf32> -> vector<8x64xf32>
    %42 = arith.addf %16, %41 : vector<8x64xf32>
    %43 = vector.extract_strided_slice %13 {offsets = [0, 0, 16], sizes = [1, 8, 16], strides = [1, 1, 1]} : vector<1x8x192xf32> to vector<1x8x16xf32>
    %44 = arith.truncf %43 : vector<1x8x16xf32> to vector<1x8x16xbf16>
    %45 = vector.extract_strided_slice %13 {offsets = [0, 0, 80], sizes = [1, 8, 16], strides = [1, 1, 1]} : vector<1x8x192xf32> to vector<1x8x16xf32>
    %46 = arith.truncf %45 : vector<1x8x16xf32> to vector<1x8x16xbf16>
    %47 = vector.extract_strided_slice %13 {offsets = [0, 0, 144], sizes = [1, 8, 16], strides = [1, 1, 1]} : vector<1x8x192xf32> to vector<1x8x16xf32>
    %48 = arith.truncf %47 : vector<1x8x16xf32> to vector<1x8x16xbf16>
    "tpu.trace_start"() <{level = 10 : i32, message = "bqd,bkd->bqk"}> : () -> ()
    %cst_17 = arith.constant dense<0.000000e+00> : vector<1x8x8xf32>
    %49 = tpu.matmul %44, %46, %cst_17 {dimension_numbers = #tpu.dot_dimension_numbers<[2], [2], [1], [1], [0, 0, 0, 1, 1, 1], [0], [0]>} : vector<1x8x16xbf16>, vector<1x8x16xbf16>, vector<1x8x8xf32> -> vector<1x8x8xf32>
    %cst_18 = arith.constant -1.000000e+30 : f32
    "tpu.trace_stop"() : () -> ()
    %50 = vector.broadcast %cst_18 : f32 to vector<1x8x8xf32>
    %51 = arith.select %4, %49, %50 : vector<1x8x8xi1>, vector<1x8x8xf32>
    %cst_19 = arith.constant dense<0xFF800000> : vector<1x8xf32>
    %52 = vector.multi_reduction <maximumf>, %51, %cst_19 [2] : vector<1x8x8xf32> to vector<1x8xf32>
    %53 = vector.shape_cast %52 : vector<1x8xf32> to vector<1x8x1xf32>
    %54 = vector.broadcast %53 : vector<1x8x1xf32> to vector<1x8x8xf32>
    %55 = arith.subf %51, %54 : vector<1x8x8xf32>
    %56 = math.exp %55 : vector<1x8x8xf32>
    %cst_20 = arith.constant dense<0.000000e+00> : vector<1x8xf32>
    %57 = vector.multi_reduction <add>, %56, %cst_20 [2] : vector<1x8x8xf32> to vector<1x8xf32>
    %58 = vector.shape_cast %57 : vector<1x8xf32> to vector<1x8x1xf32>
    %59 = tpu.reciprocal %58 {approx = true} : vector<1x8x1xf32> -> vector<1x8x1xf32>
    %60 = vector.broadcast %59 : vector<1x8x1xf32> to vector<1x8x8xf32>
    %61 = arith.mulf %56, %60 : vector<1x8x8xf32>
    %62 = arith.truncf %61 : vector<1x8x8xf32> to vector<1x8x8xbf16>
    "tpu.trace_start"() <{level = 10 : i32, message = "bqk,bkd->bqd"}> : () -> ()
    %cst_21 = arith.constant dense<0.000000e+00> : vector<1x8x16xf32>
    %63 = tpu.matmul %62, %48, %cst_21 {dimension_numbers = #tpu.dot_dimension_numbers<[2], [1], [1], [2], [0, 0, 0, 1, 1, 2], [0], [0]>} : vector<1x8x8xbf16>, vector<1x8x16xbf16>, vector<1x8x16xf32> -> vector<1x8x16xf32>
    "tpu.trace_stop"() : () -> ()
    %64 = vector.shape_cast %63 : vector<1x8x16xf32> to vector<8x16xf32>
    %65 = arith.truncf %64 : vector<8x16xf32> to vector<8x16xbf16>
    %66 = vector.extract_strided_slice %15 {offsets = [16, 0], sizes = [16, 64], strides = [1, 1]} : vector<64x64xbf16> to vector<16x64xbf16>
    %cst_22 = arith.constant dense<0.000000e+00> : vector<8x64xf32>
    %67 = tpu.matmul %65, %66, %cst_22 {dimension_numbers = #tpu.dot_dimension_numbers<[1], [0], [0], [1], [0, 0, 1, 1], [], []>} : vector<8x16xbf16>, vector<16x64xbf16>, vector<8x64xf32> -> vector<8x64xf32>
    %68 = arith.addf %42, %67 : vector<8x64xf32>
    %69 = vector.extract_strided_slice %13 {offsets = [0, 0, 32], sizes = [1, 8, 16], strides = [1, 1, 1]} : vector<1x8x192xf32> to vector<1x8x16xf32>
    %70 = arith.truncf %69 : vector<1x8x16xf32> to vector<1x8x16xbf16>
    %71 = vector.extract_strided_slice %13 {offsets = [0, 0, 96], sizes = [1, 8, 16], strides = [1, 1, 1]} : vector<1x8x192xf32> to vector<1x8x16xf32>
    %72 = arith.truncf %71 : vector<1x8x16xf32> to vector<1x8x16xbf16>
    %73 = vector.extract_strided_slice %13 {offsets = [0, 0, 160], sizes = [1, 8, 16], strides = [1, 1, 1]} : vector<1x8x192xf32> to vector<1x8x16xf32>
    %74 = arith.truncf %73 : vector<1x8x16xf32> to vector<1x8x16xbf16>
    "tpu.trace_start"() <{level = 10 : i32, message = "bqd,bkd->bqk"}> : () -> ()
    %cst_23 = arith.constant dense<0.000000e+00> : vector<1x8x8xf32>
    %75 = tpu.matmul %70, %72, %cst_23 {dimension_numbers = #tpu.dot_dimension_numbers<[2], [2], [1], [1], [0, 0, 0, 1, 1, 1], [0], [0]>} : vector<1x8x16xbf16>, vector<1x8x16xbf16>, vector<1x8x8xf32> -> vector<1x8x8xf32>
    %cst_24 = arith.constant -1.000000e+30 : f32
    "tpu.trace_stop"() : () -> ()
    %76 = vector.broadcast %cst_24 : f32 to vector<1x8x8xf32>
    %77 = arith.select %4, %75, %76 : vector<1x8x8xi1>, vector<1x8x8xf32>
    %cst_25 = arith.constant dense<0xFF800000> : vector<1x8xf32>
    %78 = vector.multi_reduction <maximumf>, %77, %cst_25 [2] : vector<1x8x8xf32> to vector<1x8xf32>
    %79 = vector.shape_cast %78 : vector<1x8xf32> to vector<1x8x1xf32>
    %80 = vector.broadcast %79 : vector<1x8x1xf32> to vector<1x8x8xf32>
    %81 = arith.subf %77, %80 : vector<1x8x8xf32>
    %82 = math.exp %81 : vector<1x8x8xf32>
    %cst_26 = arith.constant dense<0.000000e+00> : vector<1x8xf32>
    %83 = vector.multi_reduction <add>, %82, %cst_26 [2] : vector<1x8x8xf32> to vector<1x8xf32>
    %84 = vector.shape_cast %83 : vector<1x8xf32> to vector<1x8x1xf32>
    %85 = tpu.reciprocal %84 {approx = true} : vector<1x8x1xf32> -> vector<1x8x1xf32>
    %86 = vector.broadcast %85 : vector<1x8x1xf32> to vector<1x8x8xf32>
    %87 = arith.mulf %82, %86 : vector<1x8x8xf32>
    %88 = arith.truncf %87 : vector<1x8x8xf32> to vector<1x8x8xbf16>
    "tpu.trace_start"() <{level = 10 : i32, message = "bqk,bkd->bqd"}> : () -> ()
    %cst_27 = arith.constant dense<0.000000e+00> : vector<1x8x16xf32>
    %89 = tpu.matmul %88, %74, %cst_27 {dimension_numbers = #tpu.dot_dimension_numbers<[2], [1], [1], [2], [0, 0, 0, 1, 1, 2], [0], [0]>} : vector<1x8x8xbf16>, vector<1x8x16xbf16>, vector<1x8x16xf32> -> vector<1x8x16xf32>
    "tpu.trace_stop"() : () -> ()
    %90 = vector.shape_cast %89 : vector<1x8x16xf32> to vector<8x16xf32>
    %91 = arith.truncf %90 : vector<8x16xf32> to vector<8x16xbf16>
    %92 = vector.extract_strided_slice %15 {offsets = [32, 0], sizes = [16, 64], strides = [1, 1]} : vector<64x64xbf16> to vector<16x64xbf16>
    %cst_28 = arith.constant dense<0.000000e+00> : vector<8x64xf32>
    %93 = tpu.matmul %91, %92, %cst_28 {dimension_numbers = #tpu.dot_dimension_numbers<[1], [0], [0], [1], [0, 0, 1, 1], [], []>} : vector<8x16xbf16>, vector<16x64xbf16>, vector<8x64xf32> -> vector<8x64xf32>
    %94 = arith.addf %68, %93 : vector<8x64xf32>
    %95 = vector.extract_strided_slice %13 {offsets = [0, 0, 48], sizes = [1, 8, 16], strides = [1, 1, 1]} : vector<1x8x192xf32> to vector<1x8x16xf32>
    %96 = arith.truncf %95 : vector<1x8x16xf32> to vector<1x8x16xbf16>
    %97 = vector.extract_strided_slice %13 {offsets = [0, 0, 112], sizes = [1, 8, 16], strides = [1, 1, 1]} : vector<1x8x192xf32> to vector<1x8x16xf32>
    %98 = arith.truncf %97 : vector<1x8x16xf32> to vector<1x8x16xbf16>
    %99 = vector.extract_strided_slice %13 {offsets = [0, 0, 176], sizes = [1, 8, 16], strides = [1, 1, 1]} : vector<1x8x192xf32> to vector<1x8x16xf32>
    %100 = arith.truncf %99 : vector<1x8x16xf32> to vector<1x8x16xbf16>
    "tpu.trace_start"() <{level = 10 : i32, message = "bqd,bkd->bqk"}> : () -> ()
    %cst_29 = arith.constant dense<0.000000e+00> : vector<1x8x8xf32>
    %101 = tpu.matmul %96, %98, %cst_29 {dimension_numbers = #tpu.dot_dimension_numbers<[2], [2], [1], [1], [0, 0, 0, 1, 1, 1], [0], [0]>} : vector<1x8x16xbf16>, vector<1x8x16xbf16>, vector<1x8x8xf32> -> vector<1x8x8xf32>
    %cst_30 = arith.constant -1.000000e+30 : f32
    "tpu.trace_stop"() : () -> ()
    %102 = vector.broadcast %cst_30 : f32 to vector<1x8x8xf32>
    %103 = arith.select %4, %101, %102 : vector<1x8x8xi1>, vector<1x8x8xf32>
    %cst_31 = arith.constant dense<0xFF800000> : vector<1x8xf32>
    %104 = vector.multi_reduction <maximumf>, %103, %cst_31 [2] : vector<1x8x8xf32> to vector<1x8xf32>
    %105 = vector.shape_cast %104 : vector<1x8xf32> to vector<1x8x1xf32>
    %106 = vector.broadcast %105 : vector<1x8x1xf32> to vector<1x8x8xf32>
    %107 = arith.subf %103, %106 : vector<1x8x8xf32>
    %108 = math.exp %107 : vector<1x8x8xf32>
    %cst_32 = arith.constant dense<0.000000e+00> : vector<1x8xf32>
    %109 = vector.multi_reduction <add>, %108, %cst_32 [2] : vector<1x8x8xf32> to vector<1x8xf32>
    %110 = vector.shape_cast %109 : vector<1x8xf32> to vector<1x8x1xf32>
    %111 = tpu.reciprocal %110 {approx = true} : vector<1x8x1xf32> -> vector<1x8x1xf32>
    %112 = vector.broadcast %111 : vector<1x8x1xf32> to vector<1x8x8xf32>
    %113 = arith.mulf %108, %112 : vector<1x8x8xf32>
    %114 = arith.truncf %113 : vector<1x8x8xf32> to vector<1x8x8xbf16>
    "tpu.trace_start"() <{level = 10 : i32, message = "bqk,bkd->bqd"}> : () -> ()
    %cst_33 = arith.constant dense<0.000000e+00> : vector<1x8x16xf32>
    %115 = tpu.matmul %114, %100, %cst_33 {dimension_numbers = #tpu.dot_dimension_numbers<[2], [1], [1], [2], [0, 0, 0, 1, 1, 2], [0], [0]>} : vector<1x8x8xbf16>, vector<1x8x16xbf16>, vector<1x8x16xf32> -> vector<1x8x16xf32>
    "tpu.trace_stop"() : () -> ()
    %116 = vector.shape_cast %115 : vector<1x8x16xf32> to vector<8x16xf32>
    %117 = arith.truncf %116 : vector<8x16xf32> to vector<8x16xbf16>
    %118 = vector.extract_strided_slice %15 {offsets = [48, 0], sizes = [16, 64], strides = [1, 1]} : vector<64x64xbf16> to vector<16x64xbf16>
    %cst_34 = arith.constant dense<0.000000e+00> : vector<8x64xf32>
    %119 = tpu.matmul %117, %118, %cst_34 {dimension_numbers = #tpu.dot_dimension_numbers<[1], [0], [0], [1], [0, 0, 1, 1], [], []>} : vector<8x16xbf16>, vector<16x64xbf16>, vector<8x64xf32> -> vector<8x64xf32>
    %120 = arith.addf %94, %119 : vector<8x64xf32>
    %c0_35 = arith.constant 0 : index
    %c0_36 = arith.constant 0 : index
    %c0_37 = arith.constant 0 : index
    %121 = vector.load %arg5[%c0_35, %c0_36, %c0_37] : memref<2x1x64xf32, #tpu.memory_space<vmem>>, vector<1x1x64xf32>
    %122 = vector.shape_cast %121 : vector<1x1x64xf32> to vector<1x64xf32>
    %123 = vector.broadcast %122 : vector<1x64xf32> to vector<8x64xf32>
    %124 = arith.addf %120, %123 : vector<8x64xf32>
    %125 = arith.addf %0, %124 : vector<8x64xf32>
    %c0_38 = arith.constant 0 : index
    %c0_39 = arith.constant 0 : index
    %c0_40 = arith.constant 0 : index
    %126 = vector.load %arg10[%c0_38, %c0_39, %c0_40] : memref<2x1x64xf32, #tpu.memory_space<vmem>>, vector<1x1x64xf32>
    %127 = vector.shape_cast %126 : vector<1x1x64xf32> to vector<1x64xf32>
    %c0_41 = arith.constant 0 : index
    %c0_42 = arith.constant 0 : index
    %c0_43 = arith.constant 0 : index
    %128 = vector.load %arg11[%c0_41, %c0_42, %c0_43] : memref<2x1x64xf32, #tpu.memory_space<vmem>>, vector<1x1x64xf32>
    %129 = vector.shape_cast %128 : vector<1x1x64xf32> to vector<1x64xf32>
    %cst_44 = arith.constant dense<0.000000e+00> : vector<8xf32>
    %130 = vector.multi_reduction <add>, %125, %cst_44 [1] : vector<8x64xf32> to vector<8xf32>
    %131 = vector.shape_cast %130 : vector<8xf32> to vector<8x1xf32>
    %cst_45 = arith.constant 6.400000e+01 : f32
    %132 = vector.broadcast %cst_45 : f32 to vector<8x1xf32>
    %133 = arith.divf %131, %132 : vector<8x1xf32>
    %134 = vector.broadcast %133 : vector<8x1xf32> to vector<8x64xf32>
    %135 = arith.subf %125, %134 : vector<8x64xf32>
    %136 = arith.mulf %135, %135 : vector<8x64xf32>
    %cst_46 = arith.constant dense<0.000000e+00> : vector<8xf32>
    %137 = vector.multi_reduction <add>, %136, %cst_46 [1] : vector<8x64xf32> to vector<8xf32>
    %138 = vector.shape_cast %137 : vector<8xf32> to vector<8x1xf32>
    %cst_47 = arith.constant 6.400000e+01 : f32
    %139 = vector.broadcast %cst_47 : f32 to vector<8x1xf32>
    %140 = arith.divf %138, %139 : vector<8x1xf32>
    %cst_48 = arith.constant 9.99999974E-6 : f32
    %141 = vector.broadcast %cst_48 : f32 to vector<8x1xf32>
    %142 = arith.addf %140, %141 : vector<8x1xf32>
    %143 = math.rsqrt %142 : vector<8x1xf32>
    %144 = vector.broadcast %143 : vector<8x1xf32> to vector<8x64xf32>
    %145 = arith.mulf %135, %144 : vector<8x64xf32>
    %146 = vector.broadcast %127 : vector<1x64xf32> to vector<8x64xf32>
    %147 = arith.mulf %145, %146 : vector<8x64xf32>
    %148 = vector.broadcast %129 : vector<1x64xf32> to vector<8x64xf32>
    %149 = arith.addf %147, %148 : vector<8x64xf32>
    %150 = arith.truncf %149 : vector<8x64xf32> to vector<8x64xbf16>
    %c0_49 = arith.constant 0 : index
    %c0_50 = arith.constant 0 : index
    %c0_51 = arith.constant 0 : index
    %151 = vector.load %arg6[%c0_49, %c0_50, %c0_51] : memref<2x64x256xbf16, #tpu.memory_space<vmem>>, vector<1x64x256xbf16>
    %152 = vector.shape_cast %151 : vector<1x64x256xbf16> to vector<64x256xbf16>
    %cst_52 = arith.constant dense<0.000000e+00> : vector<8x256xf32>
    %153 = tpu.matmul %150, %152, %cst_52 {dimension_numbers = #tpu.dot_dimension_numbers<[1], [0], [0], [1], [0, 0, 1, 1], [], []>} : vector<8x64xbf16>, vector<64x256xbf16>, vector<8x256xf32> -> vector<8x256xf32>
    %c0_53 = arith.constant 0 : index
    %c0_54 = arith.constant 0 : index
    %c0_55 = arith.constant 0 : index
    %154 = vector.load %arg7[%c0_53, %c0_54, %c0_55] : memref<2x1x256xf32, #tpu.memory_space<vmem>>, vector<1x1x256xf32>
    %155 = vector.shape_cast %154 : vector<1x1x256xf32> to vector<1x256xf32>
    %156 = vector.broadcast %155 : vector<1x256xf32> to vector<8x256xf32>
    %157 = arith.addf %153, %156 : vector<8x256xf32>
    %cst_56 = arith.constant 0.000000e+00 : f32
    %158 = vector.broadcast %cst_56 : f32 to vector<8x256xf32>
    %159 = arith.maximumf %157, %158 : vector<8x256xf32>
    %160 = arith.truncf %159 : vector<8x256xf32> to vector<8x256xbf16>
    %c0_57 = arith.constant 0 : index
    %c0_58 = arith.constant 0 : index
    %c0_59 = arith.constant 0 : index
    %161 = vector.load %arg8[%c0_57, %c0_58, %c0_59] : memref<2x256x64xbf16, #tpu.memory_space<vmem>>, vector<1x256x64xbf16>
    %162 = vector.shape_cast %161 : vector<1x256x64xbf16> to vector<256x64xbf16>
    %cst_60 = arith.constant dense<0.000000e+00> : vector<8x64xf32>
    %163 = tpu.matmul %160, %162, %cst_60 {dimension_numbers = #tpu.dot_dimension_numbers<[1], [0], [0], [1], [0, 0, 1, 1], [], []>} : vector<8x256xbf16>, vector<256x64xbf16>, vector<8x64xf32> -> vector<8x64xf32>
    %c0_61 = arith.constant 0 : index
    %c0_62 = arith.constant 0 : index
    %c0_63 = arith.constant 0 : index
    %164 = vector.load %arg9[%c0_61, %c0_62, %c0_63] : memref<2x1x64xf32, #tpu.memory_space<vmem>>, vector<1x1x64xf32>
    %165 = vector.shape_cast %164 : vector<1x1x64xf32> to vector<1x64xf32>
    %166 = vector.broadcast %165 : vector<1x64xf32> to vector<8x64xf32>
    %167 = arith.addf %163, %166 : vector<8x64xf32>
    %168 = arith.addf %149, %167 : vector<8x64xf32>
    %c0_64 = arith.constant 0 : index
    %c0_65 = arith.constant 0 : index
    %c0_66 = arith.constant 0 : index
    %169 = vector.load %arg12[%c0_64, %c0_65, %c0_66] : memref<2x1x64xf32, #tpu.memory_space<vmem>>, vector<1x1x64xf32>
    %170 = vector.shape_cast %169 : vector<1x1x64xf32> to vector<1x64xf32>
    %c0_67 = arith.constant 0 : index
    %c0_68 = arith.constant 0 : index
    %c0_69 = arith.constant 0 : index
    %171 = vector.load %arg13[%c0_67, %c0_68, %c0_69] : memref<2x1x64xf32, #tpu.memory_space<vmem>>, vector<1x1x64xf32>
    %172 = vector.shape_cast %171 : vector<1x1x64xf32> to vector<1x64xf32>
    %cst_70 = arith.constant dense<0.000000e+00> : vector<8xf32>
    %173 = vector.multi_reduction <add>, %168, %cst_70 [1] : vector<8x64xf32> to vector<8xf32>
    %174 = vector.shape_cast %173 : vector<8xf32> to vector<8x1xf32>
    %cst_71 = arith.constant 6.400000e+01 : f32
    %175 = vector.broadcast %cst_71 : f32 to vector<8x1xf32>
    %176 = arith.divf %174, %175 : vector<8x1xf32>
    %177 = vector.broadcast %176 : vector<8x1xf32> to vector<8x64xf32>
    %178 = arith.subf %168, %177 : vector<8x64xf32>
    %179 = arith.mulf %178, %178 : vector<8x64xf32>
    %cst_72 = arith.constant dense<0.000000e+00> : vector<8xf32>
    %180 = vector.multi_reduction <add>, %179, %cst_72 [1] : vector<8x64xf32> to vector<8xf32>
    %181 = vector.shape_cast %180 : vector<8xf32> to vector<8x1xf32>
    %cst_73 = arith.constant 6.400000e+01 : f32
    %182 = vector.broadcast %cst_73 : f32 to vector<8x1xf32>
    %183 = arith.divf %181, %182 : vector<8x1xf32>
    %cst_74 = arith.constant 9.99999974E-6 : f32
    %184 = vector.broadcast %cst_74 : f32 to vector<8x1xf32>
    %185 = arith.addf %183, %184 : vector<8x1xf32>
    %186 = math.rsqrt %185 : vector<8x1xf32>
    %187 = vector.broadcast %186 : vector<8x1xf32> to vector<8x64xf32>
    %188 = arith.mulf %178, %187 : vector<8x64xf32>
    %189 = vector.broadcast %170 : vector<1x64xf32> to vector<8x64xf32>
    %190 = arith.mulf %188, %189 : vector<8x64xf32>
    %191 = vector.broadcast %172 : vector<1x64xf32> to vector<8x64xf32>
    %192 = arith.addf %190, %191 : vector<8x64xf32>
    %193 = arith.truncf %192 : vector<8x64xf32> to vector<8x64xbf16>
    %c1 = arith.constant 1 : index
    %c0_75 = arith.constant 0 : index
    %c0_76 = arith.constant 0 : index
    %194 = vector.load %arg2[%c1, %c0_75, %c0_76] : memref<2x64x192xbf16, #tpu.memory_space<vmem>>, vector<1x64x192xbf16>
    %195 = vector.shape_cast %194 : vector<1x64x192xbf16> to vector<64x192xbf16>
    %cst_77 = arith.constant dense<0.000000e+00> : vector<8x192xf32>
    %196 = tpu.matmul %193, %195, %cst_77 {dimension_numbers = #tpu.dot_dimension_numbers<[1], [0], [0], [1], [0, 0, 1, 1], [], []>} : vector<8x64xbf16>, vector<64x192xbf16>, vector<8x192xf32> -> vector<8x192xf32>
    %c1_78 = arith.constant 1 : index
    %c0_79 = arith.constant 0 : index
    %c0_80 = arith.constant 0 : index
    %197 = vector.load %arg3[%c1_78, %c0_79, %c0_80] : memref<2x1x192xf32, #tpu.memory_space<vmem>>, vector<1x1x192xf32>
    %198 = vector.shape_cast %197 : vector<1x1x192xf32> to vector<1x192xf32>
    %199 = vector.broadcast %198 : vector<1x192xf32> to vector<8x192xf32>
    %200 = arith.addf %196, %199 : vector<8x192xf32>
    %201 = vector.shape_cast %200 : vector<8x192xf32> to vector<1x8x192xf32>
    %c1_81 = arith.constant 1 : index
    %c0_82 = arith.constant 0 : index
    %c0_83 = arith.constant 0 : index
    %202 = vector.load %arg4[%c1_81, %c0_82, %c0_83] : memref<2x64x64xbf16, #tpu.memory_space<vmem>>, vector<1x64x64xbf16>
    %203 = vector.shape_cast %202 : vector<1x64x64xbf16> to vector<64x64xbf16>
    %cst_84 = arith.constant 0.000000e+00 : f32
    %204 = vector.broadcast %cst_84 : f32 to vector<8x64xf32>
    %205 = vector.extract_strided_slice %201 {offsets = [0, 0, 0], sizes = [1, 8, 16], strides = [1, 1, 1]} : vector<1x8x192xf32> to vector<1x8x16xf32>
    %206 = arith.truncf %205 : vector<1x8x16xf32> to vector<1x8x16xbf16>
    %207 = vector.extract_strided_slice %201 {offsets = [0, 0, 64], sizes = [1, 8, 16], strides = [1, 1, 1]} : vector<1x8x192xf32> to vector<1x8x16xf32>
    %208 = arith.truncf %207 : vector<1x8x16xf32> to vector<1x8x16xbf16>
    %209 = vector.extract_strided_slice %201 {offsets = [0, 0, 128], sizes = [1, 8, 16], strides = [1, 1, 1]} : vector<1x8x192xf32> to vector<1x8x16xf32>
    %210 = arith.truncf %209 : vector<1x8x16xf32> to vector<1x8x16xbf16>
    "tpu.trace_start"() <{level = 10 : i32, message = "bqd,bkd->bqk"}> : () -> ()
    %cst_85 = arith.constant dense<0.000000e+00> : vector<1x8x8xf32>
    %211 = tpu.matmul %206, %208, %cst_85 {dimension_numbers = #tpu.dot_dimension_numbers<[2], [2], [1], [1], [0, 0, 0, 1, 1, 1], [0], [0]>} : vector<1x8x16xbf16>, vector<1x8x16xbf16>, vector<1x8x8xf32> -> vector<1x8x8xf32>
    %cst_86 = arith.constant -1.000000e+30 : f32
    "tpu.trace_stop"() : () -> ()
    %212 = vector.broadcast %cst_86 : f32 to vector<1x8x8xf32>
    %213 = arith.select %4, %211, %212 : vector<1x8x8xi1>, vector<1x8x8xf32>
    %cst_87 = arith.constant dense<0xFF800000> : vector<1x8xf32>
    %214 = vector.multi_reduction <maximumf>, %213, %cst_87 [2] : vector<1x8x8xf32> to vector<1x8xf32>
    %215 = vector.shape_cast %214 : vector<1x8xf32> to vector<1x8x1xf32>
    %216 = vector.broadcast %215 : vector<1x8x1xf32> to vector<1x8x8xf32>
    %217 = arith.subf %213, %216 : vector<1x8x8xf32>
    %218 = math.exp %217 : vector<1x8x8xf32>
    %cst_88 = arith.constant dense<0.000000e+00> : vector<1x8xf32>
    %219 = vector.multi_reduction <add>, %218, %cst_88 [2] : vector<1x8x8xf32> to vector<1x8xf32>
    %220 = vector.shape_cast %219 : vector<1x8xf32> to vector<1x8x1xf32>
    %221 = tpu.reciprocal %220 {approx = true} : vector<1x8x1xf32> -> vector<1x8x1xf32>
    %222 = vector.broadcast %221 : vector<1x8x1xf32> to vector<1x8x8xf32>
    %223 = arith.mulf %218, %222 : vector<1x8x8xf32>
    %224 = arith.truncf %223 : vector<1x8x8xf32> to vector<1x8x8xbf16>
    "tpu.trace_start"() <{level = 10 : i32, message = "bqk,bkd->bqd"}> : () -> ()
    %cst_89 = arith.constant dense<0.000000e+00> : vector<1x8x16xf32>
    %225 = tpu.matmul %224, %210, %cst_89 {dimension_numbers = #tpu.dot_dimension_numbers<[2], [1], [1], [2], [0, 0, 0, 1, 1, 2], [0], [0]>} : vector<1x8x8xbf16>, vector<1x8x16xbf16>, vector<1x8x16xf32> -> vector<1x8x16xf32>
    "tpu.trace_stop"() : () -> ()
    %226 = vector.shape_cast %225 : vector<1x8x16xf32> to vector<8x16xf32>
    %227 = arith.truncf %226 : vector<8x16xf32> to vector<8x16xbf16>
    %228 = vector.extract_strided_slice %203 {offsets = [0, 0], sizes = [16, 64], strides = [1, 1]} : vector<64x64xbf16> to vector<16x64xbf16>
    %cst_90 = arith.constant dense<0.000000e+00> : vector<8x64xf32>
    %229 = tpu.matmul %227, %228, %cst_90 {dimension_numbers = #tpu.dot_dimension_numbers<[1], [0], [0], [1], [0, 0, 1, 1], [], []>} : vector<8x16xbf16>, vector<16x64xbf16>, vector<8x64xf32> -> vector<8x64xf32>
    %230 = arith.addf %204, %229 : vector<8x64xf32>
    %231 = vector.extract_strided_slice %201 {offsets = [0, 0, 16], sizes = [1, 8, 16], strides = [1, 1, 1]} : vector<1x8x192xf32> to vector<1x8x16xf32>
    %232 = arith.truncf %231 : vector<1x8x16xf32> to vector<1x8x16xbf16>
    %233 = vector.extract_strided_slice %201 {offsets = [0, 0, 80], sizes = [1, 8, 16], strides = [1, 1, 1]} : vector<1x8x192xf32> to vector<1x8x16xf32>
    %234 = arith.truncf %233 : vector<1x8x16xf32> to vector<1x8x16xbf16>
    %235 = vector.extract_strided_slice %201 {offsets = [0, 0, 144], sizes = [1, 8, 16], strides = [1, 1, 1]} : vector<1x8x192xf32> to vector<1x8x16xf32>
    %236 = arith.truncf %235 : vector<1x8x16xf32> to vector<1x8x16xbf16>
    "tpu.trace_start"() <{level = 10 : i32, message = "bqd,bkd->bqk"}> : () -> ()
    %cst_91 = arith.constant dense<0.000000e+00> : vector<1x8x8xf32>
    %237 = tpu.matmul %232, %234, %cst_91 {dimension_numbers = #tpu.dot_dimension_numbers<[2], [2], [1], [1], [0, 0, 0, 1, 1, 1], [0], [0]>} : vector<1x8x16xbf16>, vector<1x8x16xbf16>, vector<1x8x8xf32> -> vector<1x8x8xf32>
    %cst_92 = arith.constant -1.000000e+30 : f32
    "tpu.trace_stop"() : () -> ()
    %238 = vector.broadcast %cst_92 : f32 to vector<1x8x8xf32>
    %239 = arith.select %4, %237, %238 : vector<1x8x8xi1>, vector<1x8x8xf32>
    %cst_93 = arith.constant dense<0xFF800000> : vector<1x8xf32>
    %240 = vector.multi_reduction <maximumf>, %239, %cst_93 [2] : vector<1x8x8xf32> to vector<1x8xf32>
    %241 = vector.shape_cast %240 : vector<1x8xf32> to vector<1x8x1xf32>
    %242 = vector.broadcast %241 : vector<1x8x1xf32> to vector<1x8x8xf32>
    %243 = arith.subf %239, %242 : vector<1x8x8xf32>
    %244 = math.exp %243 : vector<1x8x8xf32>
    %cst_94 = arith.constant dense<0.000000e+00> : vector<1x8xf32>
    %245 = vector.multi_reduction <add>, %244, %cst_94 [2] : vector<1x8x8xf32> to vector<1x8xf32>
    %246 = vector.shape_cast %245 : vector<1x8xf32> to vector<1x8x1xf32>
    %247 = tpu.reciprocal %246 {approx = true} : vector<1x8x1xf32> -> vector<1x8x1xf32>
    %248 = vector.broadcast %247 : vector<1x8x1xf32> to vector<1x8x8xf32>
    %249 = arith.mulf %244, %248 : vector<1x8x8xf32>
    %250 = arith.truncf %249 : vector<1x8x8xf32> to vector<1x8x8xbf16>
    "tpu.trace_start"() <{level = 10 : i32, message = "bqk,bkd->bqd"}> : () -> ()
    %cst_95 = arith.constant dense<0.000000e+00> : vector<1x8x16xf32>
    %251 = tpu.matmul %250, %236, %cst_95 {dimension_numbers = #tpu.dot_dimension_numbers<[2], [1], [1], [2], [0, 0, 0, 1, 1, 2], [0], [0]>} : vector<1x8x8xbf16>, vector<1x8x16xbf16>, vector<1x8x16xf32> -> vector<1x8x16xf32>
    "tpu.trace_stop"() : () -> ()
    %252 = vector.shape_cast %251 : vector<1x8x16xf32> to vector<8x16xf32>
    %253 = arith.truncf %252 : vector<8x16xf32> to vector<8x16xbf16>
    %254 = vector.extract_strided_slice %203 {offsets = [16, 0], sizes = [16, 64], strides = [1, 1]} : vector<64x64xbf16> to vector<16x64xbf16>
    %cst_96 = arith.constant dense<0.000000e+00> : vector<8x64xf32>
    %255 = tpu.matmul %253, %254, %cst_96 {dimension_numbers = #tpu.dot_dimension_numbers<[1], [0], [0], [1], [0, 0, 1, 1], [], []>} : vector<8x16xbf16>, vector<16x64xbf16>, vector<8x64xf32> -> vector<8x64xf32>
    %256 = arith.addf %230, %255 : vector<8x64xf32>
    %257 = vector.extract_strided_slice %201 {offsets = [0, 0, 32], sizes = [1, 8, 16], strides = [1, 1, 1]} : vector<1x8x192xf32> to vector<1x8x16xf32>
    %258 = arith.truncf %257 : vector<1x8x16xf32> to vector<1x8x16xbf16>
    %259 = vector.extract_strided_slice %201 {offsets = [0, 0, 96], sizes = [1, 8, 16], strides = [1, 1, 1]} : vector<1x8x192xf32> to vector<1x8x16xf32>
    %260 = arith.truncf %259 : vector<1x8x16xf32> to vector<1x8x16xbf16>
    %261 = vector.extract_strided_slice %201 {offsets = [0, 0, 160], sizes = [1, 8, 16], strides = [1, 1, 1]} : vector<1x8x192xf32> to vector<1x8x16xf32>
    %262 = arith.truncf %261 : vector<1x8x16xf32> to vector<1x8x16xbf16>
    "tpu.trace_start"() <{level = 10 : i32, message = "bqd,bkd->bqk"}> : () -> ()
    %cst_97 = arith.constant dense<0.000000e+00> : vector<1x8x8xf32>
    %263 = tpu.matmul %258, %260, %cst_97 {dimension_numbers = #tpu.dot_dimension_numbers<[2], [2], [1], [1], [0, 0, 0, 1, 1, 1], [0], [0]>} : vector<1x8x16xbf16>, vector<1x8x16xbf16>, vector<1x8x8xf32> -> vector<1x8x8xf32>
    %cst_98 = arith.constant -1.000000e+30 : f32
    "tpu.trace_stop"() : () -> ()
    %264 = vector.broadcast %cst_98 : f32 to vector<1x8x8xf32>
    %265 = arith.select %4, %263, %264 : vector<1x8x8xi1>, vector<1x8x8xf32>
    %cst_99 = arith.constant dense<0xFF800000> : vector<1x8xf32>
    %266 = vector.multi_reduction <maximumf>, %265, %cst_99 [2] : vector<1x8x8xf32> to vector<1x8xf32>
    %267 = vector.shape_cast %266 : vector<1x8xf32> to vector<1x8x1xf32>
    %268 = vector.broadcast %267 : vector<1x8x1xf32> to vector<1x8x8xf32>
    %269 = arith.subf %265, %268 : vector<1x8x8xf32>
    %270 = math.exp %269 : vector<1x8x8xf32>
    %cst_100 = arith.constant dense<0.000000e+00> : vector<1x8xf32>
    %271 = vector.multi_reduction <add>, %270, %cst_100 [2] : vector<1x8x8xf32> to vector<1x8xf32>
    %272 = vector.shape_cast %271 : vector<1x8xf32> to vector<1x8x1xf32>
    %273 = tpu.reciprocal %272 {approx = true} : vector<1x8x1xf32> -> vector<1x8x1xf32>
    %274 = vector.broadcast %273 : vector<1x8x1xf32> to vector<1x8x8xf32>
    %275 = arith.mulf %270, %274 : vector<1x8x8xf32>
    %276 = arith.truncf %275 : vector<1x8x8xf32> to vector<1x8x8xbf16>
    "tpu.trace_start"() <{level = 10 : i32, message = "bqk,bkd->bqd"}> : () -> ()
    %cst_101 = arith.constant dense<0.000000e+00> : vector<1x8x16xf32>
    %277 = tpu.matmul %276, %262, %cst_101 {dimension_numbers = #tpu.dot_dimension_numbers<[2], [1], [1], [2], [0, 0, 0, 1, 1, 2], [0], [0]>} : vector<1x8x8xbf16>, vector<1x8x16xbf16>, vector<1x8x16xf32> -> vector<1x8x16xf32>
    "tpu.trace_stop"() : () -> ()
    %278 = vector.shape_cast %277 : vector<1x8x16xf32> to vector<8x16xf32>
    %279 = arith.truncf %278 : vector<8x16xf32> to vector<8x16xbf16>
    %280 = vector.extract_strided_slice %203 {offsets = [32, 0], sizes = [16, 64], strides = [1, 1]} : vector<64x64xbf16> to vector<16x64xbf16>
    %cst_102 = arith.constant dense<0.000000e+00> : vector<8x64xf32>
    %281 = tpu.matmul %279, %280, %cst_102 {dimension_numbers = #tpu.dot_dimension_numbers<[1], [0], [0], [1], [0, 0, 1, 1], [], []>} : vector<8x16xbf16>, vector<16x64xbf16>, vector<8x64xf32> -> vector<8x64xf32>
    %282 = arith.addf %256, %281 : vector<8x64xf32>
    %283 = vector.extract_strided_slice %201 {offsets = [0, 0, 48], sizes = [1, 8, 16], strides = [1, 1, 1]} : vector<1x8x192xf32> to vector<1x8x16xf32>
    %284 = arith.truncf %283 : vector<1x8x16xf32> to vector<1x8x16xbf16>
    %285 = vector.extract_strided_slice %201 {offsets = [0, 0, 112], sizes = [1, 8, 16], strides = [1, 1, 1]} : vector<1x8x192xf32> to vector<1x8x16xf32>
    %286 = arith.truncf %285 : vector<1x8x16xf32> to vector<1x8x16xbf16>
    %287 = vector.extract_strided_slice %201 {offsets = [0, 0, 176], sizes = [1, 8, 16], strides = [1, 1, 1]} : vector<1x8x192xf32> to vector<1x8x16xf32>
    %288 = arith.truncf %287 : vector<1x8x16xf32> to vector<1x8x16xbf16>
    "tpu.trace_start"() <{level = 10 : i32, message = "bqd,bkd->bqk"}> : () -> ()
    %cst_103 = arith.constant dense<0.000000e+00> : vector<1x8x8xf32>
    %289 = tpu.matmul %284, %286, %cst_103 {dimension_numbers = #tpu.dot_dimension_numbers<[2], [2], [1], [1], [0, 0, 0, 1, 1, 1], [0], [0]>} : vector<1x8x16xbf16>, vector<1x8x16xbf16>, vector<1x8x8xf32> -> vector<1x8x8xf32>
    %cst_104 = arith.constant -1.000000e+30 : f32
    "tpu.trace_stop"() : () -> ()
    %290 = vector.broadcast %cst_104 : f32 to vector<1x8x8xf32>
    %291 = arith.select %4, %289, %290 : vector<1x8x8xi1>, vector<1x8x8xf32>
    %cst_105 = arith.constant dense<0xFF800000> : vector<1x8xf32>
    %292 = vector.multi_reduction <maximumf>, %291, %cst_105 [2] : vector<1x8x8xf32> to vector<1x8xf32>
    %293 = vector.shape_cast %292 : vector<1x8xf32> to vector<1x8x1xf32>
    %294 = vector.broadcast %293 : vector<1x8x1xf32> to vector<1x8x8xf32>
    %295 = arith.subf %291, %294 : vector<1x8x8xf32>
    %296 = math.exp %295 : vector<1x8x8xf32>
    %cst_106 = arith.constant dense<0.000000e+00> : vector<1x8xf32>
    %297 = vector.multi_reduction <add>, %296, %cst_106 [2] : vector<1x8x8xf32> to vector<1x8xf32>
    %298 = vector.shape_cast %297 : vector<1x8xf32> to vector<1x8x1xf32>
    %299 = tpu.reciprocal %298 {approx = true} : vector<1x8x1xf32> -> vector<1x8x1xf32>
    %300 = vector.broadcast %299 : vector<1x8x1xf32> to vector<1x8x8xf32>
    %301 = arith.mulf %296, %300 : vector<1x8x8xf32>
    %302 = arith.truncf %301 : vector<1x8x8xf32> to vector<1x8x8xbf16>
    "tpu.trace_start"() <{level = 10 : i32, message = "bqk,bkd->bqd"}> : () -> ()
    %cst_107 = arith.constant dense<0.000000e+00> : vector<1x8x16xf32>
    %303 = tpu.matmul %302, %288, %cst_107 {dimension_numbers = #tpu.dot_dimension_numbers<[2], [1], [1], [2], [0, 0, 0, 1, 1, 2], [0], [0]>} : vector<1x8x8xbf16>, vector<1x8x16xbf16>, vector<1x8x16xf32> -> vector<1x8x16xf32>
    "tpu.trace_stop"() : () -> ()
    %304 = vector.shape_cast %303 : vector<1x8x16xf32> to vector<8x16xf32>
    %305 = arith.truncf %304 : vector<8x16xf32> to vector<8x16xbf16>
    %306 = vector.extract_strided_slice %203 {offsets = [48, 0], sizes = [16, 64], strides = [1, 1]} : vector<64x64xbf16> to vector<16x64xbf16>
    %cst_108 = arith.constant dense<0.000000e+00> : vector<8x64xf32>
    %307 = tpu.matmul %305, %306, %cst_108 {dimension_numbers = #tpu.dot_dimension_numbers<[1], [0], [0], [1], [0, 0, 1, 1], [], []>} : vector<8x16xbf16>, vector<16x64xbf16>, vector<8x64xf32> -> vector<8x64xf32>
    %308 = arith.addf %282, %307 : vector<8x64xf32>
    %c1_109 = arith.constant 1 : index
    %c0_110 = arith.constant 0 : index
    %c0_111 = arith.constant 0 : index
    %309 = vector.load %arg5[%c1_109, %c0_110, %c0_111] : memref<2x1x64xf32, #tpu.memory_space<vmem>>, vector<1x1x64xf32>
    %310 = vector.shape_cast %309 : vector<1x1x64xf32> to vector<1x64xf32>
    %311 = vector.broadcast %310 : vector<1x64xf32> to vector<8x64xf32>
    %312 = arith.addf %308, %311 : vector<8x64xf32>
    %313 = arith.addf %192, %312 : vector<8x64xf32>
    %c1_112 = arith.constant 1 : index
    %c0_113 = arith.constant 0 : index
    %c0_114 = arith.constant 0 : index
    %314 = vector.load %arg10[%c1_112, %c0_113, %c0_114] : memref<2x1x64xf32, #tpu.memory_space<vmem>>, vector<1x1x64xf32>
    %315 = vector.shape_cast %314 : vector<1x1x64xf32> to vector<1x64xf32>
    %c1_115 = arith.constant 1 : index
    %c0_116 = arith.constant 0 : index
    %c0_117 = arith.constant 0 : index
    %316 = vector.load %arg11[%c1_115, %c0_116, %c0_117] : memref<2x1x64xf32, #tpu.memory_space<vmem>>, vector<1x1x64xf32>
    %317 = vector.shape_cast %316 : vector<1x1x64xf32> to vector<1x64xf32>
    %cst_118 = arith.constant dense<0.000000e+00> : vector<8xf32>
    %318 = vector.multi_reduction <add>, %313, %cst_118 [1] : vector<8x64xf32> to vector<8xf32>
    %319 = vector.shape_cast %318 : vector<8xf32> to vector<8x1xf32>
    %cst_119 = arith.constant 6.400000e+01 : f32
    %320 = vector.broadcast %cst_119 : f32 to vector<8x1xf32>
    %321 = arith.divf %319, %320 : vector<8x1xf32>
    %322 = vector.broadcast %321 : vector<8x1xf32> to vector<8x64xf32>
    %323 = arith.subf %313, %322 : vector<8x64xf32>
    %324 = arith.mulf %323, %323 : vector<8x64xf32>
    %cst_120 = arith.constant dense<0.000000e+00> : vector<8xf32>
    %325 = vector.multi_reduction <add>, %324, %cst_120 [1] : vector<8x64xf32> to vector<8xf32>
    %326 = vector.shape_cast %325 : vector<8xf32> to vector<8x1xf32>
    %cst_121 = arith.constant 6.400000e+01 : f32
    %327 = vector.broadcast %cst_121 : f32 to vector<8x1xf32>
    %328 = arith.divf %326, %327 : vector<8x1xf32>
    %cst_122 = arith.constant 9.99999974E-6 : f32
    %329 = vector.broadcast %cst_122 : f32 to vector<8x1xf32>
    %330 = arith.addf %328, %329 : vector<8x1xf32>
    %331 = math.rsqrt %330 : vector<8x1xf32>
    %332 = vector.broadcast %331 : vector<8x1xf32> to vector<8x64xf32>
    %333 = arith.mulf %323, %332 : vector<8x64xf32>
    %334 = vector.broadcast %315 : vector<1x64xf32> to vector<8x64xf32>
    %335 = arith.mulf %333, %334 : vector<8x64xf32>
    %336 = vector.broadcast %317 : vector<1x64xf32> to vector<8x64xf32>
    %337 = arith.addf %335, %336 : vector<8x64xf32>
    %338 = arith.truncf %337 : vector<8x64xf32> to vector<8x64xbf16>
    %c1_123 = arith.constant 1 : index
    %c0_124 = arith.constant 0 : index
    %c0_125 = arith.constant 0 : index
    %339 = vector.load %arg6[%c1_123, %c0_124, %c0_125] : memref<2x64x256xbf16, #tpu.memory_space<vmem>>, vector<1x64x256xbf16>
    %340 = vector.shape_cast %339 : vector<1x64x256xbf16> to vector<64x256xbf16>
    %cst_126 = arith.constant dense<0.000000e+00> : vector<8x256xf32>
    %341 = tpu.matmul %338, %340, %cst_126 {dimension_numbers = #tpu.dot_dimension_numbers<[1], [0], [0], [1], [0, 0, 1, 1], [], []>} : vector<8x64xbf16>, vector<64x256xbf16>, vector<8x256xf32> -> vector<8x256xf32>
    %c1_127 = arith.constant 1 : index
    %c0_128 = arith.constant 0 : index
    %c0_129 = arith.constant 0 : index
    %342 = vector.load %arg7[%c1_127, %c0_128, %c0_129] : memref<2x1x256xf32, #tpu.memory_space<vmem>>, vector<1x1x256xf32>
    %343 = vector.shape_cast %342 : vector<1x1x256xf32> to vector<1x256xf32>
    %344 = vector.broadcast %343 : vector<1x256xf32> to vector<8x256xf32>
    %345 = arith.addf %341, %344 : vector<8x256xf32>
    %cst_130 = arith.constant 0.000000e+00 : f32
    %346 = vector.broadcast %cst_130 : f32 to vector<8x256xf32>
    %347 = arith.maximumf %345, %346 : vector<8x256xf32>
    %348 = arith.truncf %347 : vector<8x256xf32> to vector<8x256xbf16>
    %c1_131 = arith.constant 1 : index
    %c0_132 = arith.constant 0 : index
    %c0_133 = arith.constant 0 : index
    %349 = vector.load %arg8[%c1_131, %c0_132, %c0_133] : memref<2x256x64xbf16, #tpu.memory_space<vmem>>, vector<1x256x64xbf16>
    %350 = vector.shape_cast %349 : vector<1x256x64xbf16> to vector<256x64xbf16>
    %cst_134 = arith.constant dense<0.000000e+00> : vector<8x64xf32>
    %351 = tpu.matmul %348, %350, %cst_134 {dimension_numbers = #tpu.dot_dimension_numbers<[1], [0], [0], [1], [0, 0, 1, 1], [], []>} : vector<8x256xbf16>, vector<256x64xbf16>, vector<8x64xf32> -> vector<8x64xf32>
    %c1_135 = arith.constant 1 : index
    %c0_136 = arith.constant 0 : index
    %c0_137 = arith.constant 0 : index
    %352 = vector.load %arg9[%c1_135, %c0_136, %c0_137] : memref<2x1x64xf32, #tpu.memory_space<vmem>>, vector<1x1x64xf32>
    %353 = vector.shape_cast %352 : vector<1x1x64xf32> to vector<1x64xf32>
    %354 = vector.broadcast %353 : vector<1x64xf32> to vector<8x64xf32>
    %355 = arith.addf %351, %354 : vector<8x64xf32>
    %356 = arith.addf %337, %355 : vector<8x64xf32>
    %c1_138 = arith.constant 1 : index
    %c0_139 = arith.constant 0 : index
    %c0_140 = arith.constant 0 : index
    %357 = vector.load %arg12[%c1_138, %c0_139, %c0_140] : memref<2x1x64xf32, #tpu.memory_space<vmem>>, vector<1x1x64xf32>
    %358 = vector.shape_cast %357 : vector<1x1x64xf32> to vector<1x64xf32>
    %c1_141 = arith.constant 1 : index
    %c0_142 = arith.constant 0 : index
    %c0_143 = arith.constant 0 : index
    %359 = vector.load %arg13[%c1_141, %c0_142, %c0_143] : memref<2x1x64xf32, #tpu.memory_space<vmem>>, vector<1x1x64xf32>
    %360 = vector.shape_cast %359 : vector<1x1x64xf32> to vector<1x64xf32>
    %cst_144 = arith.constant dense<0.000000e+00> : vector<8xf32>
    %361 = vector.multi_reduction <add>, %356, %cst_144 [1] : vector<8x64xf32> to vector<8xf32>
    %362 = vector.shape_cast %361 : vector<8xf32> to vector<8x1xf32>
    %cst_145 = arith.constant 6.400000e+01 : f32
    %363 = vector.broadcast %cst_145 : f32 to vector<8x1xf32>
    %364 = arith.divf %362, %363 : vector<8x1xf32>
    %365 = vector.broadcast %364 : vector<8x1xf32> to vector<8x64xf32>
    %366 = arith.subf %356, %365 : vector<8x64xf32>
    %367 = arith.mulf %366, %366 : vector<8x64xf32>
    %cst_146 = arith.constant dense<0.000000e+00> : vector<8xf32>
    %368 = vector.multi_reduction <add>, %367, %cst_146 [1] : vector<8x64xf32> to vector<8xf32>
    %369 = vector.shape_cast %368 : vector<8xf32> to vector<8x1xf32>
    %cst_147 = arith.constant 6.400000e+01 : f32
    %370 = vector.broadcast %cst_147 : f32 to vector<8x1xf32>
    %371 = arith.divf %369, %370 : vector<8x1xf32>
    %cst_148 = arith.constant 9.99999974E-6 : f32
    %372 = vector.broadcast %cst_148 : f32 to vector<8x1xf32>
    %373 = arith.addf %371, %372 : vector<8x1xf32>
    %374 = math.rsqrt %373 : vector<8x1xf32>
    %375 = vector.broadcast %374 : vector<8x1xf32> to vector<8x64xf32>
    %376 = arith.mulf %366, %375 : vector<8x64xf32>
    %377 = vector.broadcast %358 : vector<1x64xf32> to vector<8x64xf32>
    %378 = arith.mulf %376, %377 : vector<8x64xf32>
    %379 = vector.broadcast %360 : vector<1x64xf32> to vector<8x64xf32>
    %380 = arith.addf %378, %379 : vector<8x64xf32>
    %381 = arith.truncf %380 : vector<8x64xf32> to vector<8x64xbf16>
    %c0_149 = arith.constant 0 : index
    %c0_150 = arith.constant 0 : index
    %382 = vector.load %arg14[%c0_149, %c0_150] : memref<64x128xbf16, #tpu.memory_space<vmem>>, vector<64x128xbf16>
    %cst_151 = arith.constant dense<0.000000e+00> : vector<8x128xf32>
    %383 = tpu.matmul %381, %382, %cst_151 {dimension_numbers = #tpu.dot_dimension_numbers<[1], [0], [0], [1], [0, 0, 1, 1], [], []>} : vector<8x64xbf16>, vector<64x128xbf16>, vector<8x128xf32> -> vector<8x128xf32>
    %c0_152 = arith.constant 0 : index
    %c0_153 = arith.constant 0 : index
    %384 = vector.load %arg15[%c0_152, %c0_153] : memref<1x128xf32, #tpu.memory_space<vmem>>, vector<1x128xf32>
    %385 = vector.broadcast %384 : vector<1x128xf32> to vector<8x128xf32>
    %386 = arith.addf %383, %385 : vector<8x128xf32>
    %c0_154 = arith.constant 0 : index
    %c0_155 = arith.constant 0 : index
    %387 = vector.load %arg16[%c0_154, %c0_155] : memref<8x128xf32, #tpu.memory_space<vmem>>, vector<8x128xf32>
    tpu.vector_store %arg16[%c0_154, %c0_155], %386 {strides = array<i32>} : memref<8x128xf32, #tpu.memory_space<vmem>>, vector<8x128xf32>,
    return
  }
  func.func @transform_0(%arg0: i32) -> (i32, i32) {
    %c0_i32 = arith.constant 0 : i32
    %c0_i32_0 = arith.constant 0 : i32
    return %arg0, %c0_i32 : i32, i32
  }
  func.func @transform_1(%arg0: i32) -> (i32, i32, i32) {
    %c0_i32 = arith.constant 0 : i32
    %c0_i32_0 = arith.constant 0 : i32
    %c0_i32_1 = arith.constant 0 : i32
    %c0_i32_2 = arith.constant 0 : i32
    return %c0_i32, %c0_i32_0, %c0_i32_1 : i32, i32, i32
  }
  func.func @transform_2(%arg0: i32) -> (i32, i32, i32) {
    %c0_i32 = arith.constant 0 : i32
    %c0_i32_0 = arith.constant 0 : i32
    %c0_i32_1 = arith.constant 0 : i32
    %c0_i32_2 = arith.constant 0 : i32
    return %c0_i32, %c0_i32_0, %c0_i32_1 : i32, i32, i32
  }
  func.func @transform_3(%arg0: i32) -> (i32, i32, i32) {
    %c0_i32 = arith.constant 0 : i32
    %c0_i32_0 = arith.constant 0 : i32
    %c0_i32_1 = arith.constant 0 : i32
    %c0_i32_2 = arith.constant 0 : i32
    return %c0_i32, %c0_i32_0, %c0_i32_1 : i32, i32, i32
  }
  func.func @transform_4(%arg0: i32) -> (i32, i32, i32) {
    %c0_i32 = arith.constant 0 : i32
    %c0_i32_0 = arith.constant 0 : i32
    %c0_i32_1 = arith.constant 0 : i32
    %c0_i32_2 = arith.constant 0 : i32
    return %c0_i32, %c0_i32_0, %c0_i32_1 : i32, i32, i32
  }
  func.func @transform_5(%arg0: i32) -> (i32, i32, i32) {
    %c0_i32 = arith.constant 0 : i32
    %c0_i32_0 = arith.constant 0 : i32
    %c0_i32_1 = arith.constant 0 : i32
    %c0_i32_2 = arith.constant 0 : i32
    return %c0_i32, %c0_i32_0, %c0_i32_1 : i32, i32, i32
  }
  func.func @transform_6(%arg0: i32) -> (i32, i32, i32) {
    %c0_i32 = arith.constant 0 : i32
    %c0_i32_0 = arith.constant 0 : i32
    %c0_i32_1 = arith.constant 0 : i32
    %c0_i32_2 = arith.constant 0 : i32
    return %c0_i32, %c0_i32_0, %c0_i32_1 : i32, i32, i32
  }
  func.func @transform_7(%arg0: i32) -> (i32, i32, i32) {
    %c0_i32 = arith.constant 0 : i32
    %c0_i32_0 = arith.constant 0 : i32
    %c0_i32_1 = arith.constant 0 : i32
    %c0_i32_2 = arith.constant 0 : i32
    return %c0_i32, %c0_i32_0, %c0_i32_1 : i32, i32, i32
  }
  func.func @transform_8(%arg0: i32) -> (i32, i32, i32) {
    %c0_i32 = arith.constant 0 : i32
    %c0_i32_0 = arith.constant 0 : i32
    %c0_i32_1 = arith.constant 0 : i32
    %c0_i32_2 = arith.constant 0 : i32
    return %c0_i32, %c0_i32_0, %c0_i32_1 : i32, i32, i32
  }
  func.func @transform_9(%arg0: i32) -> (i32, i32, i32) {
    %c0_i32 = arith.constant 0 : i32
    %c0_i32_0 = arith.constant 0 : i32
    %c0_i32_1 = arith.constant 0 : i32
    %c0_i32_2 = arith.constant 0 : i32
    return %c0_i32, %c0_i32_0, %c0_i32_1 : i32, i32, i32
  }
  func.func @transform_10(%arg0: i32) -> (i32, i32, i32) {
    %c0_i32 = arith.constant 0 : i32
    %c0_i32_0 = arith.constant 0 : i32
    %c0_i32_1 = arith.constant 0 : i32
    %c0_i32_2 = arith.constant 0 : i32
    return %c0_i32, %c0_i32_0, %c0_i32_1 : i32, i32, i32
  }
  func.func @transform_11(%arg0: i32) -> (i32, i32, i32) {
    %c0_i32 = arith.constant 0 : i32
    %c0_i32_0 = arith.constant 0 : i32
    %c0_i32_1 = arith.constant 0 : i32
    %c0_i32_2 = arith.constant 0 : i32
    return %c0_i32, %c0_i32_0, %c0_i32_1 : i32, i32, i32
  }
  func.func @transform_12(%arg0: i32) -> (i32, i32, i32) {
    %c0_i32 = arith.constant 0 : i32
    %c0_i32_0 = arith.constant 0 : i32
    %c0_i32_1 = arith.constant 0 : i32
    %c0_i32_2 = arith.constant 0 : i32
    return %c0_i32, %c0_i32_0, %c0_i32_1 : i32, i32, i32
  }
  func.func @transform_13(%arg0: i32) -> (i32, i32) {
    %c0_i32 = arith.constant 0 : i32
    %c0_i32_0 = arith.constant 0 : i32
    %c0_i32_1 = arith.constant 0 : i32
    return %c0_i32, %c0_i32_0 : i32, i32
  }
  func.func @transform_14(%arg0: i32) -> (i32, i32) {
    %c0_i32 = arith.constant 0 : i32
    %c0_i32_0 = arith.constant 0 : i32
    %c0_i32_1 = arith.constant 0 : i32
    return %c0_i32, %c0_i32_0 : i32, i32
  }
  func.func @transform_15(%arg0: i32) -> (i32, i32) {
    %c0_i32 = arith.constant 0 : i32
    %c0_i32_0 = arith.constant 0 : i32
    return %arg0, %c0_i32 : i32, i32
  }
}

</mosaic_0001>

<llo_original>
// kernel: tpu_custom_call.1
$region0: #{tpu_custom_call.1}
  #allocation0 [shape = 'u32[]', space=smem, size = 0x4, offset = 0x4, fixed_abs, tag = 'smem constant byte address 0x4 - core index']
  #allocation1 [shape = 'u32[144,128]{1,0:T(1,128)}', space=vmem, size = 0x12000, scoped, tag = 'internal scratch']
  %s0 = inlined_call_operand.vmem [shape: f32[16,64], index: 0, kind: input, shape index: {}]
  %s1 = inlined_call_operand.vmem [shape: bf16[2,64,192], index: 1, kind: input, shape index: {}]
  %s2 = inlined_call_operand.vmem [shape: f32[2,1,192], index: 2, kind: input, shape index: {}]
  %s3 = inlined_call_operand.vmem [shape: bf16[2,64,64], index: 3, kind: input, shape index: {}]
  %s4 = inlined_call_operand.vmem [shape: f32[2,1,64], index: 4, kind: input, shape index: {}]
  %s5 = inlined_call_operand.vmem [shape: bf16[2,64,256], index: 5, kind: input, shape index: {}]
  %s6 = inlined_call_operand.vmem [shape: f32[2,1,256], index: 6, kind: input, shape index: {}]
  %s7 = inlined_call_operand.vmem [shape: bf16[2,256,64], index: 7, kind: input, shape index: {}]
  %s8 = inlined_call_operand.vmem [shape: f32[2,1,64], index: 8, kind: input, shape index: {}]
  %s9 = inlined_call_operand.vmem [shape: f32[2,1,64], index: 9, kind: input, shape index: {}]
  %s10 = inlined_call_operand.vmem [shape: f32[2,1,64], index: 10, kind: input, shape index: {}]
  %s11 = inlined_call_operand.vmem [shape: f32[2,1,64], index: 11, kind: input, shape index: {}]
  %s12 = inlined_call_operand.vmem [shape: f32[2,1,64], index: 12, kind: input, shape index: {}]
  %s13 = inlined_call_operand.vmem [shape: bf16[64,128], index: 13, kind: input, shape index: {}]
  %s14 = inlined_call_operand.vmem [shape: f32[1,128], index: 14, kind: input, shape index: {}]
  %s15 = inlined_call_operand.hbm [shape: f32[16,128], index: 15, kind: output, shape index: {}]
  %s16 = sld [smem:[#allocation0]]
  $region93: #{tpu_custom_call.1} parent=0
    _
  %s18 = ssub.s32 1, %s16
  %s19 = scalar_select 0, %s18, %s16
  $region1: #{tpu_custom_call.1} parent=0
    #allocation2 [shape = 'u8[8192]{0}', space=vmem, size = 0x2000, scoped, tag = 'output window, operand 0']
    #allocation3 [shape = 's32[2]{0}', space=sflag, size = 0x8, scoped, tag = 'scoped memory for tpu_custom_call.1']
    %20 = vsyncpa [#allocation3], 0
    %s21 = scalar_lea.sflag [#allocation3], 1
    %22 = vsyncpa %s21, 0
    loop: start=0, step=1, limit=4
    $region2: #{tpu_custom_call.1} parent=1 // loop_pre_header
      _
    $region3: #{tpu_custom_call.1} parent=1 // loop_header
      %s24 = sphi 0, %s28
      %p25 = scmp.ge.s32.totalorder %s24, 4
      %s34 = sphi 0, %s36
      %s37 = sphi 0, %s34
      %s38 = sphi 0, %s37
      %s54 = sphi 0, %s38
      %s58 = sphi 0, %s58
      %s60 = sphi 0, %s58
      %s61 = sphi 0, %s60
      %s75 = sphi 0, %s61
      %s79 = sphi 0, %s79
      %s81 = sphi 0, %s79
      %s82 = sphi 0, %s81
      %s96 = sphi 0, %s82
      %s100 = sphi 0, %s100
      %s102 = sphi 0, %s100
      %s103 = sphi 0, %s102
      %s117 = sphi 0, %s103
      %s121 = sphi 0, %s121
      %s123 = sphi 0, %s121
      %s124 = sphi 0, %s123
      %s138 = sphi 0, %s124
      %s142 = sphi 0, %s142
      %s144 = sphi 0, %s142
      %s145 = sphi 0, %s144
      %s159 = sphi 0, %s145
      %s163 = sphi 0, %s163
      %s165 = sphi 0, %s163
      %s166 = sphi 0, %s165
      %s180 = sphi 0, %s166
      %s184 = sphi 0, %s184
      %s186 = sphi 0, %s184
      %s187 = sphi 0, %s186
      %s201 = sphi 0, %s187
      %s205 = sphi 0, %s205
      %s207 = sphi 0, %s205
      %s208 = sphi 0, %s207
      %s222 = sphi 0, %s208
      %s226 = sphi 0, %s226
      %s228 = sphi 0, %s226
      %s229 = sphi 0, %s228
      %s243 = sphi 0, %s229
      %s247 = sphi 0, %s247
      %s249 = sphi 0, %s247
      %s250 = sphi 0, %s249
      %s264 = sphi 0, %s250
      %s268 = sphi 0, %s268
      %s270 = sphi 0, %s268
      %s271 = sphi 0, %s270
      %s285 = sphi 0, %s271
      %s289 = sphi 0, %s289
      %s291 = sphi 0, %s289
      %s292 = sphi 0, %s291
      %s306 = sphi 0, %s292
      %s310 = sphi 0, %s310
      %s312 = sphi 0, %s310
      %s313 = sphi 0, %s312
      %s327 = sphi 0, %s313
      %s331 = sphi 0, %s331
      %s333 = sphi 0, %s331
      %s334 = sphi 0, %s333
      %s348 = sphi 0, %s334
      %s354 = sphi 0, %s356
      %s357 = sphi 0, %s354
      %s358 = sphi 0, %s357
      %s374 = sphi 0, %s358
    $region4: #{tpu_custom_call.1} parent=1 // loop_header_branch
      %27 = sbr.rel (%p25) target = $region8
    $region5: #{tpu_custom_call.1} parent=1 // loop_body
      %s29 = ssub.s32 %s24, 1
      %s30 = ssub.s32 %s24, 2
      %s31 = sadd.s32 %s24, 1
      %s32 = ssub.s32 %s24, %s31
      %p33 = scmp.eq.s32.totalorder %s32, 0
      %s35 = sadd.s32 %s34, 1
      %s36 = scalar_select %p33, %s34, %s35
      %p39 = pneg %p33
      %p40 = scmp.eq.s32.totalorder %s24, 1
      %p41 = por %p39, %p40
      %p42 = scmp.ne.s32.totalorder %s34, %s37
      %p43 = scmp.eq.s32.totalorder %s24, 0
      %p44 = por %p42, %p43
      %p45 = scmp.ne.s32.totalorder %s34, %s37
      %p46 = scmp.eq.s32.totalorder %s29, 1
      %p47 = por %p45, %p46
      %p48 = scmp.ne.s32.totalorder %s37, %s38
      %p49 = scmp.eq.s32.totalorder %s29, 0
      %p50 = por %p48, %p49
      %p51 = scmp.ne.s32.totalorder %s37, %s38
      %p52 = scmp.eq.s32.totalorder %s30, 1
      %p53 = por %p51, %p52
      %p55 = scmp.ne.s32.totalorder %s38, %s54
      %p56 = scmp.eq.s32.totalorder %s30, 0
      %p57 = por %p55, %p56
      %s59 = sadd.s32 %s58, 1
      %p62 = scmp.eq.s32.totalorder %s24, 1
      %p63 = scmp.ne.s32.totalorder %s58, %s60
      %p64 = scmp.eq.s32.totalorder %s24, 0
      %p65 = por %p63, %p64
      %p66 = scmp.ne.s32.totalorder %s58, %s60
      %p67 = scmp.eq.s32.totalorder %s29, 1
      %p68 = por %p66, %p67
      %p69 = scmp.ne.s32.totalorder %s60, %s61
      %p70 = scmp.eq.s32.totalorder %s29, 0
      %p71 = por %p69, %p70
      %p72 = scmp.ne.s32.totalorder %s60, %s61
      %p73 = scmp.eq.s32.totalorder %s30, 1
      %p74 = por %p72, %p73
      %p76 = scmp.ne.s32.totalorder %s61, %s75
      %p77 = scmp.eq.s32.totalorder %s30, 0
      %p78 = por %p76, %p77
      %s80 = sadd.s32 %s79, 1
      %p83 = scmp.eq.s32.totalorder %s24, 1
      %p84 = scmp.ne.s32.totalorder %s79, %s81
      %p85 = scmp.eq.s32.totalorder %s24, 0
      %p86 = por %p84, %p85
      %p87 = scmp.ne.s32.totalorder %s79, %s81
      %p88 = scmp.eq.s32.totalorder %s29, 1
      %p89 = por %p87, %p88
      %p90 = scmp.ne.s32.totalorder %s81, %s82
      %p91 = scmp.eq.s32.totalorder %s29, 0
      %p92 = por %p90, %p91
      %p93 = scmp.ne.s32.totalorder %s81, %s82
      %p94 = scmp.eq.s32.totalorder %s30, 1
      %p95 = por %p93, %p94
      %p97 = scmp.ne.s32.totalorder %s82, %s96
      %p98 = scmp.eq.s32.totalorder %s30, 0
      %p99 = por %p97, %p98
      %s101 = sadd.s32 %s100, 1
      %p104 = scmp.eq.s32.totalorder %s24, 1
      %p105 = scmp.ne.s32.totalorder %s100, %s102
      %p106 = scmp.eq.s32.totalorder %s24, 0
      %p107 = por %p105, %p106
      %p108 = scmp.ne.s32.totalorder %s100, %s102
      %p109 = scmp.eq.s32.totalorder %s29, 1
      %p110 = por %p108, %p109
      %p111 = scmp.ne.s32.totalorder %s102, %s103
      %p112 = scmp.eq.s32.totalorder %s29, 0
      %p113 = por %p111, %p112
      %p114 = scmp.ne.s32.totalorder %s102, %s103
      %p115 = scmp.eq.s32.totalorder %s30, 1
      %p116 = por %p114, %p115
      %p118 = scmp.ne.s32.totalorder %s103, %s117
      %p119 = scmp.eq.s32.totalorder %s30, 0
      %p120 = por %p118, %p119
      %s122 = sadd.s32 %s121, 1
      %p125 = scmp.eq.s32.totalorder %s24, 1
      %p126 = scmp.ne.s32.totalorder %s121, %s123
      %p127 = scmp.eq.s32.totalorder %s24, 0
      %p128 = por %p126, %p127
      %p129 = scmp.ne.s32.totalorder %s121, %s123
      %p130 = scmp.eq.s32.totalorder %s29, 1
      %p131 = por %p129, %p130
      %p132 = scmp.ne.s32.totalorder %s123, %s124
      %p133 = scmp.eq.s32.totalorder %s29, 0
      %p134 = por %p132, %p133
      %p135 = scmp.ne.s32.totalorder %s123, %s124
      %p136 = scmp.eq.s32.totalorder %s30, 1
      %p137 = por %p135, %p136
      %p139 = scmp.ne.s32.totalorder %s124, %s138
      %p140 = scmp.eq.s32.totalorder %s30, 0
      %p141 = por %p139, %p140
      %s143 = sadd.s32 %s142, 1
      %p146 = scmp.eq.s32.totalorder %s24, 1
      %p147 = scmp.ne.s32.totalorder %s142, %s144
      %p148 = scmp.eq.s32.totalorder %s24, 0
      %p149 = por %p147, %p148
      %p150 = scmp.ne.s32.totalorder %s142, %s144
      %p151 = scmp.eq.s32.totalorder %s29, 1
      %p152 = por %p150, %p151
      %p153 = scmp.ne.s32.totalorder %s144, %s145
      %p154 = scmp.eq.s32.totalorder %s29, 0
      %p155 = por %p153, %p154
      %p156 = scmp.ne.s32.totalorder %s144, %s145
      %p157 = scmp.eq.s32.totalorder %s30, 1
      %p158 = por %p156, %p157
      %p160 = scmp.ne.s32.totalorder %s145, %s159
      %p161 = scmp.eq.s32.totalorder %s30, 0
      %p162 = por %p160, %p161
      %s164 = sadd.s32 %s163, 1
      %p167 = scmp.eq.s32.totalorder %s24, 1
      %p168 = scmp.ne.s32.totalorder %s163, %s165
      %p169 = scmp.eq.s32.totalorder %s24, 0
      %p170 = por %p168, %p169
      %p171 = scmp.ne.s32.totalorder %s163, %s165
      %p172 = scmp.eq.s32.totalorder %s29, 1
      %p173 = por %p171, %p172
      %p174 = scmp.ne.s32.totalorder %s165, %s166
      %p175 = scmp.eq.s32.totalorder %s29, 0
      %p176 = por %p174, %p175
      %p177 = scmp.ne.s32.totalorder %s165, %s166
      %p178 = scmp.eq.s32.totalorder %s30, 1
      %p179 = por %p177, %p178
      %p181 = scmp.ne.s32.totalorder %s166, %s180
      %p182 = scmp.eq.s32.totalorder %s30, 0
      %p183 = por %p181, %p182
      %s185 = sadd.s32 %s184, 1
      %p188 = scmp.eq.s32.totalorder %s24, 1
      %p189 = scmp.ne.s32.totalorder %s184, %s186
      %p190 = scmp.eq.s32.totalorder %s24, 0
      %p191 = por %p189, %p190
      %p192 = scmp.ne.s32.totalorder %s184, %s186
      %p193 = scmp.eq.s32.totalorder %s29, 1
      %p194 = por %p192, %p193
      %p195 = scmp.ne.s32.totalorder %s186, %s187
      %p196 = scmp.eq.s32.totalorder %s29, 0
      %p197 = por %p195, %p196
      %p198 = scmp.ne.s32.totalorder %s186, %s187
      %p199 = scmp.eq.s32.totalorder %s30, 1
      %p200 = por %p198, %p199
      %p202 = scmp.ne.s32.totalorder %s187, %s201
      %p203 = scmp.eq.s32.totalorder %s30, 0
      %p204 = por %p202, %p203
      %s206 = sadd.s32 %s205, 1
      %p209 = scmp.eq.s32.totalorder %s24, 1
      %p210 = scmp.ne.s32.totalorder %s205, %s207
      %p211 = scmp.eq.s32.totalorder %s24, 0
      %p212 = por %p210, %p211
      %p213 = scmp.ne.s32.totalorder %s205, %s207
      %p214 = scmp.eq.s32.totalorder %s29, 1
      %p215 = por %p213, %p214
      %p216 = scmp.ne.s32.totalorder %s207, %s208
      %p217 = scmp.eq.s32.totalorder %s29, 0
      %p218 = por %p216, %p217
      %p219 = scmp.ne.s32.totalorder %s207, %s208
      %p220 = scmp.eq.s32.totalorder %s30, 1
      %p221 = por %p219, %p220
      %p223 = scmp.ne.s32.totalorder %s208, %s222
      %p224 = scmp.eq.s32.totalorder %s30, 0
      %p225 = por %p223, %p224
      %s227 = sadd.s32 %s226, 1
      %p230 = scmp.eq.s32.totalorder %s24, 1
      %p231 = scmp.ne.s32.totalorder %s226, %s228
      %p232 = scmp.eq.s32.totalorder %s24, 0
      %p233 = por %p231, %p232
      %p234 = scmp.ne.s32.totalorder %s226, %s228
      %p235 = scmp.eq.s32.totalorder %s29, 1
      %p236 = por %p234, %p235
      %p237 = scmp.ne.s32.totalorder %s228, %s229
      %p238 = scmp.eq.s32.totalorder %s29, 0
      %p239 = por %p237, %p238
      %p240 = scmp.ne.s32.totalorder %s228, %s229
      %p241 = scmp.eq.s32.totalorder %s30, 1
      %p242 = por %p240, %p241
      %p244 = scmp.ne.s32.totalorder %s229, %s243
      %p245 = scmp.eq.s32.totalorder %s30, 0
      %p246 = por %p244, %p245
      %s248 = sadd.s32 %s247, 1
      %p251 = scmp.eq.s32.totalorder %s24, 1
      %p252 = scmp.ne.s32.totalorder %s247, %s249
      %p253 = scmp.eq.s32.totalorder %s24, 0
      %p254 = por %p252, %p253
      %p255 = scmp.ne.s32.totalorder %s247, %s249
      %p256 = scmp.eq.s32.totalorder %s29, 1
      %p257 = por %p255, %p256
      %p258 = scmp.ne.s32.totalorder %s249, %s250
      %p259 = scmp.eq.s32.totalorder %s29, 0
      %p260 = por %p258, %p259
      %p261 = scmp.ne.s32.totalorder %s249, %s250
      %p262 = scmp.eq.s32.totalorder %s30, 1
      %p263 = por %p261, %p262
      %p265 = scmp.ne.s32.totalorder %s250, %s264
      %p266 = scmp.eq.s32.totalorder %s30, 0
      %p267 = por %p265, %p266
      %s269 = sadd.s32 %s268, 1
      %p272 = scmp.eq.s32.totalorder %s24, 1
      %p273 = scmp.ne.s32.totalorder %s268, %s270
      %p274 = scmp.eq.s32.totalorder %s24, 0
      %p275 = por %p273, %p274
      %p276 = scmp.ne.s32.totalorder %s268, %s270
      %p277 = scmp.eq.s32.totalorder %s29, 1
      %p278 = por %p276, %p277
      %p279 = scmp.ne.s32.totalorder %s270, %s271
      %p280 = scmp.eq.s32.totalorder %s29, 0
      %p281 = por %p279, %p280
      %p282 = scmp.ne.s32.totalorder %s270, %s271
      %p283 = scmp.eq.s32.totalorder %s30, 1
      %p284 = por %p282, %p283
      %p286 = scmp.ne.s32.totalorder %s271, %s285
      %p287 = scmp.eq.s32.totalorder %s30, 0
      %p288 = por %p286, %p287
      %s290 = sadd.s32 %s289, 1
      %p293 = scmp.eq.s32.totalorder %s24, 1
      %p294 = scmp.ne.s32.totalorder %s289, %s291
      %p295 = scmp.eq.s32.totalorder %s24, 0
      %p296 = por %p294, %p295
      %p297 = scmp.ne.s32.totalorder %s289, %s291
      %p298 = scmp.eq.s32.totalorder %s29, 1
      %p299 = por %p297, %p298
      %p300 = scmp.ne.s32.totalorder %s291, %s292
      %p301 = scmp.eq.s32.totalorder %s29, 0
      %p302 = por %p300, %p301
      %p303 = scmp.ne.s32.totalorder %s291, %s292
      %p304 = scmp.eq.s32.totalorder %s30, 1
      %p305 = por %p303, %p304
      %p307 = scmp.ne.s32.totalorder %s292, %s306
      %p308 = scmp.eq.s32.totalorder %s30, 0
      %p309 = por %p307, %p308
      %s311 = sadd.s32 %s310, 1
      %p314 = scmp.eq.s32.totalorder %s24, 1
      %p315 = scmp.ne.s32.totalorder %s310, %s312
      %p316 = scmp.eq.s32.totalorder %s24, 0
      %p317 = por %p315, %p316
      %p318 = scmp.ne.s32.totalorder %s310, %s312
      %p319 = scmp.eq.s32.totalorder %s29, 1
      %p320 = por %p318, %p319
      %p321 = scmp.ne.s32.totalorder %s312, %s313
      %p322 = scmp.eq.s32.totalorder %s29, 0
      %p323 = por %p321, %p322
      %p324 = scmp.ne.s32.totalorder %s312, %s313
      %p325 = scmp.eq.s32.totalorder %s30, 1
      %p326 = por %p324, %p325
      %p328 = scmp.ne.s32.totalorder %s313, %s327
      %p329 = scmp.eq.s32.totalorder %s30, 0
      %p330 = por %p328, %p329
      %s332 = sadd.s32 %s331, 1
      %p335 = scmp.eq.s32.totalorder %s24, 1
      %p336 = scmp.ne.s32.totalorder %s331, %s333
      %p337 = scmp.eq.s32.totalorder %s24, 0
      %p338 = por %p336, %p337
      %p339 = scmp.ne.s32.totalorder %s331, %s333
      %p340 = scmp.eq.s32.totalorder %s29, 1
      %p341 = por %p339, %p340
      %p342 = scmp.ne.s32.totalorder %s333, %s334
      %p343 = scmp.eq.s32.totalorder %s29, 0
      %p344 = por %p342, %p343
      %p345 = scmp.ne.s32.totalorder %s333, %s334
      %p346 = scmp.eq.s32.totalorder %s30, 1
      %p347 = por %p345, %p346
      %p349 = scmp.ne.s32.totalorder %s334, %s348
      %p350 = scmp.eq.s32.totalorder %s30, 0
      %p351 = por %p349, %p350
      %s352 = ssub.s32 %s24, %s31
      %p353 = scmp.eq.s32.totalorder %s352, 0
      %s355 = sadd.s32 %s354, 1
      %s356 = scalar_select %p353, %s354, %s355
      %p359 = pneg %p353
      %p360 = scmp.eq.s32.totalorder %s24, 1
      %p361 = por %p359, %p360
      %p362 = scmp.ne.s32.totalorder %s354, %s357
      %p363 = scmp.eq.s32.totalorder %s24, 0
      %p364 = por %p362, %p363
      %p365 = scmp.ne.s32.totalorder %s354, %s357
      %p366 = scmp.eq.s32.totalorder %s29, 1
      %p367 = por %p365, %p366
      %p368 = scmp.ne.s32.totalorder %s357, %s358
      %p369 = scmp.eq.s32.totalorder %s29, 0
      %p370 = por %p368, %p369
      %p371 = scmp.ne.s32.totalorder %s357, %s358
      %p372 = scmp.eq.s32.totalorder %s30, 1
      %p373 = por %p371, %p372
      %p375 = scmp.ne.s32.totalorder %s358, %s374
      %p376 = scmp.eq.s32.totalorder %s30, 0
      %p377 = por %p375, %p376
      %p378 = scmp.le.s32.totalorder 1, %s24
      %p379 = scmp.lt.s32.totalorder %s24, 3
      %p380 = pnand %p378, %p379
      %p381 = pneg %p380
      // Predicated region
      $region9: #{tpu_custom_call.1} parent=5 // pred_check
        _
      $region10: #{tpu_custom_call.1} parent=5 // pred_check_branch
        %383 = sbr.rel (%p380) target = $region12
      $region11: #{tpu_custom_call.1} parent=5 // pred_region
        %s384 = ssub.s32 %s24, 1
        // Predicated region
        $region13: #{tpu_custom_call.1} parent=11 // pred_check
          %p385 = pneg %p71
        $region14: #{tpu_custom_call.1} parent=11 // pred_check_branch
          %387 = sbr.rel (%p385) target = $region16
        $region15: #{tpu_custom_call.1} parent=11 // pred_region
          _
        $region16: #{tpu_custom_call.1} parent=11 // pred_fallthru
          _
        // Predicated region
        $region17: #{tpu_custom_call.1} parent=11 // pred_check
          %p388 = pneg %p92
        $region18: #{tpu_custom_call.1} parent=11 // pred_check_branch
          %390 = sbr.rel (%p388) target = $region20
        $region19: #{tpu_custom_call.1} parent=11 // pred_region
          _
        $region20: #{tpu_custom_call.1} parent=11 // pred_fallthru
          _
        // Predicated region
        $region21: #{tpu_custom_call.1} parent=11 // pred_check
          %p391 = pneg %p113
        $region22: #{tpu_custom_call.1} parent=11 // pred_check_branch
          %393 = sbr.rel (%p391) target = $region24
        $region23: #{tpu_custom_call.1} parent=11 // pred_region
          _
        $region24: #{tpu_custom_call.1} parent=11 // pred_fallthru
          _
        // Predicated region
        $region25: #{tpu_custom_call.1} parent=11 // pred_check
          %p394 = pneg %p134
        $region26: #{tpu_custom_call.1} parent=11 // pred_check_branch
          %396 = sbr.rel (%p394) target = $region28
        $region27: #{tpu_custom_call.1} parent=11 // pred_region
          _
        $region28: #{tpu_custom_call.1} parent=11 // pred_fallthru
          _
        // Predicated region
        $region29: #{tpu_custom_call.1} parent=11 // pred_check
          %p397 = pneg %p155
        $region30: #{tpu_custom_call.1} parent=11 // pred_check_branch
          %399 = sbr.rel (%p397) target = $region32
        $region31: #{tpu_custom_call.1} parent=11 // pred_region
          _
        $region32: #{tpu_custom_call.1} parent=11 // pred_fallthru
          _
        // Predicated region
        $region33: #{tpu_custom_call.1} parent=11 // pred_check
          %p400 = pneg %p176
        $region34: #{tpu_custom_call.1} parent=11 // pred_check_branch
          %402 = sbr.rel (%p400) target = $region36
        $region35: #{tpu_custom_call.1} parent=11 // pred_region
          _
        $region36: #{tpu_custom_call.1} parent=11 // pred_fallthru
          _
        // Predicated region
        $region37: #{tpu_custom_call.1} parent=11 // pred_check
          %p403 = pneg %p197
        $region38: #{tpu_custom_call.1} parent=11 // pred_check_branch
          %405 = sbr.rel (%p403) target = $region40
        $region39: #{tpu_custom_call.1} parent=11 // pred_region
          _
        $region40: #{tpu_custom_call.1} parent=11 // pred_fallthru
          _
        // Predicated region
        $region41: #{tpu_custom_call.1} parent=11 // pred_check
          %p406 = pneg %p218
        $region42: #{tpu_custom_call.1} parent=11 // pred_check_branch
          %408 = sbr.rel (%p406) target = $region44
        $region43: #{tpu_custom_call.1} parent=11 // pred_region
          _
        $region44: #{tpu_custom_call.1} parent=11 // pred_fallthru
          _
        // Predicated region
        $region45: #{tpu_custom_call.1} parent=11 // pred_check
          %p409 = pneg %p239
        $region46: #{tpu_custom_call.1} parent=11 // pred_check_branch
          %411 = sbr.rel (%p409) target = $region48
        $region47: #{tpu_custom_call.1} parent=11 // pred_region
          _
        $region48: #{tpu_custom_call.1} parent=11 // pred_fallthru
          _
        // Predicated region
        $region49: #{tpu_custom_call.1} parent=11 // pred_check
          %p412 = pneg %p260
        $region50: #{tpu_custom_call.1} parent=11 // pred_check_branch
          %414 = sbr.rel (%p412) target = $region52
        $region51: #{tpu_custom_call.1} parent=11 // pred_region
          _
        $region52: #{tpu_custom_call.1} parent=11 // pred_fallthru
          _
        // Predicated region
        $region53: #{tpu_custom_call.1} parent=11 // pred_check
          %p415 = pneg %p281
        $region54: #{tpu_custom_call.1} parent=11 // pred_check_branch
          %417 = sbr.rel (%p415) target = $region56
        $region55: #{tpu_custom_call.1} parent=11 // pred_region
          _
        $region56: #{tpu_custom_call.1} parent=11 // pred_fallthru
          _
        // Predicated region
        $region57: #{tpu_custom_call.1} parent=11 // pred_check
          %p418 = pneg %p302
        $region58: #{tpu_custom_call.1} parent=11 // pred_check_branch
          %420 = sbr.rel (%p418) target = $region60
        $region59: #{tpu_custom_call.1} parent=11 // pred_region
          _
        $region60: #{tpu_custom_call.1} parent=11 // pred_fallthru
          _
        // Predicated region
        $region61: #{tpu_custom_call.1} parent=11 // pred_check
          %p421 = pneg %p323
        $region62: #{tpu_custom_call.1} parent=11 // pred_check_branch
          %423 = sbr.rel (%p421) target = $region64
        $region63: #{tpu_custom_call.1} parent=11 // pred_region
          _
        $region64: #{tpu_custom_call.1} parent=11 // pred_fallthru
          _
        // Predicated region
        $region65: #{tpu_custom_call.1} parent=11 // pred_check
          %p424 = pneg %p344
        $region66: #{tpu_custom_call.1} parent=11 // pred_check_branch
          %426 = sbr.rel (%p424) target = $region68
        $region67: #{tpu_custom_call.1} parent=11 // pred_region
          _
        $region68: #{tpu_custom_call.1} parent=11 // pred_fallthru
          _
      $region12: #{tpu_custom_call.1} parent=5 // pred_fallthru
        _
      %p427 = scmp.lt.s32.totalorder %s24, 2
      // Predicated region
      $region69: #{tpu_custom_call.1} parent=5 // pred_check
        %p428 = pneg %p427
      $region70: #{tpu_custom_call.1} parent=5 // pred_check_branch
        %430 = sbr.rel (%p428) target = $region72
      $region71: #{tpu_custom_call.1} parent=5 // pred_region
        // Predicated region
        $region73: #{tpu_custom_call.1} parent=71 // pred_check
          %p431 = pneg %p44
        $region74: #{tpu_custom_call.1} parent=71 // pred_check_branch
          %433 = sbr.rel (%p431) target = $region76
        $region75: #{tpu_custom_call.1} parent=71 // pred_region
          %p434 = scmp.lt.s32.totalorder %s24, 1
          %s435 = scalar_select %p434, %s24, 1
          %s436 = smul.addr %s435, 8
          %s437 = scalar_lea.vmem %s0, %s436
        $region76: #{tpu_custom_call.1} parent=71 // pred_fallthru
          _
      $region72: #{tpu_custom_call.1} parent=5 // pred_fallthru
        _
      %p438 = scmp.le.s32.totalorder 1, %s24
      %p439 = scmp.lt.s32.totalorder %s24, 3
      %p440 = pnand %p438, %p439
      %p441 = pneg %p440
      // Predicated region
      $region77: #{tpu_custom_call.1} parent=5 // pred_check
        _
      $region78: #{tpu_custom_call.1} parent=5 // pred_check_branch
        %443 = sbr.rel (%p440) target = $region80
      $region79: #{tpu_custom_call.1} parent=5 // pred_region
        %s444 = ssub.s32 %s24, 1
        %p445 = scmp.lt.s32.totalorder %s29, 1
        %s446 = scalar_select %p445, %s29, 1
        %s447 = smul.addr %s446, 8
        %s448 = scalar_lea.vmem %s0, %s447
        %p449 = pneg %p50
        %p450 = pneg %p47
        %p451 = pneg %p71
        %p452 = pneg %p68
        %p453 = pneg %p92
        %p454 = pneg %p89
        %p455 = pneg %p113
        %p456 = pneg %p110
        %p457 = pneg %p134
        %p458 = pneg %p131
        %p459 = pneg %p155
        %p460 = pneg %p152
        %p461 = pneg %p176
        %p462 = pneg %p173
        %p463 = pneg %p197
        %p464 = pneg %p194
        %p465 = pneg %p218
        %p466 = pneg %p215
        %p467 = pneg %p239
        %p468 = pneg %p236
        %p469 = pneg %p260
        %p470 = pneg %p257
        %p471 = pneg %p281
        %p472 = pneg %p278
        %p473 = pneg %p302
        %p474 = pneg %p299
        %p475 = pneg %p323
        %p476 = pneg %p320
        %p477 = pneg %p344
        %p478 = pneg %p341
        %p479 = pneg %p370
        %p480 = pneg %p367
        %s481 = sand.u32 %s357, 1
        %s482 = scalar_lea.sflag [#allocation3], %s481
        %s483 = sand.u32 %s357, 1
        %s484 = smul.addr %s483, 8
        %s485 = scalar_lea.vmem [#allocation2], %s484
        %p486 = scmp.lt.s32.totalorder %s29, 1
        %s487 = scalar_select %p486, %s29, 1
        %s488 = smul.addr %s487, 8
        %s489 = scalar_lea.vmem %s0, %s488
        %v491 = vld [vmem:[%s489] sm:$0xff]
        %v492 = vlaneseq
        %v493 = vshrl.u32 %v492, 7
        %v494 = vlaneseq
        %v495 = vand.u32 %v494, 127
        %vm496 = vcmp.le.s32.totalorder %v495, %v493
        %v497 = vpack.c.bf16 %v491, %v491
        %v498 = vld [vmem:[%s1] sm:$0xff]
        %v499 = vld [vmem:[%s1 + $0x8] sm:$0xff]
        %v500 = vld [vmem:[%s1 + $0x10] sm:$0xff]
        %v501 = vld [vmem:[%s1 + $0x18] sm:$0xff]
        %v502 = vld [vmem:[%s1 + $0x20] sm:$0xff]
        %v503 = vld [vmem:[%s1 + $0x28] sm:$0xff]
        %v504 = vld [vmem:[%s1 + $0x30] sm:$0xff]
        %v505 = vld [vmem:[%s1 + $0x38] sm:$0xff]
        %v506 = vld [vmem:[%s2] sm:$0x3]
        %v508 = vlaneseq
        %v509 = vshrl.u32 %v508, 7
        %v510 = vsub.s32 0, %v509
        %v511 = vrot.slane %v506, %v510
        %v512 = vlaneseq
        %v513 = vshrl.u32 %v512, 7
        %v514 = vsub.s32 1, %v513
        %v515 = vrot.slane %v506, %v514
        %v526 = vunpack.c.l.b16 %v498
        %v527 = vunpack.c.h.b16 %v498
        %v528 = vunpack.c.l.b16 %v499
        %v529 = vunpack.c.h.b16 %v499
        %v530 = vunpack.c.l.b16 %v500
        %v531 = vunpack.c.h.b16 %v500
        %v532 = vunpack.c.l.b16 %v501
        %v533 = vunpack.c.h.b16 %v501
        %v534 = vunpack.c.l.b16 %v502
        %v535 = vunpack.c.h.b16 %v502
        %v536 = vunpack.c.l.b16 %v503
        %v537 = vunpack.c.h.b16 %v503
        %v538 = vunpack.c.l.b16 %v504
        %v539 = vunpack.c.h.b16 %v504
        %v540 = vunpack.c.l.b16 %v505
        %v541 = vunpack.c.h.b16 %v505
        %v542 = vpack.c.b16 %v528, %v526
        %v543 = vpack.c.b16 %v529, %v527
        %v544 = vpack.c.b16 %v532, %v530
        %v545 = vpack.c.b16 %v533, %v531
        %v546 = vpack.c.b16 %v536, %v534
        %v547 = vpack.c.b16 %v537, %v535
        %v548 = vpack.c.b16 %v540, %v538
        %v549 = vpack.c.b16 %v541, %v539
        %vm558 = vcmask 523264
        %v560 = vsel %vm558, %v497, 0
        %562 = vmatprep.subr.bf16.mxu0 0
        %563 = vmatpush1.bf16.msra.mxu0 0
        %564 = vmatprep.subr.bf16.mxu0 0
        %565 = vmatpush1.bf16.msra.mxu0 0
        %566 = vmatprep.subr.bf16.mxu0 0
        %567 = vmatpush1.bf16.msra.mxu0 0
        %568 = vmatprep.subr.bf16.mxu0 0
        %569 = vmatpush1.bf16.msra.mxu0 0
        %570 = vmatprep.subr.bf16.mxu0 %v549
        %571 = vmatpush1.bf16.msra.mxu0 %v548
        %572 = vmatprep.subr.bf16.mxu0 %v547
        %573 = vmatpush1.bf16.msra.mxu0 %v546
        %574 = vmatprep.subr.bf16.mxu0 %v545
        %575 = vmatpush1.bf16.msra.mxu0 %v544
        %576 = vmatprep.subr.bf16.mxu0 %v543
        %577 = vmatpush1.bf16.msra.mxu0 %v542
        %578 = vmatprep.subr.bf16.mxu0 0
        %579 = vmatpush2.bf16.msra.mxu0 0
        %580 = vmatprep.subr.bf16.mxu0 0
        %581 = vmatpush2.bf16.msra.mxu0 0
        %582 = vmatprep.subr.bf16.mxu0 0
        %583 = vmatpush2.bf16.msra.mxu0 0
        %584 = vmatprep.subr.bf16.mxu0 0
        %585 = vmatpush2.bf16.msra.mxu0 0
        %586 = vmatprep.subr.bf16.mxu0 0
        %587 = vmatpush2.bf16.msra.mxu0 0
        %588 = vmatprep.subr.bf16.mxu0 0
        %589 = vmatpush2.bf16.msra.mxu0 0
        %590 = vmatprep.subr.bf16.mxu0 0
        %591 = vmatpush2.bf16.msra.mxu0 0
        %592 = vmatprep.subr.bf16.mxu0 0
        %593 = vmatpush2.bf16.msra.mxu0 0
        %594 = vmatprep.mubr.bf16.mxu0 0
        %595 = vmatmul.mubr.bf16.gmra.mxu0 %v560
        %v596 = vpop.f32.mrf.mxu0
        %v597 = vadd.f32 %v511, %v596
        %v598 = vpop.f32.mrf.mxu0
        %v599 = vadd.f32 %v515, %v598
        %v600 = vpop.f32.mrf.mxu0
        %v601 = vpop.f32.mrf.mxu0
        %602 = vdwg.mxu0
        %v603 = vld [vmem:[%s3] sm:$0xf]
        %v604 = vld [vmem:[%s3 + $0x4] sm:$0xf]
        %v605 = vld [vmem:[%s3 + $0x8] sm:$0xf]
        %v606 = vld [vmem:[%s3 + $0xc] sm:$0xf]
        %v607 = vld [vmem:[%s3 + $0x10] sm:$0xf]
        %v608 = vld [vmem:[%s3 + $0x14] sm:$0xf]
        %v609 = vld [vmem:[%s3 + $0x18] sm:$0xf]
        %v610 = vld [vmem:[%s3 + $0x1c] sm:$0xf]
        %v611 = vpack.c.bf16 %v597, %v597
        %v612 = vpack.c.bf16 %v599, %v599
        %614 = vrot.lane.b32.xlu0 %v611, 64
        %v615 = vpop.permute.xlu0 %614
        %vm616 = vcmask 130048
        %v618 = vsel %vm616, %v611, 0
        %v621 = vsel %vm616, %v615, 0
        %623 = vmatprep.subr.bf16.mxu0 0
        %624 = vmatpush1.bf16.xpose.msra.mxu0 0
        %625 = vmatprep.subr.bf16.mxu0 0
        %626 = vmatpush1.bf16.xpose.msra.mxu0 0
        %627 = vmatprep.subr.bf16.mxu0 0
        %628 = vmatpush1.bf16.xpose.msra.mxu0 0
        %629 = vmatprep.subr.bf16.mxu0 0
        %630 = vmatpush1.bf16.xpose.msra.mxu0 0
        %631 = vmatprep.subr.bf16.mxu0 0
        %632 = vmatpush1.bf16.xpose.msra.mxu0 0
        %633 = vmatprep.subr.bf16.mxu0 0
        %634 = vmatpush1.bf16.xpose.msra.mxu0 0
        %635 = vmatprep.subr.bf16.mxu0 0
        %636 = vmatpush1.bf16.xpose.msra.mxu0 0
        %637 = vmatprep.subr.bf16.mxu0 0
        %638 = vmatpush1.bf16.xpose.msra.mxu0 %v621
        %639 = vmatprep.subr.bf16.mxu0 0
        %640 = vmatpush2.bf16.xpose.msra.mxu0 0
        %641 = vmatprep.subr.bf16.mxu0 0
        %642 = vmatpush2.bf16.xpose.msra.mxu0 0
        %643 = vmatprep.subr.bf16.mxu0 0
        %644 = vmatpush2.bf16.xpose.msra.mxu0 0
        %645 = vmatprep.subr.bf16.mxu0 0
        %646 = vmatpush2.bf16.xpose.msra.mxu0 0
        %647 = vmatprep.subr.bf16.mxu0 0
        %648 = vmatpush2.bf16.xpose.msra.mxu0 0
        %649 = vmatprep.subr.bf16.mxu0 0
        %650 = vmatpush2.bf16.xpose.msra.mxu0 0
        %651 = vmatprep.subr.bf16.mxu0 0
        %652 = vmatpush2.bf16.xpose.msra.mxu0 0
        %653 = vmatprep.subr.bf16.mxu0 0
        %654 = vmatpush2.bf16.xpose.msra.mxu0 0
        %655 = vmatprep.mubr.bf16.mxu0 0
        %656 = vmatmul.mubr.bf16.gmra.mxu0 %v618
        %v657 = vpop.f32.mrf.mxu0
        %v658 = vadd.f32 0.0, %v657
        %v659 = vpop.f32.mrf.mxu0
        %v660 = vpop.f32.mrf.mxu0
        %v661 = vpop.f32.mrf.mxu0
        %662 = vdwg.mxu0
        %v663 = vsel %vm496, %v658, -1e+30
        %vm664 = vcmask 64512
        %v665 = vsel %vm664, %v663, -inf
        %666 = vmax.xlane.f32.xlu0 %v665
        %v667 = vpop.xlane.xlu0 %666
        %v668 = vsub.f32 %v663, %v667
        %v669 = vmul.f32 %v668, 1.442695
        %v670 = vpow.pop %v669
        %v671 = vsel %vm664, %v670, 0.0
        %672 = vadd.xlane.f32.xlu0 %v671
        %v673 = vpop.xlane.xlu0 %672
        %v674 = vrcp.pop %v673
        %v675 = vmul.f32 %v670, %v674
        %v676 = vpack.c.bf16 %v675, %v675
        %v678 = vsel %vm664, %v676, 0
        %vm680 = vcmask 1043456
        %v682 = vsel %vm680, %v612, 0
        %684 = vmatprep.subr.bf16.mxu0 0
        %685 = vmatpush1.bf16.msra.mxu0 0
        %686 = vmatprep.subr.bf16.mxu0 0
        %687 = vmatpush1.bf16.msra.mxu0 0
        %688 = vmatprep.subr.bf16.mxu0 0
        %689 = vmatpush1.bf16.msra.mxu0 0
        %690 = vmatprep.subr.bf16.mxu0 0
        %691 = vmatpush1.bf16.msra.mxu0 0
        %692 = vmatprep.subr.bf16.mxu0 0
        %693 = vmatpush1.bf16.msra.mxu0 0
        %694 = vmatprep.subr.bf16.mxu0 0
        %695 = vmatpush1.bf16.msra.mxu0 0
        %696 = vmatprep.subr.bf16.mxu0 0
        %697 = vmatpush1.bf16.msra.mxu0 0
        %698 = vmatprep.subr.bf16.mxu0 0
        %699 = vmatpush1.bf16.msra.mxu0 %v682
        %700 = vmatprep.subr.bf16.mxu0 0
        %701 = vmatpush2.bf16.msra.mxu0 0
        %702 = vmatprep.subr.bf16.mxu0 0
        %703 = vmatpush2.bf16.msra.mxu0 0
        %704 = vmatprep.subr.bf16.mxu0 0
        %705 = vmatpush2.bf16.msra.mxu0 0
        %706 = vmatprep.subr.bf16.mxu0 0
        %707 = vmatpush2.bf16.msra.mxu0 0
        %708 = vmatprep.subr.bf16.mxu0 0
        %709 = vmatpush2.bf16.msra.mxu0 0
        %710 = vmatprep.subr.bf16.mxu0 0
        %711 = vmatpush2.bf16.msra.mxu0 0
        %712 = vmatprep.subr.bf16.mxu0 0
        %713 = vmatpush2.bf16.msra.mxu0 0
        %714 = vmatprep.subr.bf16.mxu0 0
        %715 = vmatpush2.bf16.msra.mxu0 0
        %716 = vmatprep.mubr.bf16.mxu0 0
        %717 = vmatmul.mubr.bf16.gmra.mxu0 %v678
        %v718 = vpop.f32.mrf.mxu0
        %v719 = vadd.f32 0.0, %v718
        %v720 = vpop.f32.mrf.mxu0
        %v721 = vpop.f32.mrf.mxu0
        %v722 = vpop.f32.mrf.mxu0
        %723 = vdwg.mxu0
        %v724 = vpack.c.bf16 %v719, %v719
        %725 = vrot.lane.b32.xlu0 %v611, 112
        %v726 = vpop.permute.xlu0 %725
        %727 = vrot.lane.b32.xlu0 %v611, 48
        %v728 = vpop.permute.xlu0 %727
        %v730 = vsel %vm616, %v726, 0
        %v733 = vsel %vm616, %v728, 0
        %735 = vmatprep.subr.bf16.mxu0 0
        %736 = vmatpush1.bf16.xpose.msra.mxu0 0
        %737 = vmatprep.subr.bf16.mxu0 0
        %738 = vmatpush1.bf16.xpose.msra.mxu0 0
        %739 = vmatprep.subr.bf16.mxu0 0
        %740 = vmatpush1.bf16.xpose.msra.mxu0 0
        %741 = vmatprep.subr.bf16.mxu0 0
        %742 = vmatpush1.bf16.xpose.msra.mxu0 0
        %743 = vmatprep.subr.bf16.mxu0 0
        %744 = vmatpush1.bf16.xpose.msra.mxu0 0
        %745 = vmatprep.subr.bf16.mxu0 0
        %746 = vmatpush1.bf16.xpose.msra.mxu0 0
        %747 = vmatprep.subr.bf16.mxu0 0
        %748 = vmatpush1.bf16.xpose.msra.mxu0 0
        %749 = vmatprep.subr.bf16.mxu0 0
        %750 = vmatpush1.bf16.xpose.msra.mxu0 %v733
        %751 = vmatprep.subr.bf16.mxu0 0
        %752 = vmatpush2.bf16.xpose.msra.mxu0 0
        %753 = vmatprep.subr.bf16.mxu0 0
        %754 = vmatpush2.bf16.xpose.msra.mxu0 0
        %755 = vmatprep.subr.bf16.mxu0 0
        %756 = vmatpush2.bf16.xpose.msra.mxu0 0
        %757 = vmatprep.subr.bf16.mxu0 0
        %758 = vmatpush2.bf16.xpose.msra.mxu0 0
        %759 = vmatprep.subr.bf16.mxu0 0
        %760 = vmatpush2.bf16.xpose.msra.mxu0 0
        %761 = vmatprep.subr.bf16.mxu0 0
        %762 = vmatpush2.bf16.xpose.msra.mxu0 0
        %763 = vmatprep.subr.bf16.mxu0 0
        %764 = vmatpush2.bf16.xpose.msra.mxu0 0
        %765 = vmatprep.subr.bf16.mxu0 0
        %766 = vmatpush2.bf16.xpose.msra.mxu0 0
        %767 = vmatprep.mubr.bf16.mxu0 0
        %768 = vmatmul.mubr.bf16.gmra.mxu0 %v730
        %v769 = vpop.f32.mrf.mxu0
        %v770 = vadd.f32 0.0, %v769
        %v771 = vpop.f32.mrf.mxu0
        %v772 = vpop.f32.mrf.mxu0
        %v773 = vpop.f32.mrf.mxu0
        %774 = vdwg.mxu0
        %v775 = vsel %vm496, %v770, -1e+30
        %v776 = vsel %vm664, %v775, -inf
        %777 = vmax.xlane.f32.xlu0 %v776
        %v778 = vpop.xlane.xlu0 %777
        %v779 = vsub.f32 %v775, %v778
        %v780 = vmul.f32 %v779, 1.442695
        %v781 = vpow.pop %v780
        %v782 = vsel %vm664, %v781, 0.0
        %783 = vadd.xlane.f32.xlu0 %v782
        %v784 = vpop.xlane.xlu0 %783
        %v785 = vrcp.pop %v784
        %v786 = vmul.f32 %v781, %v785
        %v787 = vpack.c.bf16 %v786, %v786
        %789 = vrot.lane.b32.xlu0 %v612, 112
        %v790 = vpop.permute.xlu0 %789
        %v792 = vsel %vm664, %v787, 0
        %v795 = vsel %vm680, %v790, 0
        %797 = vmatprep.subr.bf16.mxu0 0
        %798 = vmatpush1.bf16.msra.mxu0 0
        %799 = vmatprep.subr.bf16.mxu0 0
        %800 = vmatpush1.bf16.msra.mxu0 0
        %801 = vmatprep.subr.bf16.mxu0 0
        %802 = vmatpush1.bf16.msra.mxu0 0
        %803 = vmatprep.subr.bf16.mxu0 0
        %804 = vmatpush1.bf16.msra.mxu0 0
        %805 = vmatprep.subr.bf16.mxu0 0
        %806 = vmatpush1.bf16.msra.mxu0 0
        %807 = vmatprep.subr.bf16.mxu0 0
        %808 = vmatpush1.bf16.msra.mxu0 0
        %809 = vmatprep.subr.bf16.mxu0 0
        %810 = vmatpush1.bf16.msra.mxu0 0
        %811 = vmatprep.subr.bf16.mxu0 0
        %812 = vmatpush1.bf16.msra.mxu0 %v795
        %813 = vmatprep.subr.bf16.mxu0 0
        %814 = vmatpush2.bf16.msra.mxu0 0
        %815 = vmatprep.subr.bf16.mxu0 0
        %816 = vmatpush2.bf16.msra.mxu0 0
        %817 = vmatprep.subr.bf16.mxu0 0
        %818 = vmatpush2.bf16.msra.mxu0 0
        %819 = vmatprep.subr.bf16.mxu0 0
        %820 = vmatpush2.bf16.msra.mxu0 0
        %821 = vmatprep.subr.bf16.mxu0 0
        %822 = vmatpush2.bf16.msra.mxu0 0
        %823 = vmatprep.subr.bf16.mxu0 0
        %824 = vmatpush2.bf16.msra.mxu0 0
        %825 = vmatprep.subr.bf16.mxu0 0
        %826 = vmatpush2.bf16.msra.mxu0 0
        %827 = vmatprep.subr.bf16.mxu0 0
        %828 = vmatpush2.bf16.msra.mxu0 0
        %829 = vmatprep.mubr.bf16.mxu0 0
        %830 = vmatmul.mubr.bf16.gmra.mxu0 %v792
        %v831 = vpop.f32.mrf.mxu0
        %v832 = vadd.f32 0.0, %v831
        %v833 = vpop.f32.mrf.mxu0
        %v834 = vpop.f32.mrf.mxu0
        %v835 = vpop.f32.mrf.mxu0
        %836 = vdwg.mxu0
        %v837 = vpack.c.bf16 %v832, %v832
        %v840 = vunpack.c.l.b16 %v605
        %v841 = vunpack.c.l.b16 %v606
        %v842 = vpack.c.b16 %v841, %v840
        %v845 = vsel %vm616, %v837, 0
        %847 = vmatprep.subr.bf16.mxu0 0
        %848 = vmatpush1.bf16.msra.mxu0 0
        %849 = vmatprep.subr.bf16.mxu0 0
        %850 = vmatpush1.bf16.msra.mxu0 0
        %851 = vmatprep.subr.bf16.mxu0 0
        %852 = vmatpush1.bf16.msra.mxu0 0
        %853 = vmatprep.subr.bf16.mxu0 0
        %854 = vmatpush1.bf16.msra.mxu0 0
        %855 = vmatprep.subr.bf16.mxu0 0
        %856 = vmatpush1.bf16.msra.mxu0 0
        %857 = vmatprep.subr.bf16.mxu0 0
        %858 = vmatpush1.bf16.msra.mxu0 0
        %859 = vmatprep.subr.bf16.mxu0 0
        %860 = vmatpush1.bf16.msra.mxu0 0
        %861 = vmatprep.subr.bf16.mxu0 0
        %862 = vmatpush1.bf16.msra.mxu0 %v842
        %863 = vmatprep.subr.bf16.mxu0 0
        %864 = vmatpush2.bf16.msra.mxu0 0
        %865 = vmatprep.subr.bf16.mxu0 0
        %866 = vmatpush2.bf16.msra.mxu0 0
        %867 = vmatprep.subr.bf16.mxu0 0
        %868 = vmatpush2.bf16.msra.mxu0 0
        %869 = vmatprep.subr.bf16.mxu0 0
        %870 = vmatpush2.bf16.msra.mxu0 0
        %871 = vmatprep.subr.bf16.mxu0 0
        %872 = vmatpush2.bf16.msra.mxu0 0
        %873 = vmatprep.subr.bf16.mxu0 0
        %874 = vmatpush2.bf16.msra.mxu0 0
        %875 = vmatprep.subr.bf16.mxu0 0
        %876 = vmatpush2.bf16.msra.mxu0 0
        %877 = vmatprep.subr.bf16.mxu0 0
        %878 = vmatpush2.bf16.msra.mxu0 0
        %879 = vmatprep.mubr.bf16.mxu0 0
        %880 = vmatmul.mubr.bf16.gmra.mxu0 %v845
        %v881 = vpop.f32.mrf.mxu0
        %v882 = vadd.f32 0.0, %v881
        %v883 = vpop.f32.mrf.mxu0
        %v884 = vpop.f32.mrf.mxu0
        %v885 = vpop.f32.mrf.mxu0
        %886 = vdwg.mxu0
        %v889 = vunpack.c.l.b16 %v603
        %v890 = vunpack.c.l.b16 %v604
        %v891 = vpack.c.b16 %v890, %v889
        %v894 = vsel %vm616, %v724, 0
        %896 = vmatprep.subr.bf16.mxu0 0
        %897 = vmatpush1.bf16.msra.mxu0 0
        %898 = vmatprep.subr.bf16.mxu0 0
        %899 = vmatpush1.bf16.msra.mxu0 0
        %900 = vmatprep.subr.bf16.mxu0 0
        %901 = vmatpush1.bf16.msra.mxu0 0
        %902 = vmatprep.subr.bf16.mxu0 0
        %903 = vmatpush1.bf16.msra.mxu0 0
        %904 = vmatprep.subr.bf16.mxu0 0
        %905 = vmatpush1.bf16.msra.mxu0 0
        %906 = vmatprep.subr.bf16.mxu0 0
        %907 = vmatpush1.bf16.msra.mxu0 0
        %908 = vmatprep.subr.bf16.mxu0 0
        %909 = vmatpush1.bf16.msra.mxu0 0
        %910 = vmatprep.subr.bf16.mxu0 0
        %911 = vmatpush1.bf16.msra.mxu0 %v891
        %912 = vmatprep.subr.bf16.mxu0 0
        %913 = vmatpush2.bf16.msra.mxu0 0
        %914 = vmatprep.subr.bf16.mxu0 0
        %915 = vmatpush2.bf16.msra.mxu0 0
        %916 = vmatprep.subr.bf16.mxu0 0
        %917 = vmatpush2.bf16.msra.mxu0 0
        %918 = vmatprep.subr.bf16.mxu0 0
        %919 = vmatpush2.bf16.msra.mxu0 0
        %920 = vmatprep.subr.bf16.mxu0 0
        %921 = vmatpush2.bf16.msra.mxu0 0
        %922 = vmatprep.subr.bf16.mxu0 0
        %923 = vmatpush2.bf16.msra.mxu0 0
        %924 = vmatprep.subr.bf16.mxu0 0
        %925 = vmatpush2.bf16.msra.mxu0 0
        %926 = vmatprep.subr.bf16.mxu0 0
        %927 = vmatpush2.bf16.msra.mxu0 0
        %928 = vmatprep.mubr.bf16.mxu0 0
        %929 = vmatmul.mubr.bf16.gmra.mxu0 %v894
        %v930 = vpop.f32.mrf.mxu0
        %v931 = vadd.f32 %v882, %v930
        %v932 = vpop.f32.mrf.mxu0
        %v933 = vpop.f32.mrf.mxu0
        %v934 = vpop.f32.mrf.mxu0
        %935 = vdwg.mxu0
        %936 = vrot.lane.b32.xlu0 %v611, 96
        %v937 = vpop.permute.xlu0 %936
        %938 = vrot.lane.b32.xlu0 %v611, 32
        %v939 = vpop.permute.xlu0 %938
        %v941 = vsel %vm616, %v937, 0
        %v944 = vsel %vm616, %v939, 0
        %946 = vmatprep.subr.bf16.mxu0 0
        %947 = vmatpush1.bf16.xpose.msra.mxu0 0
        %948 = vmatprep.subr.bf16.mxu0 0
        %949 = vmatpush1.bf16.xpose.msra.mxu0 0
        %950 = vmatprep.subr.bf16.mxu0 0
        %951 = vmatpush1.bf16.xpose.msra.mxu0 0
        %952 = vmatprep.subr.bf16.mxu0 0
        %953 = vmatpush1.bf16.xpose.msra.mxu0 0
        %954 = vmatprep.subr.bf16.mxu0 0
        %955 = vmatpush1.bf16.xpose.msra.mxu0 0
        %956 = vmatprep.subr.bf16.mxu0 0
        %957 = vmatpush1.bf16.xpose.msra.mxu0 0
        %958 = vmatprep.subr.bf16.mxu0 0
        %959 = vmatpush1.bf16.xpose.msra.mxu0 0
        %960 = vmatprep.subr.bf16.mxu0 0
        %961 = vmatpush1.bf16.xpose.msra.mxu0 %v944
        %962 = vmatprep.subr.bf16.mxu0 0
        %963 = vmatpush2.bf16.xpose.msra.mxu0 0
        %964 = vmatprep.subr.bf16.mxu0 0
        %965 = vmatpush2.bf16.xpose.msra.mxu0 0
        %966 = vmatprep.subr.bf16.mxu0 0
        %967 = vmatpush2.bf16.xpose.msra.mxu0 0
        %968 = vmatprep.subr.bf16.mxu0 0
        %969 = vmatpush2.bf16.xpose.msra.mxu0 0
        %970 = vmatprep.subr.bf16.mxu0 0
        %971 = vmatpush2.bf16.xpose.msra.mxu0 0
        %972 = vmatprep.subr.bf16.mxu0 0
        %973 = vmatpush2.bf16.xpose.msra.mxu0 0
        %974 = vmatprep.subr.bf16.mxu0 0
        %975 = vmatpush2.bf16.xpose.msra.mxu0 0
        %976 = vmatprep.subr.bf16.mxu0 0
        %977 = vmatpush2.bf16.xpose.msra.mxu0 0
        %978 = vmatprep.mubr.bf16.mxu0 0
        %979 = vmatmul.mubr.bf16.gmra.mxu0 %v941
        %v980 = vpop.f32.mrf.mxu0
        %v981 = vadd.f32 0.0, %v980
        %v982 = vpop.f32.mrf.mxu0
        %v983 = vpop.f32.mrf.mxu0
        %v984 = vpop.f32.mrf.mxu0
        %985 = vdwg.mxu0
        %v986 = vsel %vm496, %v981, -1e+30
        %v987 = vsel %vm664, %v986, -inf
        %988 = vmax.xlane.f32.xlu0 %v987
        %v989 = vpop.xlane.xlu0 %988
        %v990 = vsub.f32 %v986, %v989
        %v991 = vmul.f32 %v990, 1.442695
        %v992 = vpow.pop %v991
        %v993 = vsel %vm664, %v992, 0.0
        %994 = vadd.xlane.f32.xlu0 %v993
        %v995 = vpop.xlane.xlu0 %994
        %v996 = vrcp.pop %v995
        %v997 = vmul.f32 %v992, %v996
        %v998 = vpack.c.bf16 %v997, %v997
        %999 = vrot.lane.b32.xlu0 %v612, 96
        %v1000 = vpop.permute.xlu0 %999
        %v1002 = vsel %vm664, %v998, 0
        %v1005 = vsel %vm680, %v1000, 0
        %1007 = vmatprep.subr.bf16.mxu0 0
        %1008 = vmatpush1.bf16.msra.mxu0 0
        %1009 = vmatprep.subr.bf16.mxu0 0
        %1010 = vmatpush1.bf16.msra.mxu0 0
        %1011 = vmatprep.subr.bf16.mxu0 0
        %1012 = vmatpush1.bf16.msra.mxu0 0
        %1013 = vmatprep.subr.bf16.mxu0 0
        %1014 = vmatpush1.bf16.msra.mxu0 0
        %1015 = vmatprep.subr.bf16.mxu0 0
        %1016 = vmatpush1.bf16.msra.mxu0 0
        %1017 = vmatprep.subr.bf16.mxu0 0
        %1018 = vmatpush1.bf16.msra.mxu0 0
        %1019 = vmatprep.subr.bf16.mxu0 0
        %1020 = vmatpush1.bf16.msra.mxu0 0
        %1021 = vmatprep.subr.bf16.mxu0 0
        %1022 = vmatpush1.bf16.msra.mxu0 %v1005
        %1023 = vmatprep.subr.bf16.mxu0 0
        %1024 = vmatpush2.bf16.msra.mxu0 0
        %1025 = vmatprep.subr.bf16.mxu0 0
        %1026 = vmatpush2.bf16.msra.mxu0 0
        %1027 = vmatprep.subr.bf16.mxu0 0
        %1028 = vmatpush2.bf16.msra.mxu0 0
        %1029 = vmatprep.subr.bf16.mxu0 0
        %1030 = vmatpush2.bf16.msra.mxu0 0
        %1031 = vmatprep.subr.bf16.mxu0 0
        %1032 = vmatpush2.bf16.msra.mxu0 0
        %1033 = vmatprep.subr.bf16.mxu0 0
        %1034 = vmatpush2.bf16.msra.mxu0 0
        %1035 = vmatprep.subr.bf16.mxu0 0
        %1036 = vmatpush2.bf16.msra.mxu0 0
        %1037 = vmatprep.subr.bf16.mxu0 0
        %1038 = vmatpush2.bf16.msra.mxu0 0
        %1039 = vmatprep.mubr.bf16.mxu0 0
        %1040 = vmatmul.mubr.bf16.gmra.mxu0 %v1002
        %v1041 = vpop.f32.mrf.mxu0
        %v1042 = vadd.f32 0.0, %v1041
        %v1043 = vpop.f32.mrf.mxu0
        %v1044 = vpop.f32.mrf.mxu0
        %v1045 = vpop.f32.mrf.mxu0
        %1046 = vdwg.mxu0
        %v1047 = vpack.c.bf16 %v1042, %v1042
        %v1050 = vunpack.c.l.b16 %v607
        %v1051 = vunpack.c.l.b16 %v608
        %v1052 = vpack.c.b16 %v1051, %v1050
        %v1055 = vsel %vm616, %v1047, 0
        %1057 = vmatprep.subr.bf16.mxu0 0
        %1058 = vmatpush1.bf16.msra.mxu0 0
        %1059 = vmatprep.subr.bf16.mxu0 0
        %1060 = vmatpush1.bf16.msra.mxu0 0
        %1061 = vmatprep.subr.bf16.mxu0 0
        %1062 = vmatpush1.bf16.msra.mxu0 0
        %1063 = vmatprep.subr.bf16.mxu0 0
        %1064 = vmatpush1.bf16.msra.mxu0 0
        %1065 = vmatprep.subr.bf16.mxu0 0
        %1066 = vmatpush1.bf16.msra.mxu0 0
        %1067 = vmatprep.subr.bf16.mxu0 0
        %1068 = vmatpush1.bf16.msra.mxu0 0
        %1069 = vmatprep.subr.bf16.mxu0 0
        %1070 = vmatpush1.bf16.msra.mxu0 0
        %1071 = vmatprep.subr.bf16.mxu0 0
        %1072 = vmatpush1.bf16.msra.mxu0 %v1052
        %1073 = vmatprep.subr.bf16.mxu0 0
        %1074 = vmatpush2.bf16.msra.mxu0 0
        %1075 = vmatprep.subr.bf16.mxu0 0
        %1076 = vmatpush2.bf16.msra.mxu0 0
        %1077 = vmatprep.subr.bf16.mxu0 0
        %1078 = vmatpush2.bf16.msra.mxu0 0
        %1079 = vmatprep.subr.bf16.mxu0 0
        %1080 = vmatpush2.bf16.msra.mxu0 0
        %1081 = vmatprep.subr.bf16.mxu0 0
        %1082 = vmatpush2.bf16.msra.mxu0 0
        %1083 = vmatprep.subr.bf16.mxu0 0
        %1084 = vmatpush2.bf16.msra.mxu0 0
        %1085 = vmatprep.subr.bf16.mxu0 0
        %1086 = vmatpush2.bf16.msra.mxu0 0
        %1087 = vmatprep.subr.bf16.mxu0 0
        %1088 = vmatpush2.bf16.msra.mxu0 0
        %1089 = vmatprep.mubr.bf16.mxu0 0
        %1090 = vmatmul.mubr.bf16.gmra.mxu0 %v1055
        %v1091 = vpop.f32.mrf.mxu0
        %v1092 = vadd.f32 0.0, %v1091
        %v1093 = vpop.f32.mrf.mxu0
        %v1094 = vpop.f32.mrf.mxu0
        %v1095 = vpop.f32.mrf.mxu0
        %1096 = vdwg.mxu0
        %v1097 = vadd.f32 %v931, %v1092
        %1098 = vrot.lane.b32.xlu0 %v611, 80
        %v1099 = vpop.permute.xlu0 %1098
        %1100 = vrot.lane.b32.xlu0 %v611, 16
        %v1101 = vpop.permute.xlu0 %1100
        %v1103 = vsel %vm616, %v1099, 0
        %v1106 = vsel %vm616, %v1101, 0
        %1108 = vmatprep.subr.bf16.mxu0 0
        %1109 = vmatpush1.bf16.xpose.msra.mxu0 0
        %1110 = vmatprep.subr.bf16.mxu0 0
        %1111 = vmatpush1.bf16.xpose.msra.mxu0 0
        %1112 = vmatprep.subr.bf16.mxu0 0
        %1113 = vmatpush1.bf16.xpose.msra.mxu0 0
        %1114 = vmatprep.subr.bf16.mxu0 0
        %1115 = vmatpush1.bf16.xpose.msra.mxu0 0
        %1116 = vmatprep.subr.bf16.mxu0 0
        %1117 = vmatpush1.bf16.xpose.msra.mxu0 0
        %1118 = vmatprep.subr.bf16.mxu0 0
        %1119 = vmatpush1.bf16.xpose.msra.mxu0 0
        %1120 = vmatprep.subr.bf16.mxu0 0
        %1121 = vmatpush1.bf16.xpose.msra.mxu0 0
        %1122 = vmatprep.subr.bf16.mxu0 0
        %1123 = vmatpush1.bf16.xpose.msra.mxu0 %v1106
        %1124 = vmatprep.subr.bf16.mxu0 0
        %1125 = vmatpush2.bf16.xpose.msra.mxu0 0
        %1126 = vmatprep.subr.bf16.mxu0 0
        %1127 = vmatpush2.bf16.xpose.msra.mxu0 0
        %1128 = vmatprep.subr.bf16.mxu0 0
        %1129 = vmatpush2.bf16.xpose.msra.mxu0 0
        %1130 = vmatprep.subr.bf16.mxu0 0
        %1131 = vmatpush2.bf16.xpose.msra.mxu0 0
        %1132 = vmatprep.subr.bf16.mxu0 0
        %1133 = vmatpush2.bf16.xpose.msra.mxu0 0
        %1134 = vmatprep.subr.bf16.mxu0 0
        %1135 = vmatpush2.bf16.xpose.msra.mxu0 0
        %1136 = vmatprep.subr.bf16.mxu0 0
        %1137 = vmatpush2.bf16.xpose.msra.mxu0 0
        %1138 = vmatprep.subr.bf16.mxu0 0
        %1139 = vmatpush2.bf16.xpose.msra.mxu0 0
        %1140 = vmatprep.mubr.bf16.mxu0 0
        %1141 = vmatmul.mubr.bf16.gmra.mxu0 %v1103
        %v1142 = vpop.f32.mrf.mxu0
        %v1143 = vadd.f32 0.0, %v1142
        %v1144 = vpop.f32.mrf.mxu0
        %v1145 = vpop.f32.mrf.mxu0
        %v1146 = vpop.f32.mrf.mxu0
        %1147 = vdwg.mxu0
        %v1148 = vsel %vm496, %v1143, -1e+30
        %v1149 = vsel %vm664, %v1148, -inf
        %1150 = vmax.xlane.f32.xlu0 %v1149
        %v1151 = vpop.xlane.xlu0 %1150
        %v1152 = vsub.f32 %v1148, %v1151
        %v1153 = vmul.f32 %v1152, 1.442695
        %v1154 = vpow.pop %v1153
        %v1155 = vsel %vm664, %v1154, 0.0
        %1156 = vadd.xlane.f32.xlu0 %v1155
        %v1157 = vpop.xlane.xlu0 %1156
        %v1158 = vrcp.pop %v1157
        %v1159 = vmul.f32 %v1154, %v1158
        %v1160 = vpack.c.bf16 %v1159, %v1159
        %1161 = vrot.lane.b32.xlu0 %v612, 80
        %v1162 = vpop.permute.xlu0 %1161
        %v1164 = vsel %vm664, %v1160, 0
        %v1167 = vsel %vm680, %v1162, 0
        %1169 = vmatprep.subr.bf16.mxu0 0
        %1170 = vmatpush1.bf16.msra.mxu0 0
        %1171 = vmatprep.subr.bf16.mxu0 0
        %1172 = vmatpush1.bf16.msra.mxu0 0
        %1173 = vmatprep.subr.bf16.mxu0 0
        %1174 = vmatpush1.bf16.msra.mxu0 0
        %1175 = vmatprep.subr.bf16.mxu0 0
        %1176 = vmatpush1.bf16.msra.mxu0 0
        %1177 = vmatprep.subr.bf16.mxu0 0
        %1178 = vmatpush1.bf16.msra.mxu0 0
        %1179 = vmatprep.subr.bf16.mxu0 0
        %1180 = vmatpush1.bf16.msra.mxu0 0
        %1181 = vmatprep.subr.bf16.mxu0 0
        %1182 = vmatpush1.bf16.msra.mxu0 0
        %1183 = vmatprep.subr.bf16.mxu0 0
        %1184 = vmatpush1.bf16.msra.mxu0 %v1167
        %1185 = vmatprep.subr.bf16.mxu0 0
        %1186 = vmatpush2.bf16.msra.mxu0 0
        %1187 = vmatprep.subr.bf16.mxu0 0
        %1188 = vmatpush2.bf16.msra.mxu0 0
        %1189 = vmatprep.subr.bf16.mxu0 0
        %1190 = vmatpush2.bf16.msra.mxu0 0
        %1191 = vmatprep.subr.bf16.mxu0 0
        %1192 = vmatpush2.bf16.msra.mxu0 0
        %1193 = vmatprep.subr.bf16.mxu0 0
        %1194 = vmatpush2.bf16.msra.mxu0 0
        %1195 = vmatprep.subr.bf16.mxu0 0
        %1196 = vmatpush2.bf16.msra.mxu0 0
        %1197 = vmatprep.subr.bf16.mxu0 0
        %1198 = vmatpush2.bf16.msra.mxu0 0
        %1199 = vmatprep.subr.bf16.mxu0 0
        %1200 = vmatpush2.bf16.msra.mxu0 0
        %1201 = vmatprep.mubr.bf16.mxu0 0
        %1202 = vmatmul.mubr.bf16.gmra.mxu0 %v1164
        %v1203 = vpop.f32.mrf.mxu0
        %v1204 = vadd.f32 0.0, %v1203
        %v1205 = vpop.f32.mrf.mxu0
        %v1206 = vpop.f32.mrf.mxu0
        %v1207 = vpop.f32.mrf.mxu0
        %1208 = vdwg.mxu0
        %v1209 = vpack.c.bf16 %v1204, %v1204
        %v1212 = vunpack.c.l.b16 %v609
        %v1213 = vunpack.c.l.b16 %v610
        %v1214 = vpack.c.b16 %v1213, %v1212
        %v1217 = vsel %vm616, %v1209, 0
        %1219 = vmatprep.subr.bf16.mxu0 0
        %1220 = vmatpush1.bf16.msra.mxu0 0
        %1221 = vmatprep.subr.bf16.mxu0 0
        %1222 = vmatpush1.bf16.msra.mxu0 0
        %1223 = vmatprep.subr.bf16.mxu0 0
        %1224 = vmatpush1.bf16.msra.mxu0 0
        %1225 = vmatprep.subr.bf16.mxu0 0
        %1226 = vmatpush1.bf16.msra.mxu0 0
        %1227 = vmatprep.subr.bf16.mxu0 0
        %1228 = vmatpush1.bf16.msra.mxu0 0
        %1229 = vmatprep.subr.bf16.mxu0 0
        %1230 = vmatpush1.bf16.msra.mxu0 0
        %1231 = vmatprep.subr.bf16.mxu0 0
        %1232 = vmatpush1.bf16.msra.mxu0 0
        %1233 = vmatprep.subr.bf16.mxu0 0
        %1234 = vmatpush1.bf16.msra.mxu0 %v1214
        %1235 = vmatprep.subr.bf16.mxu0 0
        %1236 = vmatpush2.bf16.msra.mxu0 0
        %1237 = vmatprep.subr.bf16.mxu0 0
        %1238 = vmatpush2.bf16.msra.mxu0 0
        %1239 = vmatprep.subr.bf16.mxu0 0
        %1240 = vmatpush2.bf16.msra.mxu0 0
        %1241 = vmatprep.subr.bf16.mxu0 0
        %1242 = vmatpush2.bf16.msra.mxu0 0
        %1243 = vmatprep.subr.bf16.mxu0 0
        %1244 = vmatpush2.bf16.msra.mxu0 0
        %1245 = vmatprep.subr.bf16.mxu0 0
        %1246 = vmatpush2.bf16.msra.mxu0 0
        %1247 = vmatprep.subr.bf16.mxu0 0
        %1248 = vmatpush2.bf16.msra.mxu0 0
        %1249 = vmatprep.subr.bf16.mxu0 0
        %1250 = vmatpush2.bf16.msra.mxu0 0
        %1251 = vmatprep.mubr.bf16.mxu0 0
        %1252 = vmatmul.mubr.bf16.gmra.mxu0 %v1217
        %v1253 = vpop.f32.mrf.mxu0
        %v1254 = vadd.f32 0.0, %v1253
        %v1255 = vpop.f32.mrf.mxu0
        %v1256 = vpop.f32.mrf.mxu0
        %v1257 = vpop.f32.mrf.mxu0
        %1258 = vdwg.mxu0
        %v1259 = vadd.f32 %v1097, %v1254
        %v1260 = vld [vmem:[%s4] sm:$0x1]
        %v1262 = vlaneseq
        %v1263 = vshrl.u32 %v1262, 7
        %v1264 = vsub.s32 0, %v1263
        %v1265 = vrot.slane %v1260, %v1264
        %v1267 = vadd.f32 %v1259, %v1265
        %v1268 = vadd.f32 %v491, %v1267
        %v1269 = vld [vmem:[%s9] sm:$0x1]
        %v1270 = vld [vmem:[%s10] sm:$0x1]
        %v1271 = vsel %vm558, %v1268, 0.0
        %1272 = vadd.xlane.f32.xlu0 %v1271
        %v1273 = vpop.xlane.xlu0 %1272
        %v1274 = vrcp.pop 64.0
        %v1275 = vmul.f32 %v1273, %v1274
        %v1276 = vsub.f32 %v1268, %v1275
        %v1277 = vmul.f32 %v1276, %v1276
        %v1278 = vsel %vm558, %v1277, 0.0
        %1279 = vadd.xlane.f32.xlu0 %v1278
        %v1280 = vpop.xlane.xlu0 %1279
        %v1281 = vmul.f32 %v1280, %v1274
        %v1282 = vadd.f32 %v1281, 1e-05
        %v1283 = vrsqrt.pop %v1282
        %v1284 = vmul.f32 %v1276, %v1283
        %v1286 = vlaneseq
        %v1287 = vshrl.u32 %v1286, 7
        %v1288 = vsub.s32 0, %v1287
        %v1289 = vrot.slane %v1269, %v1288
        %v1291 = vmul.f32 %v1284, %v1289
        %v1293 = vlaneseq
        %v1294 = vshrl.u32 %v1293, 7
        %v1295 = vsub.s32 0, %v1294
        %v1296 = vrot.slane %v1270, %v1295
        %v1298 = vadd.f32 %v1291, %v1296
        %v1299 = vpack.c.bf16 %v1298, %v1298
        %v1300 = vld [vmem:[%s5] sm:$0xff]
        %v1301 = vld [vmem:[%s5 + $0x8] sm:$0xff]
        %v1302 = vld [vmem:[%s5 + $0x10] sm:$0xff]
        %v1303 = vld [vmem:[%s5 + $0x18] sm:$0xff]
        %v1304 = vld [vmem:[%s5 + $0x20] sm:$0xff]
        %v1305 = vld [vmem:[%s5 + $0x28] sm:$0xff]
        %v1306 = vld [vmem:[%s5 + $0x30] sm:$0xff]
        %v1307 = vld [vmem:[%s5 + $0x38] sm:$0xff]
        %v1308 = vld [vmem:[%s6] sm:$0x3]
        %v1310 = vlaneseq
        %v1311 = vshrl.u32 %v1310, 7
        %v1312 = vsub.s32 0, %v1311
        %v1313 = vrot.slane %v1308, %v1312
        %v1314 = vlaneseq
        %v1315 = vshrl.u32 %v1314, 7
        %v1316 = vsub.s32 1, %v1315
        %v1317 = vrot.slane %v1308, %v1316
        %v1328 = vunpack.c.l.b16 %v1300
        %v1329 = vunpack.c.h.b16 %v1300
        %v1330 = vunpack.c.l.b16 %v1301
        %v1331 = vunpack.c.h.b16 %v1301
        %v1332 = vunpack.c.l.b16 %v1302
        %v1333 = vunpack.c.h.b16 %v1302
        %v1334 = vunpack.c.l.b16 %v1303
        %v1335 = vunpack.c.h.b16 %v1303
        %v1336 = vunpack.c.l.b16 %v1304
        %v1337 = vunpack.c.h.b16 %v1304
        %v1338 = vunpack.c.l.b16 %v1305
        %v1339 = vunpack.c.h.b16 %v1305
        %v1340 = vunpack.c.l.b16 %v1306
        %v1341 = vunpack.c.h.b16 %v1306
        %v1342 = vunpack.c.l.b16 %v1307
        %v1343 = vunpack.c.h.b16 %v1307
        %v1344 = vpack.c.b16 %v1330, %v1328
        %v1345 = vpack.c.b16 %v1331, %v1329
        %v1346 = vpack.c.b16 %v1334, %v1332
        %v1347 = vpack.c.b16 %v1335, %v1333
        %v1348 = vpack.c.b16 %v1338, %v1336
        %v1349 = vpack.c.b16 %v1339, %v1337
        %v1350 = vpack.c.b16 %v1342, %v1340
        %v1351 = vpack.c.b16 %v1343, %v1341
        %v1361 = vsel %vm558, %v1299, 0
        %1363 = vmatprep.subr.bf16.mxu0 0
        %1364 = vmatpush1.bf16.msra.mxu0 0
        %1365 = vmatprep.subr.bf16.mxu0 0
        %1366 = vmatpush1.bf16.msra.mxu0 0
        %1367 = vmatprep.subr.bf16.mxu0 0
        %1368 = vmatpush1.bf16.msra.mxu0 0
        %1369 = vmatprep.subr.bf16.mxu0 0
        %1370 = vmatpush1.bf16.msra.mxu0 0
        %1371 = vmatprep.subr.bf16.mxu0 %v1351
        %1372 = vmatpush1.bf16.msra.mxu0 %v1350
        %1373 = vmatprep.subr.bf16.mxu0 %v1349
        %1374 = vmatpush1.bf16.msra.mxu0 %v1348
        %1375 = vmatprep.subr.bf16.mxu0 %v1347
        %1376 = vmatpush1.bf16.msra.mxu0 %v1346
        %1377 = vmatprep.subr.bf16.mxu0 %v1345
        %1378 = vmatpush1.bf16.msra.mxu0 %v1344
        %1379 = vmatprep.subr.bf16.mxu0 0
        %1380 = vmatpush2.bf16.msra.mxu0 0
        %1381 = vmatprep.subr.bf16.mxu0 0
        %1382 = vmatpush2.bf16.msra.mxu0 0
        %1383 = vmatprep.subr.bf16.mxu0 0
        %1384 = vmatpush2.bf16.msra.mxu0 0
        %1385 = vmatprep.subr.bf16.mxu0 0
        %1386 = vmatpush2.bf16.msra.mxu0 0
        %1387 = vmatprep.subr.bf16.mxu0 0
        %1388 = vmatpush2.bf16.msra.mxu0 0
        %1389 = vmatprep.subr.bf16.mxu0 0
        %1390 = vmatpush2.bf16.msra.mxu0 0
        %1391 = vmatprep.subr.bf16.mxu0 0
        %1392 = vmatpush2.bf16.msra.mxu0 0
        %1393 = vmatprep.subr.bf16.mxu0 0
        %1394 = vmatpush2.bf16.msra.mxu0 0
        %1395 = vmatprep.mubr.bf16.mxu0 0
        %1396 = vmatmul.mubr.bf16.gmra.mxu0 %v1361
        %v1397 = vpop.f32.mrf.mxu0
        %v1398 = vadd.f32 %v1313, %v1397
        %v1399 = vpop.f32.mrf.mxu0
        %v1400 = vadd.f32 %v1317, %v1399
        %v1401 = vpop.f32.mrf.mxu0
        %v1402 = vpop.f32.mrf.mxu0
        %1403 = vdwg.mxu0
        %v1404 = vmax.f32 %v1398, 0.0
        %v1405 = vmax.f32 %v1400, 0.0
        %v1406 = vpack.c.bf16 %v1404, %v1404
        %v1407 = vpack.c.bf16 %v1405, %v1405
        %v1408 = vld [vmem:[%s7] sm:$0xf]
        %v1409 = vld [vmem:[%s7 + $0x4] sm:$0xf]
        %v1410 = vld [vmem:[%s7 + $0x8] sm:$0xf]
        %v1411 = vld [vmem:[%s7 + $0xc] sm:$0xf]
        %v1412 = vld [vmem:[%s7 + $0x10] sm:$0xf]
        %v1413 = vld [vmem:[%s7 + $0x14] sm:$0xf]
        %v1414 = vld [vmem:[%s7 + $0x18] sm:$0xf]
        %v1415 = vld [vmem:[%s7 + $0x1c] sm:$0xf]
        %v1416 = vld [vmem:[%s7 + $0x20] sm:$0xf]
        %v1417 = vld [vmem:[%s7 + $0x24] sm:$0xf]
        %v1418 = vld [vmem:[%s7 + $0x28] sm:$0xf]
        %v1419 = vld [vmem:[%s7 + $0x2c] sm:$0xf]
        %v1420 = vld [vmem:[%s7 + $0x30] sm:$0xf]
        %v1421 = vld [vmem:[%s7 + $0x34] sm:$0xf]
        %v1422 = vld [vmem:[%s7 + $0x38] sm:$0xf]
        %v1423 = vld [vmem:[%s7 + $0x3c] sm:$0xf]
        %v1424 = vld [vmem:[%s7 + $0x40] sm:$0xf]
        %v1425 = vld [vmem:[%s7 + $0x44] sm:$0xf]
        %v1426 = vld [vmem:[%s7 + $0x48] sm:$0xf]
        %v1427 = vld [vmem:[%s7 + $0x4c] sm:$0xf]
        %v1428 = vld [vmem:[%s7 + $0x50] sm:$0xf]
        %v1429 = vld [vmem:[%s7 + $0x54] sm:$0xf]
        %v1430 = vld [vmem:[%s7 + $0x58] sm:$0xf]
        %v1431 = vld [vmem:[%s7 + $0x5c] sm:$0xf]
        %v1432 = vld [vmem:[%s7 + $0x60] sm:$0xf]
        %v1433 = vld [vmem:[%s7 + $0x64] sm:$0xf]
        %v1434 = vld [vmem:[%s7 + $0x68] sm:$0xf]
        %v1435 = vld [vmem:[%s7 + $0x6c] sm:$0xf]
        %v1436 = vld [vmem:[%s7 + $0x70] sm:$0xf]
        %v1437 = vld [vmem:[%s7 + $0x74] sm:$0xf]
        %v1438 = vld [vmem:[%s7 + $0x78] sm:$0xf]
        %v1439 = vld [vmem:[%s7 + $0x7c] sm:$0xf]
        %v1440 = vld [vmem:[%s8] sm:$0x1]
        %v1442 = vlaneseq
        %v1443 = vshrl.u32 %v1442, 7
        %v1444 = vsub.s32 0, %v1443
        %v1445 = vrot.slane %v1440, %v1444
        %v1479 = vunpack.c.l.b16 %v1408
        %v1480 = vunpack.c.l.b16 %v1409
        %v1481 = vunpack.c.l.b16 %v1410
        %v1482 = vunpack.c.l.b16 %v1411
        %v1483 = vunpack.c.l.b16 %v1412
        %v1484 = vunpack.c.l.b16 %v1413
        %v1485 = vunpack.c.l.b16 %v1414
        %v1486 = vunpack.c.l.b16 %v1415
        %v1487 = vunpack.c.l.b16 %v1416
        %v1488 = vunpack.c.l.b16 %v1417
        %v1489 = vunpack.c.l.b16 %v1418
        %v1490 = vunpack.c.l.b16 %v1419
        %v1491 = vunpack.c.l.b16 %v1420
        %v1492 = vunpack.c.l.b16 %v1421
        %v1493 = vunpack.c.l.b16 %v1422
        %v1494 = vunpack.c.l.b16 %v1423
        %v1495 = vunpack.c.l.b16 %v1424
        %v1496 = vunpack.c.l.b16 %v1425
        %v1497 = vunpack.c.l.b16 %v1426
        %v1498 = vunpack.c.l.b16 %v1427
        %v1499 = vunpack.c.l.b16 %v1428
        %v1500 = vunpack.c.l.b16 %v1429
        %v1501 = vunpack.c.l.b16 %v1430
        %v1502 = vunpack.c.l.b16 %v1431
        %v1503 = vunpack.c.l.b16 %v1432
        %v1504 = vunpack.c.l.b16 %v1433
        %v1505 = vunpack.c.l.b16 %v1434
        %v1506 = vunpack.c.l.b16 %v1435
        %v1507 = vunpack.c.l.b16 %v1436
        %v1508 = vunpack.c.l.b16 %v1437
        %v1509 = vunpack.c.l.b16 %v1438
        %v1510 = vunpack.c.l.b16 %v1439
        %v1511 = vpack.c.b16 %v1480, %v1479
        %v1512 = vpack.c.b16 %v1482, %v1481
        %v1513 = vpack.c.b16 %v1484, %v1483
        %v1514 = vpack.c.b16 %v1486, %v1485
        %v1515 = vpack.c.b16 %v1488, %v1487
        %v1516 = vpack.c.b16 %v1490, %v1489
        %v1517 = vpack.c.b16 %v1492, %v1491
        %v1518 = vpack.c.b16 %v1494, %v1493
        %v1519 = vpack.c.b16 %v1496, %v1495
        %v1520 = vpack.c.b16 %v1498, %v1497
        %v1521 = vpack.c.b16 %v1500, %v1499
        %v1522 = vpack.c.b16 %v1502, %v1501
        %v1523 = vpack.c.b16 %v1504, %v1503
        %v1524 = vpack.c.b16 %v1506, %v1505
        %v1525 = vpack.c.b16 %v1508, %v1507
        %v1526 = vpack.c.b16 %v1510, %v1509
        %1543 = vmatprep.subr.bf16.mxu0 0
        %1544 = vmatpush1.bf16.msra.mxu0 %v1518
        %1545 = vmatprep.subr.bf16.mxu0 0
        %1546 = vmatpush1.bf16.msra.mxu0 %v1517
        %1547 = vmatprep.subr.bf16.mxu0 0
        %1548 = vmatpush1.bf16.msra.mxu0 %v1516
        %1549 = vmatprep.subr.bf16.mxu0 0
        %1550 = vmatpush1.bf16.msra.mxu0 %v1515
        %1551 = vmatprep.subr.bf16.mxu0 0
        %1552 = vmatpush1.bf16.msra.mxu0 %v1514
        %1553 = vmatprep.subr.bf16.mxu0 0
        %1554 = vmatpush1.bf16.msra.mxu0 %v1513
        %1555 = vmatprep.subr.bf16.mxu0 0
        %1556 = vmatpush1.bf16.msra.mxu0 %v1512
        %1557 = vmatprep.subr.bf16.mxu0 0
        %1558 = vmatpush1.bf16.msra.mxu0 %v1511
        %1559 = vmatprep.subr.bf16.mxu0 0
        %1560 = vmatpush2.bf16.msra.mxu0 %v1526
        %1561 = vmatprep.subr.bf16.mxu0 0
        %1562 = vmatpush2.bf16.msra.mxu0 %v1525
        %1563 = vmatprep.subr.bf16.mxu0 0
        %1564 = vmatpush2.bf16.msra.mxu0 %v1524
        %1565 = vmatprep.subr.bf16.mxu0 0
        %1566 = vmatpush2.bf16.msra.mxu0 %v1523
        %1567 = vmatprep.subr.bf16.mxu0 0
        %1568 = vmatpush2.bf16.msra.mxu0 %v1522
        %1569 = vmatprep.subr.bf16.mxu0 0
        %1570 = vmatpush2.bf16.msra.mxu0 %v1521
        %1571 = vmatprep.subr.bf16.mxu0 0
        %1572 = vmatpush2.bf16.msra.mxu0 %v1520
        %1573 = vmatprep.subr.bf16.mxu0 0
        %1574 = vmatpush2.bf16.msra.mxu0 %v1519
        %1575 = vmatprep.mubr.bf16.mxu0 %v1407
        %1576 = vmatmul.mubr.bf16.gmra.mxu0 %v1406
        %v1577 = vpop.f32.mrf.mxu0
        %v1578 = vadd.f32 %v1445, %v1577
        %v1579 = vpop.f32.mrf.mxu0
        %v1580 = vpop.f32.mrf.mxu0
        %v1581 = vpop.f32.mrf.mxu0
        %1582 = vdwg.mxu0
        %v1583 = vadd.f32 %v1298, %v1578
        %v1584 = vld [vmem:[%s11] sm:$0x1]
        %v1585 = vld [vmem:[%s12] sm:$0x1]
        %v1586 = vsel %vm558, %v1583, 0.0
        %1587 = vadd.xlane.f32.xlu0 %v1586
        %v1588 = vpop.xlane.xlu0 %1587
        %v1589 = vmul.f32 %v1588, %v1274
        %v1590 = vsub.f32 %v1583, %v1589
        %v1591 = vmul.f32 %v1590, %v1590
        %v1592 = vsel %vm558, %v1591, 0.0
        %1593 = vadd.xlane.f32.xlu0 %v1592
        %v1594 = vpop.xlane.xlu0 %1593
        %v1595 = vmul.f32 %v1594, %v1274
        %v1596 = vadd.f32 %v1595, 1e-05
        %v1597 = vrsqrt.pop %v1596
        %v1598 = vmul.f32 %v1590, %v1597
        %v1600 = vlaneseq
        %v1601 = vshrl.u32 %v1600, 7
        %v1602 = vsub.s32 0, %v1601
        %v1603 = vrot.slane %v1584, %v1602
        %v1605 = vmul.f32 %v1598, %v1603
        %v1607 = vlaneseq
        %v1608 = vshrl.u32 %v1607, 7
        %v1609 = vsub.s32 0, %v1608
        %v1610 = vrot.slane %v1585, %v1609
        %v1612 = vadd.f32 %v1605, %v1610
        %v1613 = vpack.c.bf16 %v1612, %v1612
        %s1614 = scalar_lea.vmem %s1, 64
        %v1615 = vld [vmem:[%s1614] sm:$0xff]
        %v1616 = vld [vmem:[%s1614 + $0x8] sm:$0xff]
        %v1617 = vld [vmem:[%s1614 + $0x10] sm:$0xff]
        %v1618 = vld [vmem:[%s1614 + $0x18] sm:$0xff]
        %v1619 = vld [vmem:[%s1614 + $0x20] sm:$0xff]
        %v1620 = vld [vmem:[%s1614 + $0x28] sm:$0xff]
        %v1621 = vld [vmem:[%s1614 + $0x30] sm:$0xff]
        %v1622 = vld [vmem:[%s1614 + $0x38] sm:$0xff]
        %s1623 = scalar_lea.vmem %s2, 2
        %v1624 = vld [vmem:[%s1623] sm:$0x3]
        %v1626 = vlaneseq
        %v1627 = vshrl.u32 %v1626, 7
        %v1628 = vsub.s32 0, %v1627
        %v1629 = vrot.slane %v1624, %v1628
        %v1630 = vlaneseq
        %v1631 = vshrl.u32 %v1630, 7
        %v1632 = vsub.s32 1, %v1631
        %v1633 = vrot.slane %v1624, %v1632
        %v1644 = vunpack.c.l.b16 %v1615
        %v1645 = vunpack.c.h.b16 %v1615
        %v1646 = vunpack.c.l.b16 %v1616
        %v1647 = vunpack.c.h.b16 %v1616
        %v1648 = vunpack.c.l.b16 %v1617
        %v1649 = vunpack.c.h.b16 %v1617
        %v1650 = vunpack.c.l.b16 %v1618
        %v1651 = vunpack.c.h.b16 %v1618
        %v1652 = vunpack.c.l.b16 %v1619
        %v1653 = vunpack.c.h.b16 %v1619
        %v1654 = vunpack.c.l.b16 %v1620
        %v1655 = vunpack.c.h.b16 %v1620
        %v1656 = vunpack.c.l.b16 %v1621
        %v1657 = vunpack.c.h.b16 %v1621
        %v1658 = vunpack.c.l.b16 %v1622
        %v1659 = vunpack.c.h.b16 %v1622
        %v1660 = vpack.c.b16 %v1646, %v1644
        %v1661 = vpack.c.b16 %v1647, %v1645
        %v1662 = vpack.c.b16 %v1650, %v1648
        %v1663 = vpack.c.b16 %v1651, %v1649
        %v1664 = vpack.c.b16 %v1654, %v1652
        %v1665 = vpack.c.b16 %v1655, %v1653
        %v1666 = vpack.c.b16 %v1658, %v1656
        %v1667 = vpack.c.b16 %v1659, %v1657
        %v1677 = vsel %vm558, %v1613, 0
        %1679 = vmatprep.subr.bf16.mxu0 0
        %1680 = vmatpush1.bf16.msra.mxu0 0
        %1681 = vmatprep.subr.bf16.mxu0 0
        %1682 = vmatpush1.bf16.msra.mxu0 0
        %1683 = vmatprep.subr.bf16.mxu0 0
        %1684 = vmatpush1.bf16.msra.mxu0 0
        %1685 = vmatprep.subr.bf16.mxu0 0
        %1686 = vmatpush1.bf16.msra.mxu0 0
        %1687 = vmatprep.subr.bf16.mxu0 %v1667
        %1688 = vmatpush1.bf16.msra.mxu0 %v1666
        %1689 = vmatprep.subr.bf16.mxu0 %v1665
        %1690 = vmatpush1.bf16.msra.mxu0 %v1664
        %1691 = vmatprep.subr.bf16.mxu0 %v1663
        %1692 = vmatpush1.bf16.msra.mxu0 %v1662
        %1693 = vmatprep.subr.bf16.mxu0 %v1661
        %1694 = vmatpush1.bf16.msra.mxu0 %v1660
        %1695 = vmatprep.subr.bf16.mxu0 0
        %1696 = vmatpush2.bf16.msra.mxu0 0
        %1697 = vmatprep.subr.bf16.mxu0 0
        %1698 = vmatpush2.bf16.msra.mxu0 0
        %1699 = vmatprep.subr.bf16.mxu0 0
        %1700 = vmatpush2.bf16.msra.mxu0 0
        %1701 = vmatprep.subr.bf16.mxu0 0
        %1702 = vmatpush2.bf16.msra.mxu0 0
        %1703 = vmatprep.subr.bf16.mxu0 0
        %1704 = vmatpush2.bf16.msra.mxu0 0
        %1705 = vmatprep.subr.bf16.mxu0 0
        %1706 = vmatpush2.bf16.msra.mxu0 0
        %1707 = vmatprep.subr.bf16.mxu0 0
        %1708 = vmatpush2.bf16.msra.mxu0 0
        %1709 = vmatprep.subr.bf16.mxu0 0
        %1710 = vmatpush2.bf16.msra.mxu0 0
        %1711 = vmatprep.mubr.bf16.mxu0 0
        %1712 = vmatmul.mubr.bf16.gmra.mxu0 %v1677
        %v1713 = vpop.f32.mrf.mxu0
        %v1714 = vadd.f32 %v1629, %v1713
        %v1715 = vpop.f32.mrf.mxu0
        %v1716 = vadd.f32 %v1633, %v1715
        %v1717 = vpop.f32.mrf.mxu0
        %v1718 = vpop.f32.mrf.mxu0
        %1719 = vdwg.mxu0
        %s1720 = scalar_lea.vmem %s3, 32
        %v1721 = vld [vmem:[%s1720] sm:$0xf]
        %v1722 = vld [vmem:[%s1720 + $0x4] sm:$0xf]
        %v1723 = vld [vmem:[%s1720 + $0x8] sm:$0xf]
        %v1724 = vld [vmem:[%s1720 + $0xc] sm:$0xf]
        %v1725 = vld [vmem:[%s1720 + $0x10] sm:$0xf]
        %v1726 = vld [vmem:[%s1720 + $0x14] sm:$0xf]
        %v1727 = vld [vmem:[%s1720 + $0x18] sm:$0xf]
        %v1728 = vld [vmem:[%s1720 + $0x1c] sm:$0xf]
        %v1729 = vpack.c.bf16 %v1714, %v1714
        %v1730 = vpack.c.bf16 %v1716, %v1716
        %1732 = vrot.lane.b32.xlu0 %v1729, 64
        %v1733 = vpop.permute.xlu0 %1732
        %v1735 = vsel %vm616, %v1729, 0
        %v1738 = vsel %vm616, %v1733, 0
        %1740 = vmatprep.subr.bf16.mxu0 0
        %1741 = vmatpush1.bf16.xpose.msra.mxu0 0
        %1742 = vmatprep.subr.bf16.mxu0 0
        %1743 = vmatpush1.bf16.xpose.msra.mxu0 0
        %1744 = vmatprep.subr.bf16.mxu0 0
        %1745 = vmatpush1.bf16.xpose.msra.mxu0 0
        %1746 = vmatprep.subr.bf16.mxu0 0
        %1747 = vmatpush1.bf16.xpose.msra.mxu0 0
        %1748 = vmatprep.subr.bf16.mxu0 0
        %1749 = vmatpush1.bf16.xpose.msra.mxu0 0
        %1750 = vmatprep.subr.bf16.mxu0 0
        %1751 = vmatpush1.bf16.xpose.msra.mxu0 0
        %1752 = vmatprep.subr.bf16.mxu0 0
        %1753 = vmatpush1.bf16.xpose.msra.mxu0 0
        %1754 = vmatprep.subr.bf16.mxu0 0
        %1755 = vmatpush1.bf16.xpose.msra.mxu0 %v1738
        %1756 = vmatprep.subr.bf16.mxu0 0
        %1757 = vmatpush2.bf16.xpose.msra.mxu0 0
        %1758 = vmatprep.subr.bf16.mxu0 0
        %1759 = vmatpush2.bf16.xpose.msra.mxu0 0
        %1760 = vmatprep.subr.bf16.mxu0 0
        %1761 = vmatpush2.bf16.xpose.msra.mxu0 0
        %1762 = vmatprep.subr.bf16.mxu0 0
        %1763 = vmatpush2.bf16.xpose.msra.mxu0 0
        %1764 = vmatprep.subr.bf16.mxu0 0
        %1765 = vmatpush2.bf16.xpose.msra.mxu0 0
        %1766 = vmatprep.subr.bf16.mxu0 0
        %1767 = vmatpush2.bf16.xpose.msra.mxu0 0
        %1768 = vmatprep.subr.bf16.mxu0 0
        %1769 = vmatpush2.bf16.xpose.msra.mxu0 0
        %1770 = vmatprep.subr.bf16.mxu0 0
        %1771 = vmatpush2.bf16.xpose.msra.mxu0 0
        %1772 = vmatprep.mubr.bf16.mxu0 0
        %1773 = vmatmul.mubr.bf16.gmra.mxu0 %v1735
        %v1774 = vpop.f32.mrf.mxu0
        %v1775 = vadd.f32 0.0, %v1774
        %v1776 = vpop.f32.mrf.mxu0
        %v1777 = vpop.f32.mrf.mxu0
        %v1778 = vpop.f32.mrf.mxu0
        %1779 = vdwg.mxu0
        %v1780 = vsel %vm496, %v1775, -1e+30
        %v1781 = vsel %vm664, %v1780, -inf
        %1782 = vmax.xlane.f32.xlu0 %v1781
        %v1783 = vpop.xlane.xlu0 %1782
        %v1784 = vsub.f32 %v1780, %v1783
        %v1785 = vmul.f32 %v1784, 1.442695
        %v1786 = vpow.pop %v1785
        %v1787 = vsel %vm664, %v1786, 0.0
        %1788 = vadd.xlane.f32.xlu0 %v1787
        %v1789 = vpop.xlane.xlu0 %1788
        %v1790 = vrcp.pop %v1789
        %v1791 = vmul.f32 %v1786, %v1790
        %v1792 = vpack.c.bf16 %v1791, %v1791
        %v1794 = vsel %vm664, %v1792, 0
        %v1797 = vsel %vm680, %v1730, 0
        %1799 = vmatprep.subr.bf16.mxu0 0
        %1800 = vmatpush1.bf16.msra.mxu0 0
        %1801 = vmatprep.subr.bf16.mxu0 0
        %1802 = vmatpush1.bf16.msra.mxu0 0
        %1803 = vmatprep.subr.bf16.mxu0 0
        %1804 = vmatpush1.bf16.msra.mxu0 0
        %1805 = vmatprep.subr.bf16.mxu0 0
        %1806 = vmatpush1.bf16.msra.mxu0 0
        %1807 = vmatprep.subr.bf16.mxu0 0
        %1808 = vmatpush1.bf16.msra.mxu0 0
        %1809 = vmatprep.subr.bf16.mxu0 0
        %1810 = vmatpush1.bf16.msra.mxu0 0
        %1811 = vmatprep.subr.bf16.mxu0 0
        %1812 = vmatpush1.bf16.msra.mxu0 0
        %1813 = vmatprep.subr.bf16.mxu0 0
        %1814 = vmatpush1.bf16.msra.mxu0 %v1797
        %1815 = vmatprep.subr.bf16.mxu0 0
        %1816 = vmatpush2.bf16.msra.mxu0 0
        %1817 = vmatprep.subr.bf16.mxu0 0
        %1818 = vmatpush2.bf16.msra.mxu0 0
        %1819 = vmatprep.subr.bf16.mxu0 0
        %1820 = vmatpush2.bf16.msra.mxu0 0
        %1821 = vmatprep.subr.bf16.mxu0 0
        %1822 = vmatpush2.bf16.msra.mxu0 0
        %1823 = vmatprep.subr.bf16.mxu0 0
        %1824 = vmatpush2.bf16.msra.mxu0 0
        %1825 = vmatprep.subr.bf16.mxu0 0
        %1826 = vmatpush2.bf16.msra.mxu0 0
        %1827 = vmatprep.subr.bf16.mxu0 0
        %1828 = vmatpush2.bf16.msra.mxu0 0
        %1829 = vmatprep.subr.bf16.mxu0 0
        %1830 = vmatpush2.bf16.msra.mxu0 0
        %1831 = vmatprep.mubr.bf16.mxu0 0
        %1832 = vmatmul.mubr.bf16.gmra.mxu0 %v1794
        %v1833 = vpop.f32.mrf.mxu0
        %v1834 = vadd.f32 0.0, %v1833
        %v1835 = vpop.f32.mrf.mxu0
        %v1836 = vpop.f32.mrf.mxu0
        %v1837 = vpop.f32.mrf.mxu0
        %1838 = vdwg.mxu0
        %v1839 = vpack.c.bf16 %v1834, %v1834
        %1840 = vrot.lane.b32.xlu0 %v1729, 112
        %v1841 = vpop.permute.xlu0 %1840
        %1842 = vrot.lane.b32.xlu0 %v1729, 48
        %v1843 = vpop.permute.xlu0 %1842
        %v1845 = vsel %vm616, %v1841, 0
        %v1848 = vsel %vm616, %v1843, 0
        %1850 = vmatprep.subr.bf16.mxu0 0
        %1851 = vmatpush1.bf16.xpose.msra.mxu0 0
        %1852 = vmatprep.subr.bf16.mxu0 0
        %1853 = vmatpush1.bf16.xpose.msra.mxu0 0
        %1854 = vmatprep.subr.bf16.mxu0 0
        %1855 = vmatpush1.bf16.xpose.msra.mxu0 0
        %1856 = vmatprep.subr.bf16.mxu0 0
        %1857 = vmatpush1.bf16.xpose.msra.mxu0 0
        %1858 = vmatprep.subr.bf16.mxu0 0
        %1859 = vmatpush1.bf16.xpose.msra.mxu0 0
        %1860 = vmatprep.subr.bf16.mxu0 0
        %1861 = vmatpush1.bf16.xpose.msra.mxu0 0
        %1862 = vmatprep.subr.bf16.mxu0 0
        %1863 = vmatpush1.bf16.xpose.msra.mxu0 0
        %1864 = vmatprep.subr.bf16.mxu0 0
        %1865 = vmatpush1.bf16.xpose.msra.mxu0 %v1848
        %1866 = vmatprep.subr.bf16.mxu0 0
        %1867 = vmatpush2.bf16.xpose.msra.mxu0 0
        %1868 = vmatprep.subr.bf16.mxu0 0
        %1869 = vmatpush2.bf16.xpose.msra.mxu0 0
        %1870 = vmatprep.subr.bf16.mxu0 0
        %1871 = vmatpush2.bf16.xpose.msra.mxu0 0
        %1872 = vmatprep.subr.bf16.mxu0 0
        %1873 = vmatpush2.bf16.xpose.msra.mxu0 0
        %1874 = vmatprep.subr.bf16.mxu0 0
        %1875 = vmatpush2.bf16.xpose.msra.mxu0 0
        %1876 = vmatprep.subr.bf16.mxu0 0
        %1877 = vmatpush2.bf16.xpose.msra.mxu0 0
        %1878 = vmatprep.subr.bf16.mxu0 0
        %1879 = vmatpush2.bf16.xpose.msra.mxu0 0
        %1880 = vmatprep.subr.bf16.mxu0 0
        %1881 = vmatpush2.bf16.xpose.msra.mxu0 0
        %1882 = vmatprep.mubr.bf16.mxu0 0
        %1883 = vmatmul.mubr.bf16.gmra.mxu0 %v1845
        %v1884 = vpop.f32.mrf.mxu0
        %v1885 = vadd.f32 0.0, %v1884
        %v1886 = vpop.f32.mrf.mxu0
        %v1887 = vpop.f32.mrf.mxu0
        %v1888 = vpop.f32.mrf.mxu0
        %1889 = vdwg.mxu0
        %v1890 = vsel %vm496, %v1885, -1e+30
        %v1891 = vsel %vm664, %v1890, -inf
        %1892 = vmax.xlane.f32.xlu0 %v1891
        %v1893 = vpop.xlane.xlu0 %1892
        %v1894 = vsub.f32 %v1890, %v1893
        %v1895 = vmul.f32 %v1894, 1.442695
        %v1896 = vpow.pop %v1895
        %v1897 = vsel %vm664, %v1896, 0.0
        %1898 = vadd.xlane.f32.xlu0 %v1897
        %v1899 = vpop.xlane.xlu0 %1898
        %v1900 = vrcp.pop %v1899
        %v1901 = vmul.f32 %v1896, %v1900
        %v1902 = vpack.c.bf16 %v1901, %v1901
        %1904 = vrot.lane.b32.xlu0 %v1730, 112
        %v1905 = vpop.permute.xlu0 %1904
        %v1907 = vsel %vm664, %v1902, 0
        %v1910 = vsel %vm680, %v1905, 0
        %1912 = vmatprep.subr.bf16.mxu0 0
        %1913 = vmatpush1.bf16.msra.mxu0 0
        %1914 = vmatprep.subr.bf16.mxu0 0
        %1915 = vmatpush1.bf16.msra.mxu0 0
        %1916 = vmatprep.subr.bf16.mxu0 0
        %1917 = vmatpush1.bf16.msra.mxu0 0
        %1918 = vmatprep.subr.bf16.mxu0 0
        %1919 = vmatpush1.bf16.msra.mxu0 0
        %1920 = vmatprep.subr.bf16.mxu0 0
        %1921 = vmatpush1.bf16.msra.mxu0 0
        %1922 = vmatprep.subr.bf16.mxu0 0
        %1923 = vmatpush1.bf16.msra.mxu0 0
        %1924 = vmatprep.subr.bf16.mxu0 0
        %1925 = vmatpush1.bf16.msra.mxu0 0
        %1926 = vmatprep.subr.bf16.mxu0 0
        %1927 = vmatpush1.bf16.msra.mxu0 %v1910
        %1928 = vmatprep.subr.bf16.mxu0 0
        %1929 = vmatpush2.bf16.msra.mxu0 0
        %1930 = vmatprep.subr.bf16.mxu0 0
        %1931 = vmatpush2.bf16.msra.mxu0 0
        %1932 = vmatprep.subr.bf16.mxu0 0
        %1933 = vmatpush2.bf16.msra.mxu0 0
        %1934 = vmatprep.subr.bf16.mxu0 0
        %1935 = vmatpush2.bf16.msra.mxu0 0
        %1936 = vmatprep.subr.bf16.mxu0 0
        %1937 = vmatpush2.bf16.msra.mxu0 0
        %1938 = vmatprep.subr.bf16.mxu0 0
        %1939 = vmatpush2.bf16.msra.mxu0 0
        %1940 = vmatprep.subr.bf16.mxu0 0
        %1941 = vmatpush2.bf16.msra.mxu0 0
        %1942 = vmatprep.subr.bf16.mxu0 0
        %1943 = vmatpush2.bf16.msra.mxu0 0
        %1944 = vmatprep.mubr.bf16.mxu0 0
        %1945 = vmatmul.mubr.bf16.gmra.mxu0 %v1907
        %v1946 = vpop.f32.mrf.mxu0
        %v1947 = vadd.f32 0.0, %v1946
        %v1948 = vpop.f32.mrf.mxu0
        %v1949 = vpop.f32.mrf.mxu0
        %v1950 = vpop.f32.mrf.mxu0
        %1951 = vdwg.mxu0
        %v1952 = vpack.c.bf16 %v1947, %v1947
        %v1955 = vunpack.c.l.b16 %v1723
        %v1956 = vunpack.c.l.b16 %v1724
        %v1957 = vpack.c.b16 %v1956, %v1955
        %v1960 = vsel %vm616, %v1952, 0
        %1962 = vmatprep.subr.bf16.mxu0 0
        %1963 = vmatpush1.bf16.msra.mxu0 0
        %1964 = vmatprep.subr.bf16.mxu0 0
        %1965 = vmatpush1.bf16.msra.mxu0 0
        %1966 = vmatprep.subr.bf16.mxu0 0
        %1967 = vmatpush1.bf16.msra.mxu0 0
        %1968 = vmatprep.subr.bf16.mxu0 0
        %1969 = vmatpush1.bf16.msra.mxu0 0
        %1970 = vmatprep.subr.bf16.mxu0 0
        %1971 = vmatpush1.bf16.msra.mxu0 0
        %1972 = vmatprep.subr.bf16.mxu0 0
        %1973 = vmatpush1.bf16.msra.mxu0 0
        %1974 = vmatprep.subr.bf16.mxu0 0
        %1975 = vmatpush1.bf16.msra.mxu0 0
        %1976 = vmatprep.subr.bf16.mxu0 0
        %1977 = vmatpush1.bf16.msra.mxu0 %v1957
        %1978 = vmatprep.subr.bf16.mxu0 0
        %1979 = vmatpush2.bf16.msra.mxu0 0
        %1980 = vmatprep.subr.bf16.mxu0 0
        %1981 = vmatpush2.bf16.msra.mxu0 0
        %1982 = vmatprep.subr.bf16.mxu0 0
        %1983 = vmatpush2.bf16.msra.mxu0 0
        %1984 = vmatprep.subr.bf16.mxu0 0
        %1985 = vmatpush2.bf16.msra.mxu0 0
        %1986 = vmatprep.subr.bf16.mxu0 0
        %1987 = vmatpush2.bf16.msra.mxu0 0
        %1988 = vmatprep.subr.bf16.mxu0 0
        %1989 = vmatpush2.bf16.msra.mxu0 0
        %1990 = vmatprep.subr.bf16.mxu0 0
        %1991 = vmatpush2.bf16.msra.mxu0 0
        %1992 = vmatprep.subr.bf16.mxu0 0
        %1993 = vmatpush2.bf16.msra.mxu0 0
        %1994 = vmatprep.mubr.bf16.mxu0 0
        %1995 = vmatmul.mubr.bf16.gmra.mxu0 %v1960
        %v1996 = vpop.f32.mrf.mxu0
        %v1997 = vadd.f32 0.0, %v1996
        %v1998 = vpop.f32.mrf.mxu0
        %v1999 = vpop.f32.mrf.mxu0
        %v2000 = vpop.f32.mrf.mxu0
        %2001 = vdwg.mxu0
        %v2004 = vunpack.c.l.b16 %v1721
        %v2005 = vunpack.c.l.b16 %v1722
        %v2006 = vpack.c.b16 %v2005, %v2004
        %v2009 = vsel %vm616, %v1839, 0
        %2011 = vmatprep.subr.bf16.mxu0 0
        %2012 = vmatpush1.bf16.msra.mxu0 0
        %2013 = vmatprep.subr.bf16.mxu0 0
        %2014 = vmatpush1.bf16.msra.mxu0 0
        %2015 = vmatprep.subr.bf16.mxu0 0
        %2016 = vmatpush1.bf16.msra.mxu0 0
        %2017 = vmatprep.subr.bf16.mxu0 0
        %2018 = vmatpush1.bf16.msra.mxu0 0
        %2019 = vmatprep.subr.bf16.mxu0 0
        %2020 = vmatpush1.bf16.msra.mxu0 0
        %2021 = vmatprep.subr.bf16.mxu0 0
        %2022 = vmatpush1.bf16.msra.mxu0 0
        %2023 = vmatprep.subr.bf16.mxu0 0
        %2024 = vmatpush1.bf16.msra.mxu0 0
        %2025 = vmatprep.subr.bf16.mxu0 0
        %2026 = vmatpush1.bf16.msra.mxu0 %v2006
        %2027 = vmatprep.subr.bf16.mxu0 0
        %2028 = vmatpush2.bf16.msra.mxu0 0
        %2029 = vmatprep.subr.bf16.mxu0 0
        %2030 = vmatpush2.bf16.msra.mxu0 0
        %2031 = vmatprep.subr.bf16.mxu0 0
        %2032 = vmatpush2.bf16.msra.mxu0 0
        %2033 = vmatprep.subr.bf16.mxu0 0
        %2034 = vmatpush2.bf16.msra.mxu0 0
        %2035 = vmatprep.subr.bf16.mxu0 0
        %2036 = vmatpush2.bf16.msra.mxu0 0
        %2037 = vmatprep.subr.bf16.mxu0 0
        %2038 = vmatpush2.bf16.msra.mxu0 0
        %2039 = vmatprep.subr.bf16.mxu0 0
        %2040 = vmatpush2.bf16.msra.mxu0 0
        %2041 = vmatprep.subr.bf16.mxu0 0
        %2042 = vmatpush2.bf16.msra.mxu0 0
        %2043 = vmatprep.mubr.bf16.mxu0 0
        %2044 = vmatmul.mubr.bf16.gmra.mxu0 %v2009
        %v2045 = vpop.f32.mrf.mxu0
        %v2046 = vadd.f32 %v1997, %v2045
        %v2047 = vpop.f32.mrf.mxu0
        %v2048 = vpop.f32.mrf.mxu0
        %v2049 = vpop.f32.mrf.mxu0
        %2050 = vdwg.mxu0
        %2051 = vrot.lane.b32.xlu0 %v1729, 96
        %v2052 = vpop.permute.xlu0 %2051
        %2053 = vrot.lane.b32.xlu0 %v1729, 32
        %v2054 = vpop.permute.xlu0 %2053
        %v2056 = vsel %vm616, %v2052, 0
        %v2059 = vsel %vm616, %v2054, 0
        %2061 = vmatprep.subr.bf16.mxu0 0
        %2062 = vmatpush1.bf16.xpose.msra.mxu0 0
        %2063 = vmatprep.subr.bf16.mxu0 0
        %2064 = vmatpush1.bf16.xpose.msra.mxu0 0
        %2065 = vmatprep.subr.bf16.mxu0 0
        %2066 = vmatpush1.bf16.xpose.msra.mxu0 0
        %2067 = vmatprep.subr.bf16.mxu0 0
        %2068 = vmatpush1.bf16.xpose.msra.mxu0 0
        %2069 = vmatprep.subr.bf16.mxu0 0
        %2070 = vmatpush1.bf16.xpose.msra.mxu0 0
        %2071 = vmatprep.subr.bf16.mxu0 0
        %2072 = vmatpush1.bf16.xpose.msra.mxu0 0
        %2073 = vmatprep.subr.bf16.mxu0 0
        %2074 = vmatpush1.bf16.xpose.msra.mxu0 0
        %2075 = vmatprep.subr.bf16.mxu0 0
        %2076 = vmatpush1.bf16.xpose.msra.mxu0 %v2059
        %2077 = vmatprep.subr.bf16.mxu0 0
        %2078 = vmatpush2.bf16.xpose.msra.mxu0 0
        %2079 = vmatprep.subr.bf16.mxu0 0
        %2080 = vmatpush2.bf16.xpose.msra.mxu0 0
        %2081 = vmatprep.subr.bf16.mxu0 0
        %2082 = vmatpush2.bf16.xpose.msra.mxu0 0
        %2083 = vmatprep.subr.bf16.mxu0 0
        %2084 = vmatpush2.bf16.xpose.msra.mxu0 0
        %2085 = vmatprep.subr.bf16.mxu0 0
        %2086 = vmatpush2.bf16.xpose.msra.mxu0 0
        %2087 = vmatprep.subr.bf16.mxu0 0
        %2088 = vmatpush2.bf16.xpose.msra.mxu0 0
        %2089 = vmatprep.subr.bf16.mxu0 0
        %2090 = vmatpush2.bf16.xpose.msra.mxu0 0
        %2091 = vmatprep.subr.bf16.mxu0 0
        %2092 = vmatpush2.bf16.xpose.msra.mxu0 0
        %2093 = vmatprep.mubr.bf16.mxu0 0
        %2094 = vmatmul.mubr.bf16.gmra.mxu0 %v2056
        %v2095 = vpop.f32.mrf.mxu0
        %v2096 = vadd.f32 0.0, %v2095
        %v2097 = vpop.f32.mrf.mxu0
        %v2098 = vpop.f32.mrf.mxu0
        %v2099 = vpop.f32.mrf.mxu0
        %2100 = vdwg.mxu0
        %v2101 = vsel %vm496, %v2096, -1e+30
        %v2102 = vsel %vm664, %v2101, -inf
        %2103 = vmax.xlane.f32.xlu0 %v2102
        %v2104 = vpop.xlane.xlu0 %2103
        %v2105 = vsub.f32 %v2101, %v2104
        %v2106 = vmul.f32 %v2105, 1.442695
        %v2107 = vpow.pop %v2106
        %v2108 = vsel %vm664, %v2107, 0.0
        %2109 = vadd.xlane.f32.xlu0 %v2108
        %v2110 = vpop.xlane.xlu0 %2109
        %v2111 = vrcp.pop %v2110
        %v2112 = vmul.f32 %v2107, %v2111
        %v2113 = vpack.c.bf16 %v2112, %v2112
        %2114 = vrot.lane.b32.xlu0 %v1730, 96
        %v2115 = vpop.permute.xlu0 %2114
        %v2117 = vsel %vm664, %v2113, 0
        %v2120 = vsel %vm680, %v2115, 0
        %2122 = vmatprep.subr.bf16.mxu0 0
        %2123 = vmatpush1.bf16.msra.mxu0 0
        %2124 = vmatprep.subr.bf16.mxu0 0
        %2125 = vmatpush1.bf16.msra.mxu0 0
        %2126 = vmatprep.subr.bf16.mxu0 0
        %2127 = vmatpush1.bf16.msra.mxu0 0
        %2128 = vmatprep.subr.bf16.mxu0 0
        %2129 = vmatpush1.bf16.msra.mxu0 0
        %2130 = vmatprep.subr.bf16.mxu0 0
        %2131 = vmatpush1.bf16.msra.mxu0 0
        %2132 = vmatprep.subr.bf16.mxu0 0
        %2133 = vmatpush1.bf16.msra.mxu0 0
        %2134 = vmatprep.subr.bf16.mxu0 0
        %2135 = vmatpush1.bf16.msra.mxu0 0
        %2136 = vmatprep.subr.bf16.mxu0 0
        %2137 = vmatpush1.bf16.msra.mxu0 %v2120
        %2138 = vmatprep.subr.bf16.mxu0 0
        %2139 = vmatpush2.bf16.msra.mxu0 0
        %2140 = vmatprep.subr.bf16.mxu0 0
        %2141 = vmatpush2.bf16.msra.mxu0 0
        %2142 = vmatprep.subr.bf16.mxu0 0
        %2143 = vmatpush2.bf16.msra.mxu0 0
        %2144 = vmatprep.subr.bf16.mxu0 0
        %2145 = vmatpush2.bf16.msra.mxu0 0
        %2146 = vmatprep.subr.bf16.mxu0 0
        %2147 = vmatpush2.bf16.msra.mxu0 0
        %2148 = vmatprep.subr.bf16.mxu0 0
        %2149 = vmatpush2.bf16.msra.mxu0 0
        %2150 = vmatprep.subr.bf16.mxu0 0
        %2151 = vmatpush2.bf16.msra.mxu0 0
        %2152 = vmatprep.subr.bf16.mxu0 0
        %2153 = vmatpush2.bf16.msra.mxu0 0
        %2154 = vmatprep.mubr.bf16.mxu0 0
        %2155 = vmatmul.mubr.bf16.gmra.mxu0 %v2117
        %v2156 = vpop.f32.mrf.mxu0
        %v2157 = vadd.f32 0.0, %v2156
        %v2158 = vpop.f32.mrf.mxu0
        %v2159 = vpop.f32.mrf.mxu0
        %v2160 = vpop.f32.mrf.mxu0
        %2161 = vdwg.mxu0
        %v2162 = vpack.c.bf16 %v2157, %v2157
        %v2165 = vunpack.c.l.b16 %v1725
        %v2166 = vunpack.c.l.b16 %v1726
        %v2167 = vpack.c.b16 %v2166, %v2165
        %v2170 = vsel %vm616, %v2162, 0
        %2172 = vmatprep.subr.bf16.mxu0 0
        %2173 = vmatpush1.bf16.msra.mxu0 0
        %2174 = vmatprep.subr.bf16.mxu0 0
        %2175 = vmatpush1.bf16.msra.mxu0 0
        %2176 = vmatprep.subr.bf16.mxu0 0
        %2177 = vmatpush1.bf16.msra.mxu0 0
        %2178 = vmatprep.subr.bf16.mxu0 0
        %2179 = vmatpush1.bf16.msra.mxu0 0
        %2180 = vmatprep.subr.bf16.mxu0 0
        %2181 = vmatpush1.bf16.msra.mxu0 0
        %2182 = vmatprep.subr.bf16.mxu0 0
        %2183 = vmatpush1.bf16.msra.mxu0 0
        %2184 = vmatprep.subr.bf16.mxu0 0
        %2185 = vmatpush1.bf16.msra.mxu0 0
        %2186 = vmatprep.subr.bf16.mxu0 0
        %2187 = vmatpush1.bf16.msra.mxu0 %v2167
        %2188 = vmatprep.subr.bf16.mxu0 0
        %2189 = vmatpush2.bf16.msra.mxu0 0
        %2190 = vmatprep.subr.bf16.mxu0 0
        %2191 = vmatpush2.bf16.msra.mxu0 0
        %2192 = vmatprep.subr.bf16.mxu0 0
        %2193 = vmatpush2.bf16.msra.mxu0 0
        %2194 = vmatprep.subr.bf16.mxu0 0
        %2195 = vmatpush2.bf16.msra.mxu0 0
        %2196 = vmatprep.subr.bf16.mxu0 0
        %2197 = vmatpush2.bf16.msra.mxu0 0
        %2198 = vmatprep.subr.bf16.mxu0 0
        %2199 = vmatpush2.bf16.msra.mxu0 0
        %2200 = vmatprep.subr.bf16.mxu0 0
        %2201 = vmatpush2.bf16.msra.mxu0 0
        %2202 = vmatprep.subr.bf16.mxu0 0
        %2203 = vmatpush2.bf16.msra.mxu0 0
        %2204 = vmatprep.mubr.bf16.mxu0 0
        %2205 = vmatmul.mubr.bf16.gmra.mxu0 %v2170
        %v2206 = vpop.f32.mrf.mxu0
        %v2207 = vadd.f32 0.0, %v2206
        %v2208 = vpop.f32.mrf.mxu0
        %v2209 = vpop.f32.mrf.mxu0
        %v2210 = vpop.f32.mrf.mxu0
        %2211 = vdwg.mxu0
        %v2212 = vadd.f32 %v2046, %v2207
        %2213 = vrot.lane.b32.xlu0 %v1729, 80
        %v2214 = vpop.permute.xlu0 %2213
        %2215 = vrot.lane.b32.xlu0 %v1729, 16
        %v2216 = vpop.permute.xlu0 %2215
        %v2218 = vsel %vm616, %v2214, 0
        %v2221 = vsel %vm616, %v2216, 0
        %2223 = vmatprep.subr.bf16.mxu0 0
        %2224 = vmatpush1.bf16.xpose.msra.mxu0 0
        %2225 = vmatprep.subr.bf16.mxu0 0
        %2226 = vmatpush1.bf16.xpose.msra.mxu0 0
        %2227 = vmatprep.subr.bf16.mxu0 0
        %2228 = vmatpush1.bf16.xpose.msra.mxu0 0
        %2229 = vmatprep.subr.bf16.mxu0 0
        %2230 = vmatpush1.bf16.xpose.msra.mxu0 0
        %2231 = vmatprep.subr.bf16.mxu0 0
        %2232 = vmatpush1.bf16.xpose.msra.mxu0 0
        %2233 = vmatprep.subr.bf16.mxu0 0
        %2234 = vmatpush1.bf16.xpose.msra.mxu0 0
        %2235 = vmatprep.subr.bf16.mxu0 0
        %2236 = vmatpush1.bf16.xpose.msra.mxu0 0
        %2237 = vmatprep.subr.bf16.mxu0 0
        %2238 = vmatpush1.bf16.xpose.msra.mxu0 %v2221
        %2239 = vmatprep.subr.bf16.mxu0 0
        %2240 = vmatpush2.bf16.xpose.msra.mxu0 0
        %2241 = vmatprep.subr.bf16.mxu0 0
        %2242 = vmatpush2.bf16.xpose.msra.mxu0 0
        %2243 = vmatprep.subr.bf16.mxu0 0
        %2244 = vmatpush2.bf16.xpose.msra.mxu0 0
        %2245 = vmatprep.subr.bf16.mxu0 0
        %2246 = vmatpush2.bf16.xpose.msra.mxu0 0
        %2247 = vmatprep.subr.bf16.mxu0 0
        %2248 = vmatpush2.bf16.xpose.msra.mxu0 0
        %2249 = vmatprep.subr.bf16.mxu0 0
        %2250 = vmatpush2.bf16.xpose.msra.mxu0 0
        %2251 = vmatprep.subr.bf16.mxu0 0
        %2252 = vmatpush2.bf16.xpose.msra.mxu0 0
        %2253 = vmatprep.subr.bf16.mxu0 0
        %2254 = vmatpush2.bf16.xpose.msra.mxu0 0
        %2255 = vmatprep.mubr.bf16.mxu0 0
        %2256 = vmatmul.mubr.bf16.gmra.mxu0 %v2218
        %v2257 = vpop.f32.mrf.mxu0
        %v2258 = vadd.f32 0.0, %v2257
        %v2259 = vpop.f32.mrf.mxu0
        %v2260 = vpop.f32.mrf.mxu0
        %v2261 = vpop.f32.mrf.mxu0
        %2262 = vdwg.mxu0
        %v2263 = vsel %vm496, %v2258, -1e+30
        %v2264 = vsel %vm664, %v2263, -inf
        %2265 = vmax.xlane.f32.xlu0 %v2264
        %v2266 = vpop.xlane.xlu0 %2265
        %v2267 = vsub.f32 %v2263, %v2266
        %v2268 = vmul.f32 %v2267, 1.442695
        %v2269 = vpow.pop %v2268
        %v2270 = vsel %vm664, %v2269, 0.0
        %2271 = vadd.xlane.f32.xlu0 %v2270
        %v2272 = vpop.xlane.xlu0 %2271
        %v2273 = vrcp.pop %v2272
        %v2274 = vmul.f32 %v2269, %v2273
        %v2275 = vpack.c.bf16 %v2274, %v2274
        %2276 = vrot.lane.b32.xlu0 %v1730, 80
        %v2277 = vpop.permute.xlu0 %2276
        %v2279 = vsel %vm664, %v2275, 0
        %v2282 = vsel %vm680, %v2277, 0
        %2284 = vmatprep.subr.bf16.mxu0 0
        %2285 = vmatpush1.bf16.msra.mxu0 0
        %2286 = vmatprep.subr.bf16.mxu0 0
        %2287 = vmatpush1.bf16.msra.mxu0 0
        %2288 = vmatprep.subr.bf16.mxu0 0
        %2289 = vmatpush1.bf16.msra.mxu0 0
        %2290 = vmatprep.subr.bf16.mxu0 0
        %2291 = vmatpush1.bf16.msra.mxu0 0
        %2292 = vmatprep.subr.bf16.mxu0 0
        %2293 = vmatpush1.bf16.msra.mxu0 0
        %2294 = vmatprep.subr.bf16.mxu0 0
        %2295 = vmatpush1.bf16.msra.mxu0 0
        %2296 = vmatprep.subr.bf16.mxu0 0
        %2297 = vmatpush1.bf16.msra.mxu0 0
        %2298 = vmatprep.subr.bf16.mxu0 0
        %2299 = vmatpush1.bf16.msra.mxu0 %v2282
        %2300 = vmatprep.subr.bf16.mxu0 0
        %2301 = vmatpush2.bf16.msra.mxu0 0
        %2302 = vmatprep.subr.bf16.mxu0 0
        %2303 = vmatpush2.bf16.msra.mxu0 0
        %2304 = vmatprep.subr.bf16.mxu0 0
        %2305 = vmatpush2.bf16.msra.mxu0 0
        %2306 = vmatprep.subr.bf16.mxu0 0
        %2307 = vmatpush2.bf16.msra.mxu0 0
        %2308 = vmatprep.subr.bf16.mxu0 0
        %2309 = vmatpush2.bf16.msra.mxu0 0
        %2310 = vmatprep.subr.bf16.mxu0 0
        %2311 = vmatpush2.bf16.msra.mxu0 0
        %2312 = vmatprep.subr.bf16.mxu0 0
        %2313 = vmatpush2.bf16.msra.mxu0 0
        %2314 = vmatprep.subr.bf16.mxu0 0
        %2315 = vmatpush2.bf16.msra.mxu0 0
        %2316 = vmatprep.mubr.bf16.mxu0 0
        %2317 = vmatmul.mubr.bf16.gmra.mxu0 %v2279
        %v2318 = vpop.f32.mrf.mxu0
        %v2319 = vadd.f32 0.0, %v2318
        %v2320 = vpop.f32.mrf.mxu0
        %v2321 = vpop.f32.mrf.mxu0
        %v2322 = vpop.f32.mrf.mxu0
        %2323 = vdwg.mxu0
        %v2324 = vpack.c.bf16 %v2319, %v2319
        %v2327 = vunpack.c.l.b16 %v1727
        %v2328 = vunpack.c.l.b16 %v1728
        %v2329 = vpack.c.b16 %v2328, %v2327
        %v2332 = vsel %vm616, %v2324, 0
        %2334 = vmatprep.subr.bf16.mxu0 0
        %2335 = vmatpush1.bf16.msra.mxu0 0
        %2336 = vmatprep.subr.bf16.mxu0 0
        %2337 = vmatpush1.bf16.msra.mxu0 0
        %2338 = vmatprep.subr.bf16.mxu0 0
        %2339 = vmatpush1.bf16.msra.mxu0 0
        %2340 = vmatprep.subr.bf16.mxu0 0
        %2341 = vmatpush1.bf16.msra.mxu0 0
        %2342 = vmatprep.subr.bf16.mxu0 0
        %2343 = vmatpush1.bf16.msra.mxu0 0
        %2344 = vmatprep.subr.bf16.mxu0 0
        %2345 = vmatpush1.bf16.msra.mxu0 0
        %2346 = vmatprep.subr.bf16.mxu0 0
        %2347 = vmatpush1.bf16.msra.mxu0 0
        %2348 = vmatprep.subr.bf16.mxu0 0
        %2349 = vmatpush1.bf16.msra.mxu0 %v2329
        %2350 = vmatprep.subr.bf16.mxu0 0
        %2351 = vmatpush2.bf16.msra.mxu0 0
        %2352 = vmatprep.subr.bf16.mxu0 0
        %2353 = vmatpush2.bf16.msra.mxu0 0
        %2354 = vmatprep.subr.bf16.mxu0 0
        %2355 = vmatpush2.bf16.msra.mxu0 0
        %2356 = vmatprep.subr.bf16.mxu0 0
        %2357 = vmatpush2.bf16.msra.mxu0 0
        %2358 = vmatprep.subr.bf16.mxu0 0
        %2359 = vmatpush2.bf16.msra.mxu0 0
        %2360 = vmatprep.subr.bf16.mxu0 0
        %2361 = vmatpush2.bf16.msra.mxu0 0
        %2362 = vmatprep.subr.bf16.mxu0 0
        %2363 = vmatpush2.bf16.msra.mxu0 0
        %2364 = vmatprep.subr.bf16.mxu0 0
        %2365 = vmatpush2.bf16.msra.mxu0 0
        %2366 = vmatprep.mubr.bf16.mxu0 0
        %2367 = vmatmul.mubr.bf16.gmra.mxu0 %v2332
        %v2368 = vpop.f32.mrf.mxu0
        %v2369 = vadd.f32 0.0, %v2368
        %v2370 = vpop.f32.mrf.mxu0
        %v2371 = vpop.f32.mrf.mxu0
        %v2372 = vpop.f32.mrf.mxu0
        %2373 = vdwg.mxu0
        %v2374 = vadd.f32 %v2212, %v2369
        %s2375 = scalar_lea.vmem %s4, 1
        %v2376 = vld [vmem:[%s2375] sm:$0x1]
        %v2378 = vlaneseq
        %v2379 = vshrl.u32 %v2378, 7
        %v2380 = vsub.s32 0, %v2379
        %v2381 = vrot.slane %v2376, %v2380
        %v2383 = vadd.f32 %v2374, %v2381
        %v2384 = vadd.f32 %v1612, %v2383
        %s2385 = scalar_lea.vmem %s9, 1
        %v2386 = vld [vmem:[%s2385] sm:$0x1]
        %s2387 = scalar_lea.vmem %s10, 1
        %v2388 = vld [vmem:[%s2387] sm:$0x1]
        %v2389 = vsel %vm558, %v2384, 0.0
        %2390 = vadd.xlane.f32.xlu0 %v2389
        %v2391 = vpop.xlane.xlu0 %2390
        %v2392 = vmul.f32 %v2391, %v1274
        %v2393 = vsub.f32 %v2384, %v2392
        %v2394 = vmul.f32 %v2393, %v2393
        %v2395 = vsel %vm558, %v2394, 0.0
        %2396 = vadd.xlane.f32.xlu0 %v2395
        %v2397 = vpop.xlane.xlu0 %2396
        %v2398 = vmul.f32 %v2397, %v1274
        %v2399 = vadd.f32 %v2398, 1e-05
        %v2400 = vrsqrt.pop %v2399
        %v2401 = vmul.f32 %v2393, %v2400
        %v2403 = vlaneseq
        %v2404 = vshrl.u32 %v2403, 7
        %v2405 = vsub.s32 0, %v2404
        %v2406 = vrot.slane %v2386, %v2405
        %v2408 = vmul.f32 %v2401, %v2406
        %v2410 = vlaneseq
        %v2411 = vshrl.u32 %v2410, 7
        %v2412 = vsub.s32 0, %v2411
        %v2413 = vrot.slane %v2388, %v2412
        %v2415 = vadd.f32 %v2408, %v2413
        %v2416 = vpack.c.bf16 %v2415, %v2415
        %s2417 = scalar_lea.vmem %s5, 64
        %v2418 = vld [vmem:[%s2417] sm:$0xff]
        %v2419 = vld [vmem:[%s2417 + $0x8] sm:$0xff]
        %v2420 = vld [vmem:[%s2417 + $0x10] sm:$0xff]
        %v2421 = vld [vmem:[%s2417 + $0x18] sm:$0xff]
        %v2422 = vld [vmem:[%s2417 + $0x20] sm:$0xff]
        %v2423 = vld [vmem:[%s2417 + $0x28] sm:$0xff]
        %v2424 = vld [vmem:[%s2417 + $0x30] sm:$0xff]
        %v2425 = vld [vmem:[%s2417 + $0x38] sm:$0xff]
        %s2426 = scalar_lea.vmem %s6, 2
        %v2427 = vld [vmem:[%s2426] sm:$0x3]
        %v2429 = vlaneseq
        %v2430 = vshrl.u32 %v2429, 7
        %v2431 = vsub.s32 0, %v2430
        %v2432 = vrot.slane %v2427, %v2431
        %v2433 = vlaneseq
        %v2434 = vshrl.u32 %v2433, 7
        %v2435 = vsub.s32 1, %v2434
        %v2436 = vrot.slane %v2427, %v2435
        %v2447 = vunpack.c.l.b16 %v2418
        %v2448 = vunpack.c.h.b16 %v2418
        %v2449 = vunpack.c.l.b16 %v2419
        %v2450 = vunpack.c.h.b16 %v2419
        %v2451 = vunpack.c.l.b16 %v2420
        %v2452 = vunpack.c.h.b16 %v2420
        %v2453 = vunpack.c.l.b16 %v2421
        %v2454 = vunpack.c.h.b16 %v2421
        %v2455 = vunpack.c.l.b16 %v2422
        %v2456 = vunpack.c.h.b16 %v2422
        %v2457 = vunpack.c.l.b16 %v2423
        %v2458 = vunpack.c.h.b16 %v2423
        %v2459 = vunpack.c.l.b16 %v2424
        %v2460 = vunpack.c.h.b16 %v2424
        %v2461 = vunpack.c.l.b16 %v2425
        %v2462 = vunpack.c.h.b16 %v2425
        %v2463 = vpack.c.b16 %v2449, %v2447
        %v2464 = vpack.c.b16 %v2450, %v2448
        %v2465 = vpack.c.b16 %v2453, %v2451
        %v2466 = vpack.c.b16 %v2454, %v2452
        %v2467 = vpack.c.b16 %v2457, %v2455
        %v2468 = vpack.c.b16 %v2458, %v2456
        %v2469 = vpack.c.b16 %v2461, %v2459
        %v2470 = vpack.c.b16 %v2462, %v2460
        %v2480 = vsel %vm558, %v2416, 0
        %2482 = vmatprep.subr.bf16.mxu0 0
        %2483 = vmatpush1.bf16.msra.mxu0 0
        %2484 = vmatprep.subr.bf16.mxu0 0
        %2485 = vmatpush1.bf16.msra.mxu0 0
        %2486 = vmatprep.subr.bf16.mxu0 0
        %2487 = vmatpush1.bf16.msra.mxu0 0
        %2488 = vmatprep.subr.bf16.mxu0 0
        %2489 = vmatpush1.bf16.msra.mxu0 0
        %2490 = vmatprep.subr.bf16.mxu0 %v2470
        %2491 = vmatpush1.bf16.msra.mxu0 %v2469
        %2492 = vmatprep.subr.bf16.mxu0 %v2468
        %2493 = vmatpush1.bf16.msra.mxu0 %v2467
        %2494 = vmatprep.subr.bf16.mxu0 %v2466
        %2495 = vmatpush1.bf16.msra.mxu0 %v2465
        %2496 = vmatprep.subr.bf16.mxu0 %v2464
        %2497 = vmatpush1.bf16.msra.mxu0 %v2463
        %2498 = vmatprep.subr.bf16.mxu0 0
        %2499 = vmatpush2.bf16.msra.mxu0 0
        %2500 = vmatprep.subr.bf16.mxu0 0
        %2501 = vmatpush2.bf16.msra.mxu0 0
        %2502 = vmatprep.subr.bf16.mxu0 0
        %2503 = vmatpush2.bf16.msra.mxu0 0
        %2504 = vmatprep.subr.bf16.mxu0 0
        %2505 = vmatpush2.bf16.msra.mxu0 0
        %2506 = vmatprep.subr.bf16.mxu0 0
        %2507 = vmatpush2.bf16.msra.mxu0 0
        %2508 = vmatprep.subr.bf16.mxu0 0
        %2509 = vmatpush2.bf16.msra.mxu0 0
        %2510 = vmatprep.subr.bf16.mxu0 0
        %2511 = vmatpush2.bf16.msra.mxu0 0
        %2512 = vmatprep.subr.bf16.mxu0 0
        %2513 = vmatpush2.bf16.msra.mxu0 0
        %2514 = vmatprep.mubr.bf16.mxu0 0
        %2515 = vmatmul.mubr.bf16.gmra.mxu0 %v2480
        %v2516 = vpop.f32.mrf.mxu0
        %v2517 = vadd.f32 %v2432, %v2516
        %v2518 = vpop.f32.mrf.mxu0
        %v2519 = vadd.f32 %v2436, %v2518
        %v2520 = vpop.f32.mrf.mxu0
        %v2521 = vpop.f32.mrf.mxu0
        %2522 = vdwg.mxu0
        %v2523 = vmax.f32 %v2517, 0.0
        %v2524 = vmax.f32 %v2519, 0.0
        %v2525 = vpack.c.bf16 %v2523, %v2523
        %v2526 = vpack.c.bf16 %v2524, %v2524
        %s2527 = scalar_lea.vmem %s7, 128
        %v2528 = vld [vmem:[%s2527] sm:$0xf]
        %v2529 = vld [vmem:[%s2527 + $0x4] sm:$0xf]
        %v2530 = vld [vmem:[%s2527 + $0x8] sm:$0xf]
        %v2531 = vld [vmem:[%s2527 + $0xc] sm:$0xf]
        %v2532 = vld [vmem:[%s2527 + $0x10] sm:$0xf]
        %v2533 = vld [vmem:[%s2527 + $0x14] sm:$0xf]
        %v2534 = vld [vmem:[%s2527 + $0x18] sm:$0xf]
        %v2535 = vld [vmem:[%s2527 + $0x1c] sm:$0xf]
        %v2536 = vld [vmem:[%s2527 + $0x20] sm:$0xf]
        %v2537 = vld [vmem:[%s2527 + $0x24] sm:$0xf]
        %v2538 = vld [vmem:[%s2527 + $0x28] sm:$0xf]
        %v2539 = vld [vmem:[%s2527 + $0x2c] sm:$0xf]
        %v2540 = vld [vmem:[%s2527 + $0x30] sm:$0xf]
        %v2541 = vld [vmem:[%s2527 + $0x34] sm:$0xf]
        %v2542 = vld [vmem:[%s2527 + $0x38] sm:$0xf]
        %v2543 = vld [vmem:[%s2527 + $0x3c] sm:$0xf]
        %v2544 = vld [vmem:[%s2527 + $0x40] sm:$0xf]
        %v2545 = vld [vmem:[%s2527 + $0x44] sm:$0xf]
        %v2546 = vld [vmem:[%s2527 + $0x48] sm:$0xf]
        %v2547 = vld [vmem:[%s2527 + $0x4c] sm:$0xf]
        %v2548 = vld [vmem:[%s2527 + $0x50] sm:$0xf]
        %v2549 = vld [vmem:[%s2527 + $0x54] sm:$0xf]
        %v2550 = vld [vmem:[%s2527 + $0x58] sm:$0xf]
        %v2551 = vld [vmem:[%s2527 + $0x5c] sm:$0xf]
        %v2552 = vld [vmem:[%s2527 + $0x60] sm:$0xf]
        %v2553 = vld [vmem:[%s2527 + $0x64] sm:$0xf]
        %v2554 = vld [vmem:[%s2527 + $0x68] sm:$0xf]
        %v2555 = vld [vmem:[%s2527 + $0x6c] sm:$0xf]
        %v2556 = vld [vmem:[%s2527 + $0x70] sm:$0xf]
        %v2557 = vld [vmem:[%s2527 + $0x74] sm:$0xf]
        %v2558 = vld [vmem:[%s2527 + $0x78] sm:$0xf]
        %v2559 = vld [vmem:[%s2527 + $0x7c] sm:$0xf]
        %s2560 = scalar_lea.vmem %s8, 1
        %v2561 = vld [vmem:[%s2560] sm:$0x1]
        %v2563 = vlaneseq
        %v2564 = vshrl.u32 %v2563, 7
        %v2565 = vsub.s32 0, %v2564
        %v2566 = vrot.slane %v2561, %v2565
        %v2600 = vunpack.c.l.b16 %v2528
        %v2601 = vunpack.c.l.b16 %v2529
        %v2602 = vunpack.c.l.b16 %v2530
        %v2603 = vunpack.c.l.b16 %v2531
        %v2604 = vunpack.c.l.b16 %v2532
        %v2605 = vunpack.c.l.b16 %v2533
        %v2606 = vunpack.c.l.b16 %v2534
        %v2607 = vunpack.c.l.b16 %v2535
        %v2608 = vunpack.c.l.b16 %v2536
        %v2609 = vunpack.c.l.b16 %v2537
        %v2610 = vunpack.c.l.b16 %v2538
        %v2611 = vunpack.c.l.b16 %v2539
        %v2612 = vunpack.c.l.b16 %v2540
        %v2613 = vunpack.c.l.b16 %v2541
        %v2614 = vunpack.c.l.b16 %v2542
        %v2615 = vunpack.c.l.b16 %v2543
        %v2616 = vunpack.c.l.b16 %v2544
        %v2617 = vunpack.c.l.b16 %v2545
        %v2618 = vunpack.c.l.b16 %v2546
        %v2619 = vunpack.c.l.b16 %v2547
        %v2620 = vunpack.c.l.b16 %v2548
        %v2621 = vunpack.c.l.b16 %v2549
        %v2622 = vunpack.c.l.b16 %v2550
        %v2623 = vunpack.c.l.b16 %v2551
        %v2624 = vunpack.c.l.b16 %v2552
        %v2625 = vunpack.c.l.b16 %v2553
        %v2626 = vunpack.c.l.b16 %v2554
        %v2627 = vunpack.c.l.b16 %v2555
        %v2628 = vunpack.c.l.b16 %v2556
        %v2629 = vunpack.c.l.b16 %v2557
        %v2630 = vunpack.c.l.b16 %v2558
        %v2631 = vunpack.c.l.b16 %v2559
        %v2632 = vpack.c.b16 %v2601, %v2600
        %v2633 = vpack.c.b16 %v2603, %v2602
        %v2634 = vpack.c.b16 %v2605, %v2604
        %v2635 = vpack.c.b16 %v2607, %v2606
        %v2636 = vpack.c.b16 %v2609, %v2608
        %v2637 = vpack.c.b16 %v2611, %v2610
        %v2638 = vpack.c.b16 %v2613, %v2612
        %v2639 = vpack.c.b16 %v2615, %v2614
        %v2640 = vpack.c.b16 %v2617, %v2616
        %v2641 = vpack.c.b16 %v2619, %v2618
        %v2642 = vpack.c.b16 %v2621, %v2620
        %v2643 = vpack.c.b16 %v2623, %v2622
        %v2644 = vpack.c.b16 %v2625, %v2624
        %v2645 = vpack.c.b16 %v2627, %v2626
        %v2646 = vpack.c.b16 %v2629, %v2628
        %v2647 = vpack.c.b16 %v2631, %v2630
        %2664 = vmatprep.subr.bf16.mxu0 0
        %2665 = vmatpush1.bf16.msra.mxu0 %v2639
        %2666 = vmatprep.subr.bf16.mxu0 0
        %2667 = vmatpush1.bf16.msra.mxu0 %v2638
        %2668 = vmatprep.subr.bf16.mxu0 0
        %2669 = vmatpush1.bf16.msra.mxu0 %v2637
        %2670 = vmatprep.subr.bf16.mxu0 0
        %2671 = vmatpush1.bf16.msra.mxu0 %v2636
        %2672 = vmatprep.subr.bf16.mxu0 0
        %2673 = vmatpush1.bf16.msra.mxu0 %v2635
        %2674 = vmatprep.subr.bf16.mxu0 0
        %2675 = vmatpush1.bf16.msra.mxu0 %v2634
        %2676 = vmatprep.subr.bf16.mxu0 0
        %2677 = vmatpush1.bf16.msra.mxu0 %v2633
        %2678 = vmatprep.subr.bf16.mxu0 0
        %2679 = vmatpush1.bf16.msra.mxu0 %v2632
        %2680 = vmatprep.subr.bf16.mxu0 0
        %2681 = vmatpush2.bf16.msra.mxu0 %v2647
        %2682 = vmatprep.subr.bf16.mxu0 0
        %2683 = vmatpush2.bf16.msra.mxu0 %v2646
        %2684 = vmatprep.subr.bf16.mxu0 0
        %2685 = vmatpush2.bf16.msra.mxu0 %v2645
        %2686 = vmatprep.subr.bf16.mxu0 0
        %2687 = vmatpush2.bf16.msra.mxu0 %v2644
        %2688 = vmatprep.subr.bf16.mxu0 0
        %2689 = vmatpush2.bf16.msra.mxu0 %v2643
        %2690 = vmatprep.subr.bf16.mxu0 0
        %2691 = vmatpush2.bf16.msra.mxu0 %v2642
        %2692 = vmatprep.subr.bf16.mxu0 0
        %2693 = vmatpush2.bf16.msra.mxu0 %v2641
        %2694 = vmatprep.subr.bf16.mxu0 0
        %2695 = vmatpush2.bf16.msra.mxu0 %v2640
        %2696 = vmatprep.mubr.bf16.mxu0 %v2526
        %2697 = vmatmul.mubr.bf16.gmra.mxu0 %v2525
        %v2698 = vpop.f32.mrf.mxu0
        %v2699 = vadd.f32 %v2566, %v2698
        %v2700 = vpop.f32.mrf.mxu0
        %v2701 = vpop.f32.mrf.mxu0
        %v2702 = vpop.f32.mrf.mxu0
        %2703 = vdwg.mxu0
        %v2704 = vadd.f32 %v2415, %v2699
        %s2705 = scalar_lea.vmem %s11, 1
        %v2706 = vld [vmem:[%s2705] sm:$0x1]
        %s2707 = scalar_lea.vmem %s12, 1
        %v2708 = vld [vmem:[%s2707] sm:$0x1]
        %v2709 = vsel %vm558, %v2704, 0.0
        %2710 = vadd.xlane.f32.xlu0 %v2709
        %v2711 = vpop.xlane.xlu0 %2710
        %v2712 = vmul.f32 %v2711, %v1274
        %v2713 = vsub.f32 %v2704, %v2712
        %v2714 = vmul.f32 %v2713, %v2713
        %v2715 = vsel %vm558, %v2714, 0.0
        %2716 = vadd.xlane.f32.xlu0 %v2715
        %v2717 = vpop.xlane.xlu0 %2716
        %v2718 = vmul.f32 %v2717, %v1274
        %v2719 = vadd.f32 %v2718, 1e-05
        %v2720 = vrsqrt.pop %v2719
        %v2721 = vmul.f32 %v2713, %v2720
        %v2723 = vlaneseq
        %v2724 = vshrl.u32 %v2723, 7
        %v2725 = vsub.s32 0, %v2724
        %v2726 = vrot.slane %v2706, %v2725
        %v2728 = vmul.f32 %v2721, %v2726
        %v2730 = vlaneseq
        %v2731 = vshrl.u32 %v2730, 7
        %v2732 = vsub.s32 0, %v2731
        %v2733 = vrot.slane %v2708, %v2732
        %v2735 = vadd.f32 %v2728, %v2733
        %v2736 = vpack.c.bf16 %v2735, %v2735
        %v2737 = vld [vmem:[%s13] sm:$0xf]
        %v2738 = vld [vmem:[%s13 + $0x4] sm:$0xf]
        %v2739 = vld [vmem:[%s13 + $0x8] sm:$0xf]
        %v2740 = vld [vmem:[%s13 + $0xc] sm:$0xf]
        %v2741 = vld [vmem:[%s13 + $0x10] sm:$0xf]
        %v2742 = vld [vmem:[%s13 + $0x14] sm:$0xf]
        %v2743 = vld [vmem:[%s13 + $0x18] sm:$0xf]
        %v2744 = vld [vmem:[%s13 + $0x1c] sm:$0xf]
        %v2745 = vld [vmem:[%s14] sm:$0x1]
        %v2747 = vlaneseq
        %v2748 = vshrl.u32 %v2747, 7
        %v2749 = vsub.s32 0, %v2748
        %v2750 = vrot.slane %v2745, %v2749
        %v2760 = vunpack.c.l.b16 %v2737
        %v2761 = vunpack.c.l.b16 %v2738
        %v2762 = vunpack.c.l.b16 %v2739
        %v2763 = vunpack.c.l.b16 %v2740
        %v2764 = vunpack.c.l.b16 %v2741
        %v2765 = vunpack.c.l.b16 %v2742
        %v2766 = vunpack.c.l.b16 %v2743
        %v2767 = vunpack.c.l.b16 %v2744
        %v2768 = vpack.c.b16 %v2761, %v2760
        %v2769 = vpack.c.b16 %v2763, %v2762
        %v2770 = vpack.c.b16 %v2765, %v2764
        %v2771 = vpack.c.b16 %v2767, %v2766
        %v2777 = vsel %vm558, %v2736, 0
        %2779 = vmatprep.subr.bf16.mxu0 0
        %2780 = vmatpush1.bf16.msra.mxu0 0
        %2781 = vmatprep.subr.bf16.mxu0 0
        %2782 = vmatpush1.bf16.msra.mxu0 0
        %2783 = vmatprep.subr.bf16.mxu0 0
        %2784 = vmatpush1.bf16.msra.mxu0 0
        %2785 = vmatprep.subr.bf16.mxu0 0
        %2786 = vmatpush1.bf16.msra.mxu0 0
        %2787 = vmatprep.subr.bf16.mxu0 0
        %2788 = vmatpush1.bf16.msra.mxu0 %v2771
        %2789 = vmatprep.subr.bf16.mxu0 0
        %2790 = vmatpush1.bf16.msra.mxu0 %v2770
        %2791 = vmatprep.subr.bf16.mxu0 0
        %2792 = vmatpush1.bf16.msra.mxu0 %v2769
        %2793 = vmatprep.subr.bf16.mxu0 0
        %2794 = vmatpush1.bf16.msra.mxu0 %v2768
        %2795 = vmatprep.subr.bf16.mxu0 0
        %2796 = vmatpush2.bf16.msra.mxu0 0
        %2797 = vmatprep.subr.bf16.mxu0 0
        %2798 = vmatpush2.bf16.msra.mxu0 0
        %2799 = vmatprep.subr.bf16.mxu0 0
        %2800 = vmatpush2.bf16.msra.mxu0 0
        %2801 = vmatprep.subr.bf16.mxu0 0
        %2802 = vmatpush2.bf16.msra.mxu0 0
        %2803 = vmatprep.subr.bf16.mxu0 0
        %2804 = vmatpush2.bf16.msra.mxu0 0
        %2805 = vmatprep.subr.bf16.mxu0 0
        %2806 = vmatpush2.bf16.msra.mxu0 0
        %2807 = vmatprep.subr.bf16.mxu0 0
        %2808 = vmatpush2.bf16.msra.mxu0 0
        %2809 = vmatprep.subr.bf16.mxu0 0
        %2810 = vmatpush2.bf16.msra.mxu0 0
        %2811 = vmatprep.mubr.bf16.mxu0 0
        %2812 = vmatmul.mubr.bf16.gmra.mxu0 %v2777
        %v2813 = vpop.f32.mrf.mxu0
        %v2814 = vadd.f32 %v2750, %v2813
        %v2815 = vpop.f32.mrf.mxu0
        %v2816 = vpop.f32.mrf.mxu0
        %v2817 = vpop.f32.mrf.mxu0
        %2818 = vdwg.mxu0
        %2819 = vst [vmem:[%s485] sm:$0xff] %v2814
        %s2820 = sand.u32 %s357, 1
        %s2821 = scalar_lea.sflag [#allocation3], %s2820
        %s2822 = sand.u32 %s357, 1
        %s2823 = smul.addr %s2822, 8
        %s2824 = scalar_lea.vmem [#allocation2], %s2823
        // Predicated region
        $region81: #{tpu_custom_call.1} parent=79 // pred_check
          %p2825 = pneg %p367
        $region82: #{tpu_custom_call.1} parent=79 // pred_check_branch
          %2827 = sbr.rel (%p2825) target = $region84
        $region83: #{tpu_custom_call.1} parent=79 // pred_region
          %s2829 = ssub.s32 128, 128
          %2830 = vsyncadd %s2821, %s2829
          %s2831 = smul.addr %s29, 128
          %s2832 = scalar_lea.hbm %s15, %s2831
          %s2834 = sshll.u32 %s2824, 4
          %s2835 = int_to_ptr.vmem [resolvable:$true] %s2834
          %2837 = dma.vmem_to_hbm [thread:$0]  %s2835, 128, %s2832, %s2821
        $region84: #{tpu_custom_call.1} parent=79 // pred_fallthru
          _
      $region80: #{tpu_custom_call.1} parent=5 // pred_fallthru
        _
      %p2838 = scmp.le.s32.totalorder 2, %s24
      // Predicated region
      $region85: #{tpu_custom_call.1} parent=5 // pred_check
        %p2839 = pneg %p2838
      $region86: #{tpu_custom_call.1} parent=5 // pred_check_branch
        %2841 = sbr.rel (%p2839) target = $region88
      $region87: #{tpu_custom_call.1} parent=5 // pred_region
        %s2842 = ssub.s32 %s24, 2
        // Predicated region
        $region89: #{tpu_custom_call.1} parent=87 // pred_check
          %p2843 = pneg %p373
        $region90: #{tpu_custom_call.1} parent=87 // pred_check_branch
          %2845 = sbr.rel (%p2843) target = $region92
        $region91: #{tpu_custom_call.1} parent=87 // pred_region
          %s2846 = sand.u32 %s358, 1
          %s2847 = scalar_lea.sflag [#allocation3], %s2846
          %s2848 = sand.u32 %s358, 1
          %s2849 = smul.addr %s2848, 8
          %s2850 = scalar_lea.vmem [#allocation2], %s2849
          %2851 = dma.done %s2847, 128
        $region92: #{tpu_custom_call.1} parent=87 // pred_fallthru
          _
      $region88: #{tpu_custom_call.1} parent=5 // pred_fallthru
        _
    $region6: #{tpu_custom_call.1} parent=1 // loop_footer
      %s28 = sadd.s32 1, %s24
    $region7: #{tpu_custom_call.1} parent=1 // loop_footer_branch
      %23 = sbr.rel target = $region3
    $region8: #{tpu_custom_call.1} parent=1 // loop_exit
      _
    %2852 = vsyncpa [#allocation3], 1
    %s2853 = scalar_lea.sflag [#allocation3], 1
    %2854 = vsyncpa %s2853, 1

</llo_original>
